<compile_context>
chip_gen: v5e
topology: v5e:2x2
jax: 0.10.0
libtpu: 0.0.40
codegen_flags: <defaults>
</compile_context>

<pallas_src>
import jax
import jax.numpy as jnp
from jax import lax
from jax.experimental import pallas as pl
from jax.experimental.pallas import tpu as pltpu

LN_EPS = 1e-5
ATT_EPS = 1e-6


# ----------------------------- kernel helpers -----------------------------
def _elu_plus_one(t):
    # elu(t) + 1 == t + 1 (t > 0) else exp(t); min() keeps the untaken exp finite.
    return jnp.where(t > 0, t + 1.0, jnp.exp(jnp.minimum(t, 0.0)))


def _layernorm(t, g, b):
    mu = jnp.mean(t, axis=-1, keepdims=True)
    xc = t - mu
    var = jnp.mean(xc * xc, axis=-1, keepdims=True)
    return xc * lax.rsqrt(var + LN_EPS) * g + b


def _rotary_coeffs(sin):
    """Sign/select-folded sin coefficients for the lane-roll rotary.

    rot(t)[2i]   = -t[2i+1] -> coef_m (pairs with roll(shift=C-1): brings t[j+1])
    rot(t)[2i+1] =  t[2i]   -> coef_p (pairs with roll(shift=1):   brings t[j-1])
    Two VPU selects per tile; replaces two whole [N,*,C] HBM streams.
    """
    c = sin.shape[-1]
    lane = lax.broadcasted_iota(jnp.int32, (1, c), 1)
    even = (lane % 2) == 0
    coef_m = jnp.where(even, -sin, 0.0)
    coef_p = jnp.where(even, 0.0, sin)
    return coef_m, coef_p


def _rotary(t, cos, coef_m, coef_p):
    """t*cos + rot(t)*sin via two XLU lane rolls.

    pltpu.roll follows the jnp.roll convention (roll(t, C-1)[j] == t[j+1]).
    The wrap-around lane of each roll is multiplied by a zero coefficient, so
    rotating the whole C axis is safe even though pairs never wrap.
    """
    c = t.shape[-1]
    r_m = pltpu.roll(t, shift=c - 1, axis=1)   # r_m[j] = t[j+1]
    r_p = pltpu.roll(t, shift=1, axis=1)       # r_p[j] = t[j-1]
    return t * cos + r_m * coef_m + r_p * coef_p


# ------------------------------- pass 1: KV -------------------------------
def _make_kv_kernel(mm_dtype):
    def kernel(src_ref, kcos_ref, ksin_ref, blk_ref, wk_ref, wv_ref,
               kv_ref, ksum_ref):
        f32 = jnp.float32
        s_idx = pl.program_id(2)

        @pl.when(s_idx == 0)
        def _init():
            kv_ref[0, 0] = jnp.zeros_like(kv_ref[0, 0])
            ksum_ref[0, 0] = jnp.zeros_like(ksum_ref[0, 0])

        src = src_ref[0].astype(mm_dtype)
        cos = kcos_ref[0].astype(f32)
        sin = ksin_ref[0].astype(f32)
        coef_m, coef_p = _rotary_coeffs(sin)

        key = jnp.dot(src, wk_ref[...], preferred_element_type=f32)
        value = jnp.dot(src, wv_ref[...], preferred_element_type=f32)

        K = _elu_plus_one(key)
        K_pos = _rotary(key, cos, coef_m, coef_p)
        V = _rotary(value, cos, coef_m, coef_p)

        # All heads at once: one dense [C, Ts] x [Ts, C] MXU contraction.
        kv_ref[0, 0] += lax.dot_general(
            K_pos.astype(mm_dtype), V.astype(mm_dtype),
            (((0,), (0,)), ((), ())), preferred_element_type=f32)
        ksum_ref[0, 0] += jnp.sum(K, axis=0, keepdims=True)

        @pl.when(s_idx == pl.num_programs(2) - 1)
        def _finalize():
            # Zero cross-head blocks -> KV is block-diagonal per head.
            kv_ref[0, 0] = kv_ref[0, 0] * blk_ref[...]

    return kernel


# --------------------------- pass 2: attention -----------------------------
def _make_attn_kernel(mm_dtype, approx_recip):
    def kernel(x_ref, qcos_ref, qsin_ref, kv_ref, ksum_ref, blk_ref,
               wq_ref, wm_ref, w1_ref, w2_ref,
               g1_ref, b1_ref, g2_ref, b2_ref, out_ref):
        f32 = jnp.float32
        x_in = x_ref[0]
        x_mm = x_in.astype(mm_dtype)
        x_f32 = x_in.astype(f32)
        cos = qcos_ref[0].astype(f32)
        sin = qsin_ref[0].astype(f32)
        coef_m, coef_p = _rotary_coeffs(sin)

        query = jnp.dot(x_mm, wq_ref[...], preferred_element_type=f32)
        Q = _elu_plus_one(query)
        Q_pos = _rotary(query, cos, coef_m, coef_p)

        # Per-head normalizer Z, broadcast back over lanes with one matmul
        # against the resident 0/1 head-block mask (kept f32 for accuracy).
        den = jnp.dot(Q * ksum_ref[0], blk_ref[...],
                      preferred_element_type=f32) + ATT_EPS
        if approx_recip:
            z = pl.reciprocal(den, approx=True)
        else:
            z = 1.0 / den

        # Block-diagonal KV -> all heads in one [TL, C] x [C, C] matmul,
        # written straight into the lane-dense layout (no concat of heads).
        msg = jnp.dot(Q_pos.astype(mm_dtype), kv_ref[0],
                      preferred_element_type=f32) * z
        msg = jnp.dot(msg.astype(mm_dtype), wm_ref[...],
                      preferred_element_type=f32)
        msg = _layernorm(msg, g1_ref[...], b1_ref[...])

        # MLP(cat([x, msg])): one K=2C contraction (fills a 256-wide MXU).
        cat = jnp.concatenate([x_mm, msg.astype(mm_dtype)], axis=-1)
        h1 = jnp.maximum(
            jnp.dot(cat, w1_ref[...], preferred_element_type=f32), 0.0)
        h2 = jnp.dot(h1.astype(mm_dtype), w2_ref[...],
                     preferred_element_type=f32)
        msg = _layernorm(h2, g2_ref[...], b2_ref[...])

        out_ref[0] = (x_f32 + msg).astype(out_ref.dtype)

    return kernel


# ------------------------------- wrapper -----------------------------------
def _choose_tile(n, max_tile):
    """Largest multiple of 8 that divides n and is <= max_tile (else full n)."""
    t = min(n, max_tile)
    t -= t % 8
    while t >= 8:
        if n % t == 0:
            return t
        t -= 8
    return n


def rotary_loftr_encoder_layer(x, source, x_pe, source_pe, params, nhead,
                               *, precise=False, l_tile=512, s_tile=512,
                               out_dtype=None):
    """Pallas-TPU forward of Rotary_LoFTREncoderLayer.

    x: [N, L, C]; source: [N, S, C]; x_pe: [N, L, C, 2]; source_pe: [N, S, C, 2].
    precise=True : f32 streams + f32 MXU + exact reciprocal (validation)
    precise=False: bf16 streams + bf16 MXU + EUP approx reciprocal (production)
    """
    # TODO(synk): optional x_mask / source_mask paths are not implemented (None only).
    N, L, C = x.shape
    S = source.shape[1]
    assert C % nhead == 0 and (C // nhead) % 2 == 0
    dim = C // nhead

    f32 = jnp.float32
    mm_dtype = f32 if precise else jnp.bfloat16
    stream_dtype = f32 if precise else jnp.bfloat16
    out_dtype = f32 if out_dtype is None else out_dtype

    # Keep >= 2 parallel pass-2 tiles when N == 1 (v7x has 2 TensorCores).
    l_cap = l_tile if N > 1 else min(l_tile, max(8, L // 2))
    TL = _choose_tile(L, l_cap)
    TS = _choose_tile(S, s_tile)
    s_tiles = S // TS
    # Split the S reduction across a leading parallel axis when a single batch
    # would otherwise pin pass 1 to one TensorCore.
    splits = 2 if (N == 1 and s_tiles % 2 == 0) else 1
    steps = s_tiles // splits

    # bf16 ingress for the big streamed tensors (kernel is HBM-bound at C=128).
    x_in = x.astype(stream_dtype)
    src_in = source.astype(stream_dtype)
    q_cos = x_pe[..., 0].astype(stream_dtype)
    q_sin = x_pe[..., 1].astype(stream_dtype)
    k_cos = source_pe[..., 0].astype(stream_dtype)
    k_sin = source_pe[..., 1].astype(stream_dtype)

    # Head-block indicator (resident const input; hoisted out of kernel bodies).
    hid = jnp.arange(C) // dim
    blk = (hid[:, None] == hid[None, :]).astype(f32)

    # Weights (PyTorch layout [out, in]) -> transposed, matmul dtype.
    wq_t = params["wq"].T.astype(mm_dtype)
    wk_t = params["wk"].T.astype(mm_dtype)
    wv_t = params["wv"].T.astype(mm_dtype)
    wm_t = params["wm"].T.astype(mm_dtype)
    w1_t = params["w1"].T.astype(mm_dtype)   # [2C, 2C], rows ordered cat([x, msg])
    w2_t = params["w2"].T.astype(mm_dtype)   # [2C, C]
    g1 = params["g1"].reshape(1, C).astype(f32)
    b1 = params["b1"].reshape(1, C).astype(f32)
    g2 = params["g2"].reshape(1, C).astype(f32)
    b2 = params["b2"].reshape(1, C).astype(f32)

    # ---- pass 1: head-block-diagonal KV [splits, N, C, C] and Ksum ----
    src_tok = lambda: pl.BlockSpec((1, TS, C),
                                   lambda p, n, s: (n, p * steps + s, 0))
    const1 = lambda shp: pl.BlockSpec(shp, lambda p, n, s: (0, 0))
    kv_parts, ksum_parts = pl.pallas_call(
        _make_kv_kernel(mm_dtype),
        out_shape=(jax.ShapeDtypeStruct((splits, N, C, C), f32),
                   jax.ShapeDtypeStruct((splits, N, 1, C), f32)),
        grid=(splits, N, steps),
        in_specs=[src_tok(), src_tok(), src_tok(),
                  const1((C, C)), const1((C, C)), const1((C, C))],
        out_specs=(pl.BlockSpec((1, 1, C, C), lambda p, n, s: (p, n, 0, 0)),
                   pl.BlockSpec((1, 1, 1, C), lambda p, n, s: (p, n, 0, 0))),
        compiler_params=pltpu.CompilerParams(
            dimension_semantics=("parallel", "parallel", "arbitrary")),
    )(src_in, k_cos, k_sin, blk, wk_t, wv_t)

    kv = jnp.sum(kv_parts, axis=0).astype(mm_dtype)   # [N, C, C], bf16 in prod
    ksum = jnp.sum(ksum_parts, axis=0)                # [N, 1, C], f32

    # ---- pass 2: stream L tiles (parallel over batch AND L tiles) ----
    tok = lambda: pl.BlockSpec((1, TL, C), lambda n, i: (n, i, 0))
    const2 = lambda shp: pl.BlockSpec(shp, lambda n, i: (0, 0))
    out = pl.pallas_call(
        _make_attn_kernel(mm_dtype, approx_recip=not precise),
        out_shape=jax.ShapeDtypeStruct((N, L, C), out_dtype),
        grid=(N, L // TL),
        in_specs=[tok(), tok(), tok(),
                  pl.BlockSpec((1, C, C), lambda n, i: (n, 0, 0)),
                  pl.BlockSpec((1, 1, C), lambda n, i: (n, 0, 0)),
                  const2((C, C)),
                  const2((C, C)), const2((C, C)),
                  const2((2 * C, 2 * C)), const2((2 * C, C)),
                  const2((1, C)), const2((1, C)), const2((1, C)), const2((1, C))],
        out_specs=tok(),
        compiler_params=pltpu.CompilerParams(
            dimension_semantics=("parallel", "parallel")),
    )(x_in, q_cos, q_sin, kv, ksum, blk,
      wq_t, wm_t, w1_t, w2_t, g1, b1, g2, b2)
    return out


# --------------------------- pure-JAX reference -----------------------------
def reference_forward(x, source, x_pe, source_pe, params, nhead):
    N, L, C = x.shape
    S = source.shape[1]
    dim = C // nhead

    lin = lambda t, w: jnp.einsum("nlc,oc->nlo", t, w)

    query = lin(x, params["wq"])
    key = lin(source, params["wk"])
    value = lin(source, params["wv"])

    elu1 = lambda t: jnp.where(t > 0, t, jnp.exp(t) - 1.0) + 1.0

    def embed_rotary(t, c, s):
        t2 = jnp.stack([-t[..., 1::2], t[..., 0::2]], axis=-1).reshape(t.shape)
        return t * c + t2 * s

    Q = elu1(query)
    K = elu1(key)
    q_cos, q_sin = x_pe[..., 0], x_pe[..., 1]
    k_cos, k_sin = source_pe[..., 0], source_pe[..., 1]
    Q_pos = embed_rotary(query, q_cos, q_sin)
    K_pos = embed_rotary(key, k_cos, k_sin)
    value = embed_rotary(value, k_cos, k_sin)

    Q = Q.reshape(N, L, nhead, dim)
    K = K.reshape(N, S, nhead, dim)
    Q_pos = Q_pos.reshape(N, L, nhead, dim)
    K_pos = K_pos.reshape(N, S, nhead, dim)
    value = value.reshape(N, S, nhead, dim)

    values = value / S
    KV = jnp.einsum("nshd,nshv->nhdv", K_pos, values)
    Z = 1.0 / (jnp.einsum("nlhd,nhd->nlh", Q, K.sum(axis=1)) + 1e-6)
    queried = jnp.einsum("nlhd,nhdv,nlh->nlhv", Q_pos, KV, Z) * S
    message = queried.reshape(N, L, C)
    message = jnp.einsum("nlc,oc->nlo", message, params["wm"])

    def layernorm(t, g, b):
        mu = jnp.mean(t, axis=-1, keepdims=True)
        var = jnp.mean((t - mu) ** 2, axis=-1, keepdims=True)
        return (t - mu) / jnp.sqrt(var + 1e-5) * g + b

    message = layernorm(message, params["g1"], params["b1"])
    cat = jnp.concatenate([x, message], axis=-1)
    h1 = jnp.maximum(jnp.einsum("nlc,oc->nlo", cat, params["w1"]), 0.0)
    h2 = jnp.einsum("nlc,oc->nlo", h1, params["w2"])
    message = layernorm(h2, params["g2"], params["b2"])
    return x + message


if __name__ == "__main__":
    def make_case(seed, N, L, S, C):
        ks = jax.random.split(jax.random.PRNGKey(seed), 16)
        x = jax.random.normal(ks[0], (N, L, C), jnp.float32)
        source = jax.random.normal(ks[1], (N, S, C), jnp.float32)
        x_pe = jnp.stack([jnp.cos(jax.random.normal(ks[2], (N, L, C))),
                          jnp.sin(jax.random.normal(ks[3], (N, L, C)))],
                         axis=-1).astype(jnp.float32)
        source_pe = jnp.stack([jnp.cos(jax.random.normal(ks[4], (N, S, C))),
                               jnp.sin(jax.random.normal(ks[5], (N, S, C)))],
                              axis=-1).astype(jnp.float32)
        scale = 0.15  # deterministic synthetic weights (PyTorch layout [out, in])
        params = {
            "wq": scale * jax.random.normal(ks[6], (C, C), jnp.float32),
            "wk": scale * jax.random.normal(ks[7], (C, C), jnp.float32),
            "wv": scale * jax.random.normal(ks[8], (C, C), jnp.float32),
            "wm": scale * jax.random.normal(ks[9], (C, C), jnp.float32),
            "w1": scale * jax.random.normal(ks[10], (2 * C, 2 * C), jnp.float32),
            "w2": scale * jax.random.normal(ks[11], (C, 2 * C), jnp.float32),
            "g1": 1.0 + 0.05 * jax.random.normal(ks[12], (C,), jnp.float32),
            "b1": 0.05 * jax.random.normal(ks[13], (C,), jnp.float32),
            "g2": 1.0 + 0.05 * jax.random.normal(ks[14], (C,), jnp.float32),
            "b2": 0.05 * jax.random.normal(ks[15], (C,), jnp.float32),
        }
        return x, source, x_pe, source_pe, params

    H = 4  # d_model=128, nhead=4 -> head dim 32

    # Case A: N=2 exercises the plain grids + production (bf16) config.
    N, L, S, C = 2, 512, 384, 128
    x, source, x_pe, source_pe, params = make_case(0, N, L, S, C)
    with jax.default_matmul_precision("highest"):
        ref = jax.block_until_ready(
            reference_forward(x, source, x_pe, source_pe, params, H))

    out = rotary_loftr_encoder_layer(x, source, x_pe, source_pe, params, H,
                                     precise=True)
    out = jax.block_until_ready(out)
    assert out.shape == (N, L, C)
    assert jnp.allclose(out, ref, atol=3e-3, rtol=3e-3), \
        float(jnp.max(jnp.abs(out - ref)))

    out_fast = rotary_loftr_encoder_layer(x, source, x_pe, source_pe, params, H,
                                          precise=False)
    out_fast = jax.block_until_ready(out_fast)
    assert bool(jnp.all(jnp.isfinite(out_fast)))
    assert jnp.allclose(out_fast, ref, atol=2e-1, rtol=2e-1), \
        float(jnp.max(jnp.abs(out_fast - ref)))

    # Case B: N=1 exercises the split S-reduction (2 parallel partials) and
    # the TL cap that keeps >= 2 parallel pass-2 tiles on a 2-TC chip.
    N, L, S, C = 1, 256, 768, 128
    x, source, x_pe, source_pe, params = make_case(1, N, L, S, C)
    with jax.default_matmul_precision("highest"):
        ref = jax.block_until_ready(
            reference_forward(x, source, x_pe, source_pe, params, H))
    out = rotary_loftr_encoder_layer(x, source, x_pe, source_pe, params, H,
                                     precise=True)
    out = jax.block_until_ready(out)
    assert out.shape == (N, L, C)
    assert jnp.allclose(out, ref, atol=3e-3, rtol=3e-3), \
        float(jnp.max(jnp.abs(out - ref)))

    print("KERNEL_OK")
</pallas_src>

<mosaic_0001>
module attributes {stable_mosaic.version = 11 : i64} {
  func.func @kernel(%arg0: i32, %arg1: i32, %arg2: i32, %arg3: memref<1x384x128xf32, #tpu.memory_space<vmem>>, %arg4: memref<1x384x128xf32, #tpu.memory_space<vmem>>, %arg5: memref<1x384x128xf32, #tpu.memory_space<vmem>>, %arg6: memref<128x128xf32, #tpu.memory_space<vmem>>, %arg7: memref<128x128xf32, #tpu.memory_space<vmem>>, %arg8: memref<128x128xf32, #tpu.memory_space<vmem>>, %arg9: memref<1x1x128x128xf32, #tpu.memory_space<vmem>>, %arg10: memref<1x1x1x128xf32, #tpu.memory_space<vmem>>) attributes {dimension_semantics = [#tpu.dimension_semantics<parallel>, #tpu.dimension_semantics<parallel>, #tpu.dimension_semantics<arbitrary>], iteration_bounds = array<i64: 1, 2, 1>, scalar_prefetch = 0 : i64, scratch_operands = 0 : i64, tpu.core_type = #tpu.core_type<tc>, window_params = [{transform_indices = @transform_0, window_bounds = array<i64: 1, 384, 128>}, {transform_indices = @transform_1, window_bounds = array<i64: 1, 384, 128>}, {transform_indices = @transform_2, window_bounds = array<i64: 1, 384, 128>}, {pipeline_mode = #tpu.pipeline_mode<synchronous>, transform_indices = @transform_3, window_bounds = array<i64: 128, 128>}, {pipeline_mode = #tpu.pipeline_mode<synchronous>, transform_indices = @transform_4, window_bounds = array<i64: 128, 128>}, {pipeline_mode = #tpu.pipeline_mode<synchronous>, transform_indices = @transform_5, window_bounds = array<i64: 128, 128>}, {transform_indices = @transform_6, window_bounds = array<i64: 1, 1, 128, 128>}, {transform_indices = @transform_7, window_bounds = array<i64: 1, 1, 1, 128>}]} {
    %c0_i32 = arith.constant 0 : i32
    %0 = arith.cmpi eq, %arg2, %c0_i32 : i32
    %1 = arith.extui %0 : i1 to i32
    %c0_i32_0 = arith.constant 0 : i32
    %2 = arith.cmpi ne, %1, %c0_i32_0 : i32
    scf.if %2 {
      %cst_48 = arith.constant 0.000000e+00 : f32
      %82 = vector.broadcast %cst_48 : f32 to vector<128x128xf32>
      %c0_49 = arith.constant 0 : index
      %c0_50 = arith.constant 0 : index
      %c0_51 = arith.constant 0 : index
      %c0_52 = arith.constant 0 : index
      %83 = vector.load %arg9[%c0_49, %c0_50, %c0_51, %c0_52] : memref<1x1x128x128xf32, #tpu.memory_space<vmem>>, vector<1x1x128x128xf32>
      %84 = vector.shape_cast %83 : vector<1x1x128x128xf32> to vector<128x128xf32>
      %85 = vector.shape_cast %82 : vector<128x128xf32> to vector<1x1x128x128xf32>
      tpu.vector_store %arg9[%c0_49, %c0_50, %c0_51, %c0_52], %85 {strides = array<i32>} : memref<1x1x128x128xf32, #tpu.memory_space<vmem>>, vector<1x1x128x128xf32>,
      %cst_53 = arith.constant 0.000000e+00 : f32
      %86 = vector.broadcast %cst_53 : f32 to vector<1x128xf32>
      %c0_54 = arith.constant 0 : index
      %c0_55 = arith.constant 0 : index
      %c0_56 = arith.constant 0 : index
      %c0_57 = arith.constant 0 : index
      %87 = vector.load %arg10[%c0_54, %c0_55, %c0_56, %c0_57] : memref<1x1x1x128xf32, #tpu.memory_space<vmem>>, vector<1x1x1x128xf32>
      %88 = vector.shape_cast %87 : vector<1x1x1x128xf32> to vector<1x128xf32>
      %89 = vector.shape_cast %86 : vector<1x128xf32> to vector<1x1x1x128xf32>
      tpu.vector_store %arg10[%c0_54, %c0_55, %c0_56, %c0_57], %89 {strides = array<i32>} : memref<1x1x1x128xf32, #tpu.memory_space<vmem>>, vector<1x1x1x128xf32>,
    } else {
    }
    %c0 = arith.constant 0 : index
    %c0_1 = arith.constant 0 : index
    %c0_2 = arith.constant 0 : index
    %3 = vector.load %arg3[%c0, %c0_1, %c0_2] : memref<1x384x128xf32, #tpu.memory_space<vmem>>, vector<1x384x128xf32>
    %4 = vector.shape_cast %3 : vector<1x384x128xf32> to vector<384x128xf32>
    %c0_3 = arith.constant 0 : index
    %c0_4 = arith.constant 0 : index
    %c0_5 = arith.constant 0 : index
    %5 = vector.load %arg4[%c0_3, %c0_4, %c0_5] : memref<1x384x128xf32, #tpu.memory_space<vmem>>, vector<1x384x128xf32>
    %6 = vector.shape_cast %5 : vector<1x384x128xf32> to vector<384x128xf32>
    %c0_6 = arith.constant 0 : index
    %c0_7 = arith.constant 0 : index
    %c0_8 = arith.constant 0 : index
    %7 = vector.load %arg5[%c0_6, %c0_7, %c0_8] : memref<1x384x128xf32, #tpu.memory_space<vmem>>, vector<1x384x128xf32>
    %8 = vector.shape_cast %7 : vector<1x384x128xf32> to vector<384x128xf32>
    %9 = tpu.iota {dimensions = array<i32: 1>} : vector<1x128xi32>
    %c2_i32 = arith.constant 2 : i32
    %c0_i32_9 = arith.constant 0 : i32
    %10 = arith.cmpi eq, %c2_i32, %c0_i32_9 : i32
    %c1_i32 = arith.constant 1 : i32
    %11 = arith.select %10, %c1_i32, %c2_i32 : i32
    %12 = vector.broadcast %11 : i32 to vector<1x128xi32>
    %13 = arith.remsi %9, %12 : vector<1x128xi32>
    %c0_i32_10 = arith.constant 0 : i32
    %14 = vector.broadcast %c0_i32_10 : i32 to vector<1x128xi32>
    %15 = arith.cmpi ne, %13, %14 : vector<1x128xi32>
    %c0_i32_11 = arith.constant 0 : i32
    %16 = vector.broadcast %c0_i32_11 : i32 to vector<1x128xi32>
    %17 = arith.cmpi slt, %13, %16 : vector<1x128xi32>
    %c0_i32_12 = arith.constant 0 : i32
    %18 = arith.cmpi slt, %11, %c0_i32_12 : i32
    %19 = vector.broadcast %18 : i1 to vector<1x128xi1>
    %20 = vector.broadcast %19 : vector<1x128xi1> to vector<1x128xi1>
    %21 = arith.xori %17, %20 : vector<1x128xi1>
    %22 = arith.andi %21, %15 : vector<1x128xi1>
    %23 = vector.broadcast %11 : i32 to vector<1x128xi32>
    %24 = arith.addi %13, %23 : vector<1x128xi32>
    %25 = arith.select %22, %24, %13 : vector<1x128xi1>, vector<1x128xi32>
    %c0_i32_13 = arith.constant 0 : i32
    %26 = vector.broadcast %c0_i32_13 : i32 to vector<1x128xi32>
    %27 = arith.cmpi eq, %25, %26 : vector<1x128xi32>
    %cst = arith.constant 0.000000e+00 : f32
    %28 = vector.broadcast %cst : f32 to vector<384x128xf32>
    %29 = arith.subf %28, %8 : vector<384x128xf32>
    %cst_14 = arith.constant 0.000000e+00 : f32
    %30 = vector.shape_cast %27 : vector<1x128xi1> to vector<1x128xi1>
    %31 = vector.broadcast %30 : vector<1x128xi1> to vector<384x128xi1>
    %32 = vector.broadcast %cst_14 : f32 to vector<384x128xf32>
    %33 = arith.select %31, %29, %32 : vector<384x128xi1>, vector<384x128xf32>
    %cst_15 = arith.constant 0.000000e+00 : f32
    %34 = vector.shape_cast %27 : vector<1x128xi1> to vector<1x128xi1>
    %35 = vector.broadcast %34 : vector<1x128xi1> to vector<384x128xi1>
    %36 = vector.broadcast %cst_15 : f32 to vector<384x128xf32>
    %37 = arith.select %35, %36, %8 : vector<384x128xi1>, vector<384x128xf32>
    %c0_16 = arith.constant 0 : index
    %c0_17 = arith.constant 0 : index
    %38 = vector.load %arg7[%c0_16, %c0_17] : memref<128x128xf32, #tpu.memory_space<vmem>>, vector<128x128xf32>
    %cst_18 = arith.constant dense<0.000000e+00> : vector<384x128xf32>
    %39 = tpu.matmul %4, %38, %cst_18 {dimension_numbers = #tpu.dot_dimension_numbers<[1], [0], [0], [1], [0, 0, 1, 1], [], []>} : vector<384x128xf32>, vector<128x128xf32>, vector<384x128xf32> -> vector<384x128xf32>
    %c0_19 = arith.constant 0 : index
    %c0_20 = arith.constant 0 : index
    %40 = vector.load %arg8[%c0_19, %c0_20] : memref<128x128xf32, #tpu.memory_space<vmem>>, vector<128x128xf32>
    %cst_21 = arith.constant dense<0.000000e+00> : vector<384x128xf32>
    %41 = tpu.matmul %4, %40, %cst_21 {dimension_numbers = #tpu.dot_dimension_numbers<[1], [0], [0], [1], [0, 0, 1, 1], [], []>} : vector<384x128xf32>, vector<128x128xf32>, vector<384x128xf32> -> vector<384x128xf32>
    %cst_22 = arith.constant 0.000000e+00 : f32
    %42 = vector.broadcast %cst_22 : f32 to vector<384x128xf32>
    %43 = arith.cmpf ogt, %39, %42 : vector<384x128xf32>
    %cst_23 = arith.constant 1.000000e+00 : f32
    %44 = vector.broadcast %cst_23 : f32 to vector<384x128xf32>
    %45 = arith.addf %39, %44 : vector<384x128xf32>
    %cst_24 = arith.constant 0.000000e+00 : f32
    %46 = vector.broadcast %cst_24 : f32 to vector<384x128xf32>
    %47 = arith.minimumf %39, %46 : vector<384x128xf32>
    %48 = math.exp %47 : vector<384x128xf32>
    %49 = arith.select %43, %45, %48 : vector<384x128xi1>, vector<384x128xf32>
    %c127_i32 = arith.constant 127 : i32
    %50 = tpu.dynamic_rotate %39 by %c127_i32 dim 1 : vector<384x128xf32>, i32 -> vector<384x128xf32>
    %c1_i32_25 = arith.constant 1 : i32
    %51 = tpu.dynamic_rotate %39 by %c1_i32_25 dim 1 : vector<384x128xf32>, i32 -> vector<384x128xf32>
    %52 = arith.mulf %39, %6 : vector<384x128xf32>
    %53 = arith.mulf %50, %33 : vector<384x128xf32>
    %54 = arith.addf %52, %53 : vector<384x128xf32>
    %55 = arith.mulf %51, %37 : vector<384x128xf32>
    %56 = arith.addf %54, %55 : vector<384x128xf32>
    %c127_i32_26 = arith.constant 127 : i32
    %57 = tpu.dynamic_rotate %41 by %c127_i32_26 dim 1 : vector<384x128xf32>, i32 -> vector<384x128xf32>
    %c1_i32_27 = arith.constant 1 : i32
    %58 = tpu.dynamic_rotate %41 by %c1_i32_27 dim 1 : vector<384x128xf32>, i32 -> vector<384x128xf32>
    %59 = arith.mulf %41, %6 : vector<384x128xf32>
    %60 = arith.mulf %57, %33 : vector<384x128xf32>
    %61 = arith.addf %59, %60 : vector<384x128xf32>
    %62 = arith.mulf %58, %37 : vector<384x128xf32>
    %63 = arith.addf %61, %62 : vector<384x128xf32>
    %c0_28 = arith.constant 0 : index
    %c0_29 = arith.constant 0 : index
    %c0_30 = arith.constant 0 : index
    %c0_31 = arith.constant 0 : index
    %64 = vector.load %arg9[%c0_28, %c0_29, %c0_30, %c0_31] : memref<1x1x128x128xf32, #tpu.memory_space<vmem>>, vector<1x1x128x128xf32>
    %65 = vector.shape_cast %64 : vector<1x1x128x128xf32> to vector<128x128xf32>
    %cst_32 = arith.constant dense<0.000000e+00> : vector<128x128xf32>
    %66 = tpu.matmul %56, %63, %cst_32 {dimension_numbers = #tpu.dot_dimension_numbers<[0], [0], [1], [1], [0, 1, 1, 1], [], []>} : vector<384x128xf32>, vector<384x128xf32>, vector<128x128xf32> -> vector<128x128xf32>
    %67 = arith.addf %65, %66 : vector<128x128xf32>
    %c0_33 = arith.constant 0 : index
    %c0_34 = arith.constant 0 : index
    %c0_35 = arith.constant 0 : index
    %c0_36 = arith.constant 0 : index
    %68 = vector.load %arg9[%c0_33, %c0_34, %c0_35, %c0_36] : memref<1x1x128x128xf32, #tpu.memory_space<vmem>>, vector<1x1x128x128xf32>
    %69 = vector.shape_cast %68 : vector<1x1x128x128xf32> to vector<128x128xf32>
    %70 = vector.shape_cast %67 : vector<128x128xf32> to vector<1x1x128x128xf32>
    tpu.vector_store %arg9[%c0_33, %c0_34, %c0_35, %c0_36], %70 {strides = array<i32>} : memref<1x1x128x128xf32, #tpu.memory_space<vmem>>, vector<1x1x128x128xf32>,
    %c0_37 = arith.constant 0 : index
    %c0_38 = arith.constant 0 : index
    %c0_39 = arith.constant 0 : index
    %c0_40 = arith.constant 0 : index
    %71 = vector.load %arg10[%c0_37, %c0_38, %c0_39, %c0_40] : memref<1x1x1x128xf32, #tpu.memory_space<vmem>>, vector<1x1x1x128xf32>
    %72 = vector.shape_cast %71 : vector<1x1x1x128xf32> to vector<1x128xf32>
    %cst_41 = arith.constant dense<0.000000e+00> : vector<128xf32>
    %73 = vector.multi_reduction <add>, %49, %cst_41 [0] : vector<384x128xf32> to vector<128xf32>
    %74 = vector.shape_cast %73 : vector<128xf32> to vector<1x128xf32>
    %75 = arith.addf %72, %74 : vector<1x128xf32>
    %c0_42 = arith.constant 0 : index
    %c0_43 = arith.constant 0 : index
    %c0_44 = arith.constant 0 : index
    %c0_45 = arith.constant 0 : index
    %76 = vector.load %arg10[%c0_42, %c0_43, %c0_44, %c0_45] : memref<1x1x1x128xf32, #tpu.memory_space<vmem>>, vector<1x1x1x128xf32>
    %77 = vector.shape_cast %76 : vector<1x1x1x128xf32> to vector<1x128xf32>
    %78 = vector.shape_cast %75 : vector<1x128xf32> to vector<1x1x1x128xf32>
    tpu.vector_store %arg10[%c0_42, %c0_43, %c0_44, %c0_45], %78 {strides = array<i32>} : memref<1x1x1x128xf32, #tpu.memory_space<vmem>>, vector<1x1x1x128xf32>,
    %c0_i32_46 = arith.constant 0 : i32
    %79 = arith.cmpi eq, %arg2, %c0_i32_46 : i32
    %80 = arith.extui %79 : i1 to i32
    %c0_i32_47 = arith.constant 0 : i32
    %81 = arith.cmpi ne, %80, %c0_i32_47 : i32
    scf.if %81 {
      %c0_48 = arith.constant 0 : index
      %c0_49 = arith.constant 0 : index
      %c0_50 = arith.constant 0 : index
      %c0_51 = arith.constant 0 : index
      %82 = vector.load %arg9[%c0_48, %c0_49, %c0_50, %c0_51] : memref<1x1x128x128xf32, #tpu.memory_space<vmem>>, vector<1x1x128x128xf32>
      %83 = vector.shape_cast %82 : vector<1x1x128x128xf32> to vector<128x128xf32>
      %c0_52 = arith.constant 0 : index
      %c0_53 = arith.constant 0 : index
      %84 = vector.load %arg6[%c0_52, %c0_53] : memref<128x128xf32, #tpu.memory_space<vmem>>, vector<128x128xf32>
      %85 = arith.mulf %83, %84 : vector<128x128xf32>
      %c0_54 = arith.constant 0 : index
      %c0_55 = arith.constant 0 : index
      %c0_56 = arith.constant 0 : index
      %c0_57 = arith.constant 0 : index
      %86 = vector.load %arg9[%c0_54, %c0_55, %c0_56, %c0_57] : memref<1x1x128x128xf32, #tpu.memory_space<vmem>>, vector<1x1x128x128xf32>
      %87 = vector.shape_cast %86 : vector<1x1x128x128xf32> to vector<128x128xf32>
      %88 = vector.shape_cast %85 : vector<128x128xf32> to vector<1x1x128x128xf32>
      tpu.vector_store %arg9[%c0_54, %c0_55, %c0_56, %c0_57], %88 {strides = array<i32>} : memref<1x1x128x128xf32, #tpu.memory_space<vmem>>, vector<1x1x128x128xf32>,
    } else {
    }
    return
  }
  func.func @transform_0(%arg0: i32, %arg1: i32, %arg2: i32) -> (i32, i32, i32) {
    %c1_i32 = arith.constant 1 : i32
    %0 = arith.muli %arg0, %c1_i32 : i32
    %1 = arith.addi %0, %arg2 : i32
    %c0_i32 = arith.constant 0 : i32
    %c0_i32_0 = arith.constant 0 : i32
    return %arg1, %1, %c0_i32 : i32, i32, i32
  }
  func.func @transform_1(%arg0: i32, %arg1: i32, %arg2: i32) -> (i32, i32, i32) {
    %c1_i32 = arith.constant 1 : i32
    %0 = arith.muli %arg0, %c1_i32 : i32
    %1 = arith.addi %0, %arg2 : i32
    %c0_i32 = arith.constant 0 : i32
    %c0_i32_0 = arith.constant 0 : i32
    return %arg1, %1, %c0_i32 : i32, i32, i32
  }
  func.func @transform_2(%arg0: i32, %arg1: i32, %arg2: i32) -> (i32, i32, i32) {
    %c1_i32 = arith.constant 1 : i32
    %0 = arith.muli %arg0, %c1_i32 : i32
    %1 = arith.addi %0, %arg2 : i32
    %c0_i32 = arith.constant 0 : i32
    %c0_i32_0 = arith.constant 0 : i32
    return %arg1, %1, %c0_i32 : i32, i32, i32
  }
  func.func @transform_3(%arg0: i32, %arg1: i32, %arg2: i32) -> (i32, i32) {
    %c0_i32 = arith.constant 0 : i32
    %c0_i32_0 = arith.constant 0 : i32
    %c0_i32_1 = arith.constant 0 : i32
    return %c0_i32, %c0_i32_0 : i32, i32
  }
  func.func @transform_4(%arg0: i32, %arg1: i32, %arg2: i32) -> (i32, i32) {
    %c0_i32 = arith.constant 0 : i32
    %c0_i32_0 = arith.constant 0 : i32
    %c0_i32_1 = arith.constant 0 : i32
    return %c0_i32, %c0_i32_0 : i32, i32
  }
  func.func @transform_5(%arg0: i32, %arg1: i32, %arg2: i32) -> (i32, i32) {
    %c0_i32 = arith.constant 0 : i32
    %c0_i32_0 = arith.constant 0 : i32
    %c0_i32_1 = arith.constant 0 : i32
    return %c0_i32, %c0_i32_0 : i32, i32
  }
  func.func @transform_6(%arg0: i32, %arg1: i32, %arg2: i32) -> (i32, i32, i32, i32) {
    %c0_i32 = arith.constant 0 : i32
    %c0_i32_0 = arith.constant 0 : i32
    %c0_i32_1 = arith.constant 0 : i32
    return %arg0, %arg1, %c0_i32, %c0_i32_0 : i32, i32, i32, i32
  }
  func.func @transform_7(%arg0: i32, %arg1: i32, %arg2: i32) -> (i32, i32, i32, i32) {
    %c0_i32 = arith.constant 0 : i32
    %c0_i32_0 = arith.constant 0 : i32
    %c0_i32_1 = arith.constant 0 : i32
    return %arg0, %arg1, %c0_i32, %c0_i32_0 : i32, i32, i32, i32
  }
}

</mosaic_0001>

<llo_original>
// kernel: tpu_custom_call.1
$region0: #{tpu_custom_call.1}
  #allocation0 [shape = 'u32[]', space=smem, size = 0x4, offset = 0x4, fixed_abs, tag = 'smem constant byte address 0x4 - core index']
  #allocation1 [shape = 'u32[72,128]{1,0:T(1,128)}', space=vmem, size = 0x9000, scoped, tag = 'internal scratch']
  %s0 = inlined_call_operand.hbm [shape: f32[2,384,128], index: 0, kind: input, shape index: {}]
  %s1 = inlined_call_operand.hbm [shape: f32[2,384,128], index: 1, kind: input, shape index: {}]
  %s2 = inlined_call_operand.hbm [shape: f32[2,384,128], index: 2, kind: input, shape index: {}]
  %s3 = inlined_call_operand.hbm [shape: f32[128,128], index: 3, kind: input, shape index: {}]
  %s4 = inlined_call_operand.hbm [shape: f32[128,128], index: 4, kind: input, shape index: {}]
  %s5 = inlined_call_operand.hbm [shape: f32[128,128], index: 5, kind: input, shape index: {}]
  %s6 = inlined_call_operand.hbm [shape: f32[1,2,128,128], index: 6, kind: output, shape index: {0}]
  %s7 = inlined_call_operand.hbm [shape: f32[1,2,1,128], index: 7, kind: output, shape index: {1}]
  %8 = xla_tuple %s6, %s7
  %s9 = sld [smem:[#allocation0]]
  $region97: #{tpu_custom_call.1} parent=0
    _
  %s11 = ssub.s32 1, %s9
  %s12 = scalar_select 0, %s11, %s9
  $region1: #{tpu_custom_call.1} parent=0
    #allocation2 [shape = 'u8[393216]{0}', space=vmem, size = 0x60000, scoped, tag = 'input window, operand 0']
    #allocation3 [shape = 's32[2]{0}', space=sflag, size = 0x8, scoped, tag = 'scoped memory for tpu_custom_call.1']
    #allocation4 [shape = 's32[2]{0}', space=sflag, size = 0x8, scoped, tag = 'scoped memory for tpu_custom_call.1']
    #allocation5 [shape = 'u8[393216]{0}', space=vmem, size = 0x60000, scoped, tag = 'input window, operand 1']
    #allocation6 [shape = 's32[2]{0}', space=sflag, size = 0x8, scoped, tag = 'scoped memory for tpu_custom_call.1']
    #allocation7 [shape = 'u8[393216]{0}', space=vmem, size = 0x60000, scoped, tag = 'input window, operand 2']
    #allocation8 [shape = 'u8[65536]{0}', space=vmem, size = 0x10000, scoped, tag = 'input window, operand 3, single buffered']
    #allocation9 [shape = 's32[1]{0}', space=sflag, size = 0x4, scoped, tag = 'scoped memory for tpu_custom_call.1']
    #allocation10 [shape = 'u8[65536]{0}', space=vmem, size = 0x10000, scoped, tag = 'input window, operand 4, single buffered']
    #allocation11 [shape = 'u8[65536]{0}', space=vmem, size = 0x10000, scoped, tag = 'input window, operand 5, single buffered']
    #allocation12 [shape = 's32[1]{0}', space=sflag, size = 0x4, scoped, tag = 'scoped memory for tpu_custom_call.1']
    #allocation13 [shape = 'u8[131072]{0}', space=vmem, size = 0x20000, scoped, tag = 'output window, operand 0']
    #allocation14 [shape = 'u8[1024]{0}', space=vmem, size = 0x400, scoped, tag = 'output window, operand 1']
    #allocation15 [shape = 's32[2]{0}', space=sflag, size = 0x8, scoped, tag = 'scoped memory for tpu_custom_call.1']
    %13 = vsyncpa [#allocation3], 0
    %s14 = scalar_lea.sflag [#allocation3], 1
    %15 = vsyncpa %s14, 0
    %16 = vsyncpa [#allocation6], 0
    %s17 = scalar_lea.sflag [#allocation6], 1
    %18 = vsyncpa %s17, 0
    %19 = vsyncpa [#allocation9], 0
    %20 = vsyncpa [#allocation12], 0
    %21 = vsyncpa [#allocation4], 0
    %s22 = scalar_lea.sflag [#allocation4], 1
    %23 = vsyncpa %s22, 0
    %24 = vsyncpa [#allocation15], 0
    %s25 = scalar_lea.sflag [#allocation15], 1
    %26 = vsyncpa %s25, 0
    loop: start=0, step=1, limit=4
    $region2: #{tpu_custom_call.1} parent=1 // loop_pre_header
      _
    $region3: #{tpu_custom_call.1} parent=1 // loop_header
      %s28 = sphi 0, %s32
      %p29 = scmp.ge.s32.totalorder %s28, 4
      %s35 = sphi 0, %s54
      %s36 = sphi 0, %s50
      %s37 = sphi 0, %s46
      %s38 = sphi 0, %s35
      %s39 = sphi 0, %s36
      %s40 = sphi 0, %s37
      %s41 = sphi 0, %s38
      %s42 = sphi 0, %s39
      %s43 = sphi 0, %s40
      %s61 = sphi 0, %s63
      %s64 = sphi 0, %s61
      %s65 = sphi 0, %s64
      %s81 = sphi 0, %s65
      %s91 = sphi 0, %s93
      %s94 = sphi 0, %s91
      %s95 = sphi 0, %s94
      %s111 = sphi 0, %s95
      %s121 = sphi 0, %s123
      %s124 = sphi 0, %s121
      %s125 = sphi 0, %s124
      %s141 = sphi 0, %s125
      %s145 = sphi 0, %s145
      %s147 = sphi 0, %s145
      %s148 = sphi 0, %s147
      %s162 = sphi 0, %s148
      %s166 = sphi 0, %s166
      %s168 = sphi 0, %s166
      %s169 = sphi 0, %s168
      %s183 = sphi 0, %s169
      %s187 = sphi 0, %s187
      %s189 = sphi 0, %s187
      %s190 = sphi 0, %s189
      %s204 = sphi 0, %s190
      %s212 = sphi 0, %s214
      %s215 = sphi 0, %s212
      %s216 = sphi 0, %s215
      %s232 = sphi 0, %s216
      %s240 = sphi 0, %s242
      %s243 = sphi 0, %s240
      %s244 = sphi 0, %s243
      %s260 = sphi 0, %s244
    $region4: #{tpu_custom_call.1} parent=1 // loop_header_branch
      %31 = sbr.rel (%p29) target = $region8
    $region5: #{tpu_custom_call.1} parent=1 // loop_body
      %s33 = ssub.s32 %s28, 1
      %s34 = ssub.s32 %s28, 2
      %s44 = sadd.s32 1, %s37
      %p45 = scmp.ge.s32.totalorder %s44, 1
      %s46 = scalar_select %p45, 0, %s44
      %s47 = sadd.s32 1, %s36
      %s48 = scalar_select %p45, %s47, %s36
      %p49 = scmp.ge.s32.totalorder %s48, 2
      %s50 = scalar_select %p49, 0, %s48
      %s51 = sadd.s32 1, %s35
      %s52 = scalar_select %p49, %s51, %s35
      %p53 = scmp.ge.s32.totalorder %s52, 1
      %s54 = scalar_select %p53, 0, %s52
      %s55 = sadd.s32 %s35, %s37
      %s56 = sadd.s32 %s54, %s46
      %s57 = ssub.s32 %s36, %s50
      %s58 = ssub.s32 %s55, %s56
      %s59 = sor.u32 %s57, %s58
      %p60 = scmp.eq.s32.totalorder %s59, 0
      %s62 = sadd.s32 %s61, 1
      %s63 = scalar_select %p60, %s61, %s62
      %p66 = pneg %p60
      %p67 = scmp.eq.s32.totalorder %s28, 1
      %p68 = por %p66, %p67
      %p69 = scmp.ne.s32.totalorder %s61, %s64
      %p70 = scmp.eq.s32.totalorder %s28, 0
      %p71 = por %p69, %p70
      %p72 = scmp.ne.s32.totalorder %s61, %s64
      %p73 = scmp.eq.s32.totalorder %s33, 1
      %p74 = por %p72, %p73
      %p75 = scmp.ne.s32.totalorder %s64, %s65
      %p76 = scmp.eq.s32.totalorder %s33, 0
      %p77 = por %p75, %p76
      %p78 = scmp.ne.s32.totalorder %s64, %s65
      %p79 = scmp.eq.s32.totalorder %s34, 1
      %p80 = por %p78, %p79
      %p82 = scmp.ne.s32.totalorder %s65, %s81
      %p83 = scmp.eq.s32.totalorder %s34, 0
      %p84 = por %p82, %p83
      %s85 = sadd.s32 %s35, %s37
      %s86 = sadd.s32 %s54, %s46
      %s87 = ssub.s32 %s36, %s50
      %s88 = ssub.s32 %s85, %s86
      %s89 = sor.u32 %s87, %s88
      %p90 = scmp.eq.s32.totalorder %s89, 0
      %s92 = sadd.s32 %s91, 1
      %s93 = scalar_select %p90, %s91, %s92
      %p96 = pneg %p90
      %p97 = scmp.eq.s32.totalorder %s28, 1
      %p98 = por %p96, %p97
      %p99 = scmp.ne.s32.totalorder %s91, %s94
      %p100 = scmp.eq.s32.totalorder %s28, 0
      %p101 = por %p99, %p100
      %p102 = scmp.ne.s32.totalorder %s91, %s94
      %p103 = scmp.eq.s32.totalorder %s33, 1
      %p104 = por %p102, %p103
      %p105 = scmp.ne.s32.totalorder %s94, %s95
      %p106 = scmp.eq.s32.totalorder %s33, 0
      %p107 = por %p105, %p106
      %p108 = scmp.ne.s32.totalorder %s94, %s95
      %p109 = scmp.eq.s32.totalorder %s34, 1
      %p110 = por %p108, %p109
      %p112 = scmp.ne.s32.totalorder %s95, %s111
      %p113 = scmp.eq.s32.totalorder %s34, 0
      %p114 = por %p112, %p113
      %s115 = sadd.s32 %s35, %s37
      %s116 = sadd.s32 %s54, %s46
      %s117 = ssub.s32 %s36, %s50
      %s118 = ssub.s32 %s115, %s116
      %s119 = sor.u32 %s117, %s118
      %p120 = scmp.eq.s32.totalorder %s119, 0
      %s122 = sadd.s32 %s121, 1
      %s123 = scalar_select %p120, %s121, %s122
      %p126 = pneg %p120
      %p127 = scmp.eq.s32.totalorder %s28, 1
      %p128 = por %p126, %p127
      %p129 = scmp.ne.s32.totalorder %s121, %s124
      %p130 = scmp.eq.s32.totalorder %s28, 0
      %p131 = por %p129, %p130
      %p132 = scmp.ne.s32.totalorder %s121, %s124
      %p133 = scmp.eq.s32.totalorder %s33, 1
      %p134 = por %p132, %p133
      %p135 = scmp.ne.s32.totalorder %s124, %s125
      %p136 = scmp.eq.s32.totalorder %s33, 0
      %p137 = por %p135, %p136
      %p138 = scmp.ne.s32.totalorder %s124, %s125
      %p139 = scmp.eq.s32.totalorder %s34, 1
      %p140 = por %p138, %p139
      %p142 = scmp.ne.s32.totalorder %s125, %s141
      %p143 = scmp.eq.s32.totalorder %s34, 0
      %p144 = por %p142, %p143
      %s146 = sadd.s32 %s145, 1
      %p149 = scmp.eq.s32.totalorder %s28, 1
      %p150 = scmp.ne.s32.totalorder %s145, %s147
      %p151 = scmp.eq.s32.totalorder %s28, 0
      %p152 = por %p150, %p151
      %p153 = scmp.ne.s32.totalorder %s145, %s147
      %p154 = scmp.eq.s32.totalorder %s33, 1
      %p155 = por %p153, %p154
      %p156 = scmp.ne.s32.totalorder %s147, %s148
      %p157 = scmp.eq.s32.totalorder %s33, 0
      %p158 = por %p156, %p157
      %p159 = scmp.ne.s32.totalorder %s147, %s148
      %p160 = scmp.eq.s32.totalorder %s34, 1
      %p161 = por %p159, %p160
      %p163 = scmp.ne.s32.totalorder %s148, %s162
      %p164 = scmp.eq.s32.totalorder %s34, 0
      %p165 = por %p163, %p164
      %s167 = sadd.s32 %s166, 1
      %p170 = scmp.eq.s32.totalorder %s28, 1
      %p171 = scmp.ne.s32.totalorder %s166, %s168
      %p172 = scmp.eq.s32.totalorder %s28, 0
      %p173 = por %p171, %p172
      %p174 = scmp.ne.s32.totalorder %s166, %s168
      %p175 = scmp.eq.s32.totalorder %s33, 1
      %p176 = por %p174, %p175
      %p177 = scmp.ne.s32.totalorder %s168, %s169
      %p178 = scmp.eq.s32.totalorder %s33, 0
      %p179 = por %p177, %p178
      %p180 = scmp.ne.s32.totalorder %s168, %s169
      %p181 = scmp.eq.s32.totalorder %s34, 1
      %p182 = por %p180, %p181
      %p184 = scmp.ne.s32.totalorder %s169, %s183
      %p185 = scmp.eq.s32.totalorder %s34, 0
      %p186 = por %p184, %p185
      %s188 = sadd.s32 %s187, 1
      %p191 = scmp.eq.s32.totalorder %s28, 1
      %p192 = scmp.ne.s32.totalorder %s187, %s189
      %p193 = scmp.eq.s32.totalorder %s28, 0
      %p194 = por %p192, %p193
      %p195 = scmp.ne.s32.totalorder %s187, %s189
      %p196 = scmp.eq.s32.totalorder %s33, 1
      %p197 = por %p195, %p196
      %p198 = scmp.ne.s32.totalorder %s189, %s190
      %p199 = scmp.eq.s32.totalorder %s33, 0
      %p200 = por %p198, %p199
      %p201 = scmp.ne.s32.totalorder %s189, %s190
      %p202 = scmp.eq.s32.totalorder %s34, 1
      %p203 = por %p201, %p202
      %p205 = scmp.ne.s32.totalorder %s190, %s204
      %p206 = scmp.eq.s32.totalorder %s34, 0
      %p207 = por %p205, %p206
      %s208 = ssub.s32 %s35, %s54
      %s209 = ssub.s32 %s36, %s50
      %s210 = sor.u32 %s208, %s209
      %p211 = scmp.eq.s32.totalorder %s210, 0
      %s213 = sadd.s32 %s212, 1
      %s214 = scalar_select %p211, %s212, %s213
      %p217 = pneg %p211
      %p218 = scmp.eq.s32.totalorder %s28, 1
      %p219 = por %p217, %p218
      %p220 = scmp.ne.s32.totalorder %s212, %s215
      %p221 = scmp.eq.s32.totalorder %s28, 0
      %p222 = por %p220, %p221
      %p223 = scmp.ne.s32.totalorder %s212, %s215
      %p224 = scmp.eq.s32.totalorder %s33, 1
      %p225 = por %p223, %p224
      %p226 = scmp.ne.s32.totalorder %s215, %s216
      %p227 = scmp.eq.s32.totalorder %s33, 0
      %p228 = por %p226, %p227
      %p229 = scmp.ne.s32.totalorder %s215, %s216
      %p230 = scmp.eq.s32.totalorder %s34, 1
      %p231 = por %p229, %p230
      %p233 = scmp.ne.s32.totalorder %s216, %s232
      %p234 = scmp.eq.s32.totalorder %s34, 0
      %p235 = por %p233, %p234
      %s236 = ssub.s32 %s35, %s54
      %s237 = ssub.s32 %s36, %s50
      %s238 = sor.u32 %s236, %s237
      %p239 = scmp.eq.s32.totalorder %s238, 0
      %s241 = sadd.s32 %s240, 1
      %s242 = scalar_select %p239, %s240, %s241
      %p245 = pneg %p239
      %p246 = scmp.eq.s32.totalorder %s28, 1
      %p247 = por %p245, %p246
      %p248 = scmp.ne.s32.totalorder %s240, %s243
      %p249 = scmp.eq.s32.totalorder %s28, 0
      %p250 = por %p248, %p249
      %p251 = scmp.ne.s32.totalorder %s240, %s243
      %p252 = scmp.eq.s32.totalorder %s33, 1
      %p253 = por %p251, %p252
      %p254 = scmp.ne.s32.totalorder %s243, %s244
      %p255 = scmp.eq.s32.totalorder %s33, 0
      %p256 = por %p254, %p255
      %p257 = scmp.ne.s32.totalorder %s243, %s244
      %p258 = scmp.eq.s32.totalorder %s34, 1
      %p259 = por %p257, %p258
      %p261 = scmp.ne.s32.totalorder %s244, %s260
      %p262 = scmp.eq.s32.totalorder %s34, 0
      %p263 = por %p261, %p262
      %p264 = scmp.le.s32.totalorder 1, %s28
      %p265 = scmp.lt.s32.totalorder %s28, 3
      %p266 = pnand %p264, %p265
      %p267 = pneg %p266
      // Predicated region
      $region9: #{tpu_custom_call.1} parent=5 // pred_check
        _
      $region10: #{tpu_custom_call.1} parent=5 // pred_check_branch
        %269 = sbr.rel (%p266) target = $region12
      $region11: #{tpu_custom_call.1} parent=5 // pred_region
        %s270 = ssub.s32 %s28, 1
        // Predicated region
        $region13: #{tpu_custom_call.1} parent=11 // pred_check
          %p271 = pneg %p158
        $region14: #{tpu_custom_call.1} parent=11 // pred_check_branch
          %273 = sbr.rel (%p271) target = $region16
        $region15: #{tpu_custom_call.1} parent=11 // pred_region
          %275 = vsyncadd [#allocation9], 0
          %s276 = sshll.u32 %s3, 4
          %s277 = int_to_ptr.hbm [resolvable:$true] %s276
          %s278 = sshll.u32 [#allocation8], 4
          %s279 = int_to_ptr.vmem [resolvable:$true] %s278
          %284 = dma.hbm_to_vmem [thread:$0]  %s277, 2048, %s279, [#allocation9], 128, 128, 8
        $region16: #{tpu_custom_call.1} parent=11 // pred_fallthru
          _
        // Predicated region
        $region17: #{tpu_custom_call.1} parent=11 // pred_check
          %p285 = pneg %p179
        $region18: #{tpu_custom_call.1} parent=11 // pred_check_branch
          %287 = sbr.rel (%p285) target = $region20
        $region19: #{tpu_custom_call.1} parent=11 // pred_region
          %289 = vsyncadd [#allocation9], 0
          %s290 = sshll.u32 %s4, 4
          %s291 = int_to_ptr.hbm [resolvable:$true] %s290
          %s292 = sshll.u32 [#allocation10], 4
          %s293 = int_to_ptr.vmem [resolvable:$true] %s292
          %298 = dma.hbm_to_vmem [thread:$0]  %s291, 2048, %s293, [#allocation9], 128, 128, 8
        $region20: #{tpu_custom_call.1} parent=11 // pred_fallthru
          _
        // Predicated region
        $region21: #{tpu_custom_call.1} parent=11 // pred_check
          %p299 = pneg %p200
        $region22: #{tpu_custom_call.1} parent=11 // pred_check_branch
          %301 = sbr.rel (%p299) target = $region24
        $region23: #{tpu_custom_call.1} parent=11 // pred_region
          %303 = vsyncadd [#allocation12], 0
          %s304 = sshll.u32 %s5, 4
          %s305 = int_to_ptr.hbm [resolvable:$true] %s304
          %s306 = sshll.u32 [#allocation11], 4
          %s307 = int_to_ptr.vmem [resolvable:$true] %s306
          %312 = dma.hbm_to_vmem [thread:$0]  %s305, 2048, %s307, [#allocation12], 128, 128, 8
        $region24: #{tpu_custom_call.1} parent=11 // pred_fallthru
          _
      $region12: #{tpu_custom_call.1} parent=5 // pred_fallthru
        _
      %p313 = scmp.lt.s32.totalorder %s28, 2
      // Predicated region
      $region25: #{tpu_custom_call.1} parent=5 // pred_check
        %p314 = pneg %p313
      $region26: #{tpu_custom_call.1} parent=5 // pred_check_branch
        %316 = sbr.rel (%p314) target = $region28
      $region27: #{tpu_custom_call.1} parent=5 // pred_region
        // Predicated region
        $region29: #{tpu_custom_call.1} parent=27 // pred_check
          %p317 = pneg %p71
        $region30: #{tpu_custom_call.1} parent=27 // pred_check_branch
          %319 = sbr.rel (%p317) target = $region32
        $region31: #{tpu_custom_call.1} parent=27 // pred_region
          %s320 = sand.u32 %s61, 1
          %s321 = scalar_lea.sflag [#allocation3], %s320
          %s322 = sand.u32 %s61, 1
          %s323 = smul.addr %s322, 384
          %s324 = scalar_lea.vmem [#allocation2], %s323
          %s325 = sadd.s32 %s35, %s37
          %s326 = smul.u32 48, %s325
          %328 = vsyncadd %s321, 0
          %s329 = smul.addr %s36, 48
          %s330 = sadd.s32 %s326, %s329
          %s331 = smul.addr %s330, 8
          %s332 = scalar_lea.hbm %s0, %s331
          %s333 = sshll.u32 %s332, 4
          %s334 = int_to_ptr.hbm [resolvable:$true] %s333
          %s335 = sshll.u32 %s324, 4
          %s336 = int_to_ptr.vmem [resolvable:$true] %s335
          %341 = dma.hbm_to_vmem [thread:$0]  %s334, 6144, %s336, %s321, 128, 128, 8
        $region32: #{tpu_custom_call.1} parent=27 // pred_fallthru
          _
        // Predicated region
        $region33: #{tpu_custom_call.1} parent=27 // pred_check
          %p342 = pneg %p101
        $region34: #{tpu_custom_call.1} parent=27 // pred_check_branch
          %344 = sbr.rel (%p342) target = $region36
        $region35: #{tpu_custom_call.1} parent=27 // pred_region
          %s345 = sand.u32 %s28, 1
          %s346 = scalar_lea.sflag [#allocation6], %s345
          %s347 = sand.u32 %s91, 1
          %s348 = smul.addr %s347, 384
          %s349 = scalar_lea.vmem [#allocation5], %s348
          %s350 = sadd.s32 %s35, %s37
          %s351 = smul.u32 48, %s350
          %353 = vsyncadd %s346, 0
          %s354 = smul.addr %s36, 48
          %s355 = sadd.s32 %s351, %s354
          %s356 = smul.addr %s355, 8
          %s357 = scalar_lea.hbm %s1, %s356
          %s358 = sshll.u32 %s357, 4
          %s359 = int_to_ptr.hbm [resolvable:$true] %s358
          %s360 = sshll.u32 %s349, 4
          %s361 = int_to_ptr.vmem [resolvable:$true] %s360
          %366 = dma.hbm_to_vmem [thread:$0]  %s359, 6144, %s361, %s346, 128, 128, 8
        $region36: #{tpu_custom_call.1} parent=27 // pred_fallthru
          _
        // Predicated region
        $region37: #{tpu_custom_call.1} parent=27 // pred_check
          %p367 = pneg %p131
        $region38: #{tpu_custom_call.1} parent=27 // pred_check_branch
          %369 = sbr.rel (%p367) target = $region40
        $region39: #{tpu_custom_call.1} parent=27 // pred_region
          %s370 = sand.u32 %s28, 1
          %s371 = scalar_lea.sflag [#allocation6], %s370
          %s372 = sand.u32 %s121, 1
          %s373 = smul.addr %s372, 384
          %s374 = scalar_lea.vmem [#allocation7], %s373
          %s375 = sadd.s32 %s35, %s37
          %s376 = smul.u32 48, %s375
          %378 = vsyncadd %s371, 0
          %s379 = smul.addr %s36, 48
          %s380 = sadd.s32 %s376, %s379
          %s381 = smul.addr %s380, 8
          %s382 = scalar_lea.hbm %s2, %s381
          %s383 = sshll.u32 %s382, 4
          %s384 = int_to_ptr.hbm [resolvable:$true] %s383
          %s385 = sshll.u32 %s374, 4
          %s386 = int_to_ptr.vmem [resolvable:$true] %s385
          %391 = dma.hbm_to_vmem [thread:$0]  %s384, 6144, %s386, %s371, 128, 128, 8
        $region40: #{tpu_custom_call.1} parent=27 // pred_fallthru
          _
      $region28: #{tpu_custom_call.1} parent=5 // pred_fallthru
        _
      %p392 = scmp.le.s32.totalorder 1, %s28
      %p393 = scmp.lt.s32.totalorder %s28, 3
      %p394 = pnand %p392, %p393
      %p395 = pneg %p394
      // Predicated region
      $region41: #{tpu_custom_call.1} parent=5 // pred_check
        _
      $region42: #{tpu_custom_call.1} parent=5 // pred_check_branch
        %397 = sbr.rel (%p394) target = $region44
      $region43: #{tpu_custom_call.1} parent=5 // pred_region
        %s398 = ssub.s32 %s28, 1
        %s399 = sand.u32 %s64, 1
        %s400 = scalar_lea.sflag [#allocation3], %s399
        %s401 = sand.u32 %s64, 1
        %s402 = smul.addr %s401, 384
        %s403 = scalar_lea.vmem [#allocation2], %s402
        // Predicated region
        $region45: #{tpu_custom_call.1} parent=43 // pred_check
          %p404 = pneg %p77
        $region46: #{tpu_custom_call.1} parent=43 // pred_check_branch
          %406 = sbr.rel (%p404) target = $region48
        $region47: #{tpu_custom_call.1} parent=43 // pred_region
          %408 = dma.done %s400, 6144
        $region48: #{tpu_custom_call.1} parent=43 // pred_fallthru
          _
        %s409 = sand.u32 %s33, 1
        %s410 = scalar_lea.sflag [#allocation6], %s409
        %s411 = sand.u32 %s94, 1
        %s412 = smul.addr %s411, 384
        %s413 = scalar_lea.vmem [#allocation5], %s412
        // Predicated region
        $region49: #{tpu_custom_call.1} parent=43 // pred_check
          %p414 = pneg %p107
        $region50: #{tpu_custom_call.1} parent=43 // pred_check_branch
          %416 = sbr.rel (%p414) target = $region52
        $region51: #{tpu_custom_call.1} parent=43 // pred_region
          %418 = dma.done %s410, 6144
        $region52: #{tpu_custom_call.1} parent=43 // pred_fallthru
          _
        %s419 = sand.u32 %s33, 1
        %s420 = scalar_lea.sflag [#allocation6], %s419
        %s421 = sand.u32 %s124, 1
        %s422 = smul.addr %s421, 384
        %s423 = scalar_lea.vmem [#allocation7], %s422
        // Predicated region
        $region53: #{tpu_custom_call.1} parent=43 // pred_check
          %p424 = pneg %p137
        $region54: #{tpu_custom_call.1} parent=43 // pred_check_branch
          %426 = sbr.rel (%p424) target = $region56
        $region55: #{tpu_custom_call.1} parent=43 // pred_region
          %428 = dma.done %s420, 6144
        $region56: #{tpu_custom_call.1} parent=43 // pred_fallthru
          _
        // Predicated region
        $region57: #{tpu_custom_call.1} parent=43 // pred_check
          %p429 = pneg %p158
        $region58: #{tpu_custom_call.1} parent=43 // pred_check_branch
          %431 = sbr.rel (%p429) target = $region60
        $region59: #{tpu_custom_call.1} parent=43 // pred_region
          %433 = dma.done [#allocation9], 2048
        $region60: #{tpu_custom_call.1} parent=43 // pred_fallthru
          _
        // Predicated region
        $region61: #{tpu_custom_call.1} parent=43 // pred_check
          %p434 = pneg %p179
        $region62: #{tpu_custom_call.1} parent=43 // pred_check_branch
          %436 = sbr.rel (%p434) target = $region64
        $region63: #{tpu_custom_call.1} parent=43 // pred_region
          %438 = dma.done [#allocation9], 2048
        $region64: #{tpu_custom_call.1} parent=43 // pred_fallthru
          _
        // Predicated region
        $region65: #{tpu_custom_call.1} parent=43 // pred_check
          %p439 = pneg %p200
        $region66: #{tpu_custom_call.1} parent=43 // pred_check_branch
          %441 = sbr.rel (%p439) target = $region68
        $region67: #{tpu_custom_call.1} parent=43 // pred_region
          %443 = dma.done [#allocation12], 2048
        $region68: #{tpu_custom_call.1} parent=43 // pred_fallthru
          _
        %s444 = sand.u32 %s64, 1
        %s445 = scalar_lea.sflag [#allocation3], %s444
        %s446 = sand.u32 %s64, 1
        %s447 = smul.addr %s446, 384
        %s448 = scalar_lea.vmem [#allocation2], %s447
        %p449 = pneg %p77
        %p450 = pneg %p74
        %s451 = sand.u32 %s33, 1
        %s452 = scalar_lea.sflag [#allocation6], %s451
        %s453 = sand.u32 %s94, 1
        %s454 = smul.addr %s453, 384
        %s455 = scalar_lea.vmem [#allocation5], %s454
        %p456 = pneg %p107
        %p457 = pneg %p104
        %s458 = sand.u32 %s33, 1
        %s459 = scalar_lea.sflag [#allocation6], %s458
        %s460 = sand.u32 %s124, 1
        %s461 = smul.addr %s460, 384
        %s462 = scalar_lea.vmem [#allocation7], %s461
        %p463 = pneg %p137
        %p464 = pneg %p134
        %p465 = pneg %p158
        %p466 = pneg %p155
        %p467 = pneg %p179
        %p468 = pneg %p176
        %p469 = pneg %p200
        %p470 = pneg %p197
        %p471 = pneg %p228
        %p472 = pneg %p225
        %s473 = sand.u32 %s215, 1
        %s474 = scalar_lea.sflag [#allocation4], %s473
        %s475 = sand.u32 %s215, 1
        %s476 = smul.addr %s475, 128
        %s477 = scalar_lea.vmem [#allocation13], %s476
        %p478 = pneg %p256
        %p479 = pneg %p253
        %s480 = sand.u32 %s243, 1
        %s481 = scalar_lea.sflag [#allocation15], %s480
        %s482 = sand.u32 %s243, 1
        %s483 = scalar_lea.vmem [#allocation14], %s482
        %s484 = sadd.s32 %s38, %s40
        %s485 = smul.u32 48, %s484
        %s486 = sadd.s32 %s38, %s40
        %s487 = smul.u32 48, %s486
        %s488 = sadd.s32 %s38, %s40
        %s489 = smul.u32 48, %s488
        %p490 = scmp.eq.s32.totalorder %s40, 0
        // Predicated region
        $region69: #{tpu_custom_call.1} parent=43 // pred_check
          %p491 = pneg %p490
        $region70: #{tpu_custom_call.1} parent=43 // pred_check_branch
          %493 = sbr.rel (%p491) target = $region72
        $region71: #{tpu_custom_call.1} parent=43 // pred_region
          %494 = vst [vmem:[%s477] sm:$0xff] 0.0
          %495 = vst [vmem:[%s477 + $0x8] sm:$0xff] 0.0
          %496 = vst [vmem:[%s477 + $0x10] sm:$0xff] 0.0
          %497 = vst [vmem:[%s477 + $0x18] sm:$0xff] 0.0
          %498 = vst [vmem:[%s477 + $0x20] sm:$0xff] 0.0
          %499 = vst [vmem:[%s477 + $0x28] sm:$0xff] 0.0
          %500 = vst [vmem:[%s477 + $0x30] sm:$0xff] 0.0
          %501 = vst [vmem:[%s477 + $0x38] sm:$0xff] 0.0
          %502 = vst [vmem:[%s477 + $0x40] sm:$0xff] 0.0
          %503 = vst [vmem:[%s477 + $0x48] sm:$0xff] 0.0
          %504 = vst [vmem:[%s477 + $0x50] sm:$0xff] 0.0
          %505 = vst [vmem:[%s477 + $0x58] sm:$0xff] 0.0
          %506 = vst [vmem:[%s477 + $0x60] sm:$0xff] 0.0
          %507 = vst [vmem:[%s477 + $0x68] sm:$0xff] 0.0
          %508 = vst [vmem:[%s477 + $0x70] sm:$0xff] 0.0
          %509 = vst [vmem:[%s477 + $0x78] sm:$0xff] 0.0
          %510 = vst [vmem:[%s483] sm:$0x1] 0.0
        $region72: #{tpu_custom_call.1} parent=43 // pred_fallthru
          _
        %v511 = vld [vmem:[%s403] sm:$0xff]
        %v512 = vld [vmem:[%s403 + $0x8] sm:$0xff]
        %v513 = vld [vmem:[%s403 + $0x10] sm:$0xff]
        %v514 = vld [vmem:[%s403 + $0x18] sm:$0xff]
        %v515 = vld [vmem:[%s403 + $0x20] sm:$0xff]
        %v516 = vld [vmem:[%s403 + $0x28] sm:$0xff]
        %v517 = vld [vmem:[%s403 + $0x30] sm:$0xff]
        %v518 = vld [vmem:[%s403 + $0x38] sm:$0xff]
        %v519 = vld [vmem:[%s403 + $0x40] sm:$0xff]
        %v520 = vld [vmem:[%s403 + $0x48] sm:$0xff]
        %v521 = vld [vmem:[%s403 + $0x50] sm:$0xff]
        %v522 = vld [vmem:[%s403 + $0x58] sm:$0xff]
        %v523 = vld [vmem:[%s403 + $0x60] sm:$0xff]
        %v524 = vld [vmem:[%s403 + $0x68] sm:$0xff]
        %v525 = vld [vmem:[%s403 + $0x70] sm:$0xff]
        %v526 = vld [vmem:[%s403 + $0x78] sm:$0xff]
        %v527 = vld [vmem:[%s403 + $0x80] sm:$0xff]
        %v528 = vld [vmem:[%s403 + $0x88] sm:$0xff]
        %v529 = vld [vmem:[%s403 + $0x90] sm:$0xff]
        %v530 = vld [vmem:[%s403 + $0x98] sm:$0xff]
        %v531 = vld [vmem:[%s403 + $0xa0] sm:$0xff]
        %v532 = vld [vmem:[%s403 + $0xa8] sm:$0xff]
        %v533 = vld [vmem:[%s403 + $0xb0] sm:$0xff]
        %v534 = vld [vmem:[%s403 + $0xb8] sm:$0xff]
        %v535 = vld [vmem:[%s403 + $0xc0] sm:$0xff]
        %v536 = vld [vmem:[%s403 + $0xc8] sm:$0xff]
        %v537 = vld [vmem:[%s403 + $0xd0] sm:$0xff]
        %v538 = vld [vmem:[%s403 + $0xd8] sm:$0xff]
        %v539 = vld [vmem:[%s403 + $0xe0] sm:$0xff]
        %v540 = vld [vmem:[%s403 + $0xe8] sm:$0xff]
        %v541 = vld [vmem:[%s403 + $0xf0] sm:$0xff]
        %v542 = vld [vmem:[%s403 + $0xf8] sm:$0xff]
        %v543 = vld [vmem:[%s403 + $0x100] sm:$0xff]
        %v544 = vld [vmem:[%s403 + $0x108] sm:$0xff]
        %v545 = vld [vmem:[%s403 + $0x110] sm:$0xff]
        %v546 = vld [vmem:[%s403 + $0x118] sm:$0xff]
        %v547 = vld [vmem:[%s403 + $0x120] sm:$0xff]
        %v548 = vld [vmem:[%s403 + $0x128] sm:$0xff]
        %v549 = vld [vmem:[%s403 + $0x130] sm:$0xff]
        %v550 = vld [vmem:[%s403 + $0x138] sm:$0xff]
        %v551 = vld [vmem:[%s403 + $0x140] sm:$0xff]
        %v552 = vld [vmem:[%s403 + $0x148] sm:$0xff]
        %v553 = vld [vmem:[%s403 + $0x150] sm:$0xff]
        %v554 = vld [vmem:[%s403 + $0x158] sm:$0xff]
        %v555 = vld [vmem:[%s403 + $0x160] sm:$0xff]
        %v556 = vld [vmem:[%s403 + $0x168] sm:$0xff]
        %v557 = vld [vmem:[%s403 + $0x170] sm:$0xff]
        %v558 = vld [vmem:[%s403 + $0x178] sm:$0xff]
        %v559 = vld [vmem:[%s413] sm:$0xff]
        %v560 = vld [vmem:[%s413 + $0x8] sm:$0xff]
        %v561 = vld [vmem:[%s413 + $0x10] sm:$0xff]
        %v562 = vld [vmem:[%s413 + $0x18] sm:$0xff]
        %v563 = vld [vmem:[%s413 + $0x20] sm:$0xff]
        %v564 = vld [vmem:[%s413 + $0x28] sm:$0xff]
        %v565 = vld [vmem:[%s413 + $0x30] sm:$0xff]
        %v566 = vld [vmem:[%s413 + $0x38] sm:$0xff]
        %v567 = vld [vmem:[%s413 + $0x40] sm:$0xff]
        %v568 = vld [vmem:[%s413 + $0x48] sm:$0xff]
        %v569 = vld [vmem:[%s413 + $0x50] sm:$0xff]
        %v570 = vld [vmem:[%s413 + $0x58] sm:$0xff]
        %v571 = vld [vmem:[%s413 + $0x60] sm:$0xff]
        %v572 = vld [vmem:[%s413 + $0x68] sm:$0xff]
        %v573 = vld [vmem:[%s413 + $0x70] sm:$0xff]
        %v574 = vld [vmem:[%s413 + $0x78] sm:$0xff]
        %v575 = vld [vmem:[%s413 + $0x80] sm:$0xff]
        %v576 = vld [vmem:[%s413 + $0x88] sm:$0xff]
        %v577 = vld [vmem:[%s413 + $0x90] sm:$0xff]
        %v578 = vld [vmem:[%s413 + $0x98] sm:$0xff]
        %v579 = vld [vmem:[%s413 + $0xa0] sm:$0xff]
        %v580 = vld [vmem:[%s413 + $0xa8] sm:$0xff]
        %v581 = vld [vmem:[%s413 + $0xb0] sm:$0xff]
        %v582 = vld [vmem:[%s413 + $0xb8] sm:$0xff]
        %v583 = vld [vmem:[%s413 + $0xc0] sm:$0xff]
        %v584 = vld [vmem:[%s413 + $0xc8] sm:$0xff]
        %v585 = vld [vmem:[%s413 + $0xd0] sm:$0xff]
        %v586 = vld [vmem:[%s413 + $0xd8] sm:$0xff]
        %v587 = vld [vmem:[%s413 + $0xe0] sm:$0xff]
        %v588 = vld [vmem:[%s413 + $0xe8] sm:$0xff]
        %v589 = vld [vmem:[%s413 + $0xf0] sm:$0xff]
        %v590 = vld [vmem:[%s413 + $0xf8] sm:$0xff]
        %v591 = vld [vmem:[%s413 + $0x100] sm:$0xff]
        %v592 = vld [vmem:[%s413 + $0x108] sm:$0xff]
        %v593 = vld [vmem:[%s413 + $0x110] sm:$0xff]
        %v594 = vld [vmem:[%s413 + $0x118] sm:$0xff]
        %v595 = vld [vmem:[%s413 + $0x120] sm:$0xff]
        %v596 = vld [vmem:[%s413 + $0x128] sm:$0xff]
        %v597 = vld [vmem:[%s413 + $0x130] sm:$0xff]
        %v598 = vld [vmem:[%s413 + $0x138] sm:$0xff]
        %v599 = vld [vmem:[%s413 + $0x140] sm:$0xff]
        %v600 = vld [vmem:[%s413 + $0x148] sm:$0xff]
        %v601 = vld [vmem:[%s413 + $0x150] sm:$0xff]
        %v602 = vld [vmem:[%s413 + $0x158] sm:$0xff]
        %v603 = vld [vmem:[%s413 + $0x160] sm:$0xff]
        %v604 = vld [vmem:[%s413 + $0x168] sm:$0xff]
        %v605 = vld [vmem:[%s413 + $0x170] sm:$0xff]
        %v606 = vld [vmem:[%s413 + $0x178] sm:$0xff]
        %v607 = vld [vmem:[%s423] sm:$0xff]
        %v608 = vld [vmem:[%s423 + $0x8] sm:$0xff]
        %v609 = vld [vmem:[%s423 + $0x10] sm:$0xff]
        %v610 = vld [vmem:[%s423 + $0x18] sm:$0xff]
        %v611 = vld [vmem:[%s423 + $0x20] sm:$0xff]
        %v612 = vld [vmem:[%s423 + $0x28] sm:$0xff]
        %v613 = vld [vmem:[%s423 + $0x30] sm:$0xff]
        %v614 = vld [vmem:[%s423 + $0x38] sm:$0xff]
        %v615 = vld [vmem:[%s423 + $0x40] sm:$0xff]
        %v616 = vld [vmem:[%s423 + $0x48] sm:$0xff]
        %v617 = vld [vmem:[%s423 + $0x50] sm:$0xff]
        %v618 = vld [vmem:[%s423 + $0x58] sm:$0xff]
        %v619 = vld [vmem:[%s423 + $0x60] sm:$0xff]
        %v620 = vld [vmem:[%s423 + $0x68] sm:$0xff]
        %v621 = vld [vmem:[%s423 + $0x70] sm:$0xff]
        %v622 = vld [vmem:[%s423 + $0x78] sm:$0xff]
        %v623 = vld [vmem:[%s423 + $0x80] sm:$0xff]
        %v624 = vld [vmem:[%s423 + $0x88] sm:$0xff]
        %v625 = vld [vmem:[%s423 + $0x90] sm:$0xff]
        %v626 = vld [vmem:[%s423 + $0x98] sm:$0xff]
        %v627 = vld [vmem:[%s423 + $0xa0] sm:$0xff]
        %v628 = vld [vmem:[%s423 + $0xa8] sm:$0xff]
        %v629 = vld [vmem:[%s423 + $0xb0] sm:$0xff]
        %v630 = vld [vmem:[%s423 + $0xb8] sm:$0xff]
        %v631 = vld [vmem:[%s423 + $0xc0] sm:$0xff]
        %v632 = vld [vmem:[%s423 + $0xc8] sm:$0xff]
        %v633 = vld [vmem:[%s423 + $0xd0] sm:$0xff]
        %v634 = vld [vmem:[%s423 + $0xd8] sm:$0xff]
        %v635 = vld [vmem:[%s423 + $0xe0] sm:$0xff]
        %v636 = vld [vmem:[%s423 + $0xe8] sm:$0xff]
        %v637 = vld [vmem:[%s423 + $0xf0] sm:$0xff]
        %v638 = vld [vmem:[%s423 + $0xf8] sm:$0xff]
        %v639 = vld [vmem:[%s423 + $0x100] sm:$0xff]
        %v640 = vld [vmem:[%s423 + $0x108] sm:$0xff]
        %v641 = vld [vmem:[%s423 + $0x110] sm:$0xff]
        %v642 = vld [vmem:[%s423 + $0x118] sm:$0xff]
        %v643 = vld [vmem:[%s423 + $0x120] sm:$0xff]
        %v644 = vld [vmem:[%s423 + $0x128] sm:$0xff]
        %v645 = vld [vmem:[%s423 + $0x130] sm:$0xff]
        %v646 = vld [vmem:[%s423 + $0x138] sm:$0xff]
        %v647 = vld [vmem:[%s423 + $0x140] sm:$0xff]
        %v648 = vld [vmem:[%s423 + $0x148] sm:$0xff]
        %v649 = vld [vmem:[%s423 + $0x150] sm:$0xff]
        %v650 = vld [vmem:[%s423 + $0x158] sm:$0xff]
        %v651 = vld [vmem:[%s423 + $0x160] sm:$0xff]
        %v652 = vld [vmem:[%s423 + $0x168] sm:$0xff]
        %v653 = vld [vmem:[%s423 + $0x170] sm:$0xff]
        %v654 = vld [vmem:[%s423 + $0x178] sm:$0xff]
        %v655 = vlaneseq
        %v656 = vand.u32 %v655, 127
        %vm657 = vcmp.lt.s32.totalorder %v656, 0
        %v658 = vsub.s32 0, %v656
        %v659 = vsel %vm657, %v658, %v656
        %v660 = vshrl.u32 %v659, 1
        %v661 = vand.u32 %v659, 1
        %v662 = vsub.s32 0, %v661
        %v663 = vsel %vm657, %v662, %v661
        %vm664 = vcmp.ne.s32.totalorder %v663, 0
        %vm665 = vcmp.lt.s32.totalorder %v663, 0
        %vm666 = vmand %vm665, %vm664
        %v667 = vadd.s32 %v663, 2
        %v668 = vsel %vm666, %v667, %v663
        %vm669 = vcmp.eq.s32.totalorder %v668, 0
        %v670 = vsub.f32 0.0, %v607
        %v671 = vsub.f32 0.0, %v608
        %v672 = vsub.f32 0.0, %v609
        %v673 = vsub.f32 0.0, %v610
        %v674 = vsub.f32 0.0, %v611
        %v675 = vsub.f32 0.0, %v612
        %v676 = vsub.f32 0.0, %v613
        %v677 = vsub.f32 0.0, %v614
        %v678 = vsub.f32 0.0, %v615
        %v679 = vsub.f32 0.0, %v616
        %v680 = vsub.f32 0.0, %v617
        %v681 = vsub.f32 0.0, %v618
        %v682 = vsub.f32 0.0, %v619
        %v683 = vsub.f32 0.0, %v620
        %v684 = vsub.f32 0.0, %v621
        %v685 = vsub.f32 0.0, %v622
        %v686 = vsub.f32 0.0, %v623
        %v687 = vsub.f32 0.0, %v624
        %v688 = vsub.f32 0.0, %v625
        %v689 = vsub.f32 0.0, %v626
        %v690 = vsub.f32 0.0, %v627
        %v691 = vsub.f32 0.0, %v628
        %v692 = vsub.f32 0.0, %v629
        %v693 = vsub.f32 0.0, %v630
        %v694 = vsub.f32 0.0, %v631
        %v695 = vsub.f32 0.0, %v632
        %v696 = vsub.f32 0.0, %v633
        %v697 = vsub.f32 0.0, %v634
        %v698 = vsub.f32 0.0, %v635
        %v699 = vsub.f32 0.0, %v636
        %v700 = vsub.f32 0.0, %v637
        %v701 = vsub.f32 0.0, %v638
        %v702 = vsub.f32 0.0, %v639
        %v703 = vsub.f32 0.0, %v640
        %v704 = vsub.f32 0.0, %v641
        %v705 = vsub.f32 0.0, %v642
        %v706 = vsub.f32 0.0, %v643
        %v707 = vsub.f32 0.0, %v644
        %v708 = vsub.f32 0.0, %v645
        %v709 = vsub.f32 0.0, %v646
        %v710 = vsub.f32 0.0, %v647
        %v711 = vsub.f32 0.0, %v648
        %v712 = vsub.f32 0.0, %v649
        %v713 = vsub.f32 0.0, %v650
        %v714 = vsub.f32 0.0, %v651
        %v715 = vsub.f32 0.0, %v652
        %v716 = vsub.f32 0.0, %v653
        %v717 = vsub.f32 0.0, %v654
        %v718 = vsel %vm669, 1, 0
        %vm719 = vcmp.eq.s32.totalorder %v718, 1
        %v720 = vsel %vm719, %v670, 0.0
        %v721 = vsel %vm719, %v671, 0.0
        %v722 = vsel %vm719, %v672, 0.0
        %v723 = vsel %vm719, %v673, 0.0
        %v724 = vsel %vm719, %v674, 0.0
        %v725 = vsel %vm719, %v675, 0.0
        %v726 = vsel %vm719, %v676, 0.0
        %v727 = vsel %vm719, %v677, 0.0
        %v728 = vsel %vm719, %v678, 0.0
        %v729 = vsel %vm719, %v679, 0.0
        %v730 = vsel %vm719, %v680, 0.0
        %v731 = vsel %vm719, %v681, 0.0
        %v732 = vsel %vm719, %v682, 0.0
        %v733 = vsel %vm719, %v683, 0.0
        %v734 = vsel %vm719, %v684, 0.0
        %v735 = vsel %vm719, %v685, 0.0
        %v736 = vsel %vm719, %v686, 0.0
        %v737 = vsel %vm719, %v687, 0.0
        %v738 = vsel %vm719, %v688, 0.0
        %v739 = vsel %vm719, %v689, 0.0
        %v740 = vsel %vm719, %v690, 0.0
        %v741 = vsel %vm719, %v691, 0.0
        %v742 = vsel %vm719, %v692, 0.0
        %v743 = vsel %vm719, %v693, 0.0
        %v744 = vsel %vm719, %v694, 0.0
        %v745 = vsel %vm719, %v695, 0.0
        %v746 = vsel %vm719, %v696, 0.0
        %v747 = vsel %vm719, %v697, 0.0
        %v748 = vsel %vm719, %v698, 0.0
        %v749 = vsel %vm719, %v699, 0.0
        %v750 = vsel %vm719, %v700, 0.0
        %v751 = vsel %vm719, %v701, 0.0
        %v752 = vsel %vm719, %v702, 0.0
        %v753 = vsel %vm719, %v703, 0.0
        %v754 = vsel %vm719, %v704, 0.0
        %v755 = vsel %vm719, %v705, 0.0
        %v756 = vsel %vm719, %v706, 0.0
        %v757 = vsel %vm719, %v707, 0.0
        %v758 = vsel %vm719, %v708, 0.0
        %v759 = vsel %vm719, %v709, 0.0
        %v760 = vsel %vm719, %v710, 0.0
        %v761 = vsel %vm719, %v711, 0.0
        %v762 = vsel %vm719, %v712, 0.0
        %v763 = vsel %vm719, %v713, 0.0
        %v764 = vsel %vm719, %v714, 0.0
        %v765 = vsel %vm719, %v715, 0.0
        %v766 = vsel %vm719, %v716, 0.0
        %v767 = vsel %vm719, %v717, 0.0
        %v768 = vsel %vm719, 0.0, %v607
        %v769 = vsel %vm719, 0.0, %v608
        %v770 = vsel %vm719, 0.0, %v609
        %v771 = vsel %vm719, 0.0, %v610
        %v772 = vsel %vm719, 0.0, %v611
        %v773 = vsel %vm719, 0.0, %v612
        %v774 = vsel %vm719, 0.0, %v613
        %v775 = vsel %vm719, 0.0, %v614
        %v776 = vsel %vm719, 0.0, %v615
        %v777 = vsel %vm719, 0.0, %v616
        %v778 = vsel %vm719, 0.0, %v617
        %v779 = vsel %vm719, 0.0, %v618
        %v780 = vsel %vm719, 0.0, %v619
        %v781 = vsel %vm719, 0.0, %v620
        %v782 = vsel %vm719, 0.0, %v621
        %v783 = vsel %vm719, 0.0, %v622
        %v784 = vsel %vm719, 0.0, %v623
        %v785 = vsel %vm719, 0.0, %v624
        %v786 = vsel %vm719, 0.0, %v625
        %v787 = vsel %vm719, 0.0, %v626
        %v788 = vsel %vm719, 0.0, %v627
        %v789 = vsel %vm719, 0.0, %v628
        %v790 = vsel %vm719, 0.0, %v629
        %v791 = vsel %vm719, 0.0, %v630
        %v792 = vsel %vm719, 0.0, %v631
        %v793 = vsel %vm719, 0.0, %v632
        %v794 = vsel %vm719, 0.0, %v633
        %v795 = vsel %vm719, 0.0, %v634
        %v796 = vsel %vm719, 0.0, %v635
        %v797 = vsel %vm719, 0.0, %v636
        %v798 = vsel %vm719, 0.0, %v637
        %v799 = vsel %vm719, 0.0, %v638
        %v800 = vsel %vm719, 0.0, %v639
        %v801 = vsel %vm719, 0.0, %v640
        %v802 = vsel %vm719, 0.0, %v641
        %v803 = vsel %vm719, 0.0, %v642
        %v804 = vsel %vm719, 0.0, %v643
        %v805 = vsel %vm719, 0.0, %v644
        %v806 = vsel %vm719, 0.0, %v645
        %v807 = vsel %vm719, 0.0, %v646
        %v808 = vsel %vm719, 0.0, %v647
        %v809 = vsel %vm719, 0.0, %v648
        %v810 = vsel %vm719, 0.0, %v649
        %v811 = vsel %vm719, 0.0, %v650
        %v812 = vsel %vm719, 0.0, %v651
        %v813 = vsel %vm719, 0.0, %v652
        %v814 = vsel %vm719, 0.0, %v653
        %v815 = vsel %vm719, 0.0, %v654
        %v816 = vld [vmem:[#allocation10] sm:$0xff]
        %v817 = vld [vmem:[#allocation10 + $0x8] sm:$0xff]
        %v818 = vld [vmem:[#allocation10 + $0x10] sm:$0xff]
        %v819 = vld [vmem:[#allocation10 + $0x18] sm:$0xff]
        %v820 = vld [vmem:[#allocation10 + $0x20] sm:$0xff]
        %v821 = vld [vmem:[#allocation10 + $0x28] sm:$0xff]
        %v822 = vld [vmem:[#allocation10 + $0x30] sm:$0xff]
        %v823 = vld [vmem:[#allocation10 + $0x38] sm:$0xff]
        %v824 = vld [vmem:[#allocation10 + $0x40] sm:$0xff]
        %v825 = vld [vmem:[#allocation10 + $0x48] sm:$0xff]
        %v826 = vld [vmem:[#allocation10 + $0x50] sm:$0xff]
        %v827 = vld [vmem:[#allocation10 + $0x58] sm:$0xff]
        %v828 = vld [vmem:[#allocation10 + $0x60] sm:$0xff]
        %v829 = vld [vmem:[#allocation10 + $0x68] sm:$0xff]
        %v830 = vld [vmem:[#allocation10 + $0x70] sm:$0xff]
        %v831 = vld [vmem:[#allocation10 + $0x78] sm:$0xff]
        %832 = vmatpush.msra.mxu0 %v831
        %833 = vmatpush.msra.mxu0 %v830
        %834 = vmatpush.msra.mxu0 %v829
        %835 = vmatpush.msra.mxu0 %v828
        %836 = vmatpush.msra.mxu0 %v827
        %837 = vmatpush.msra.mxu0 %v826
        %838 = vmatpush.msra.mxu0 %v825
        %839 = vmatpush.msra.mxu0 %v824
        %840 = vmatpush.msra.mxu0 %v823
        %841 = vmatpush.msra.mxu0 %v822
        %842 = vmatpush.msra.mxu0 %v821
        %843 = vmatpush.msra.mxu0 %v820
        %844 = vmatpush.msra.mxu0 %v819
        %845 = vmatpush.msra.mxu0 %v818
        %846 = vmatpush.msra.mxu0 %v817
        %847 = vmatpush.msra.mxu0 %v816
        %848 = vmatmul.f32.gmra.mxu0 %v511
        %v849 = vpop.f32.mrf.mxu0
        %v850 = vadd.f32 0.0, %v849
        %851 = vmatmul.f32.gmra.mxu0 %v512
        %v852 = vpop.f32.mrf.mxu0
        %v853 = vadd.f32 0.0, %v852
        %854 = vmatmul.f32.gmra.mxu0 %v513
        %v855 = vpop.f32.mrf.mxu0
        %v856 = vadd.f32 0.0, %v855
        %857 = vmatmul.f32.gmra.mxu0 %v514
        %v858 = vpop.f32.mrf.mxu0
        %v859 = vadd.f32 0.0, %v858
        %860 = vmatmul.f32.gmra.mxu0 %v515
        %v861 = vpop.f32.mrf.mxu0
        %v862 = vadd.f32 0.0, %v861
        %863 = vmatmul.f32.gmra.mxu0 %v516
        %v864 = vpop.f32.mrf.mxu0
        %v865 = vadd.f32 0.0, %v864
        %866 = vmatmul.f32.gmra.mxu0 %v517
        %v867 = vpop.f32.mrf.mxu0
        %v868 = vadd.f32 0.0, %v867
        %869 = vmatmul.f32.gmra.mxu0 %v518
        %v870 = vpop.f32.mrf.mxu0
        %v871 = vadd.f32 0.0, %v870
        %872 = vmatmul.f32.gmra.mxu0 %v519
        %v873 = vpop.f32.mrf.mxu0
        %v874 = vadd.f32 0.0, %v873
        %875 = vmatmul.f32.gmra.mxu0 %v520
        %v876 = vpop.f32.mrf.mxu0
        %v877 = vadd.f32 0.0, %v876
        %878 = vmatmul.f32.gmra.mxu0 %v521
        %v879 = vpop.f32.mrf.mxu0
        %v880 = vadd.f32 0.0, %v879
        %881 = vmatmul.f32.gmra.mxu0 %v522
        %v882 = vpop.f32.mrf.mxu0
        %v883 = vadd.f32 0.0, %v882
        %884 = vmatmul.f32.gmra.mxu0 %v523
        %v885 = vpop.f32.mrf.mxu0
        %v886 = vadd.f32 0.0, %v885
        %887 = vmatmul.f32.gmra.mxu0 %v524
        %v888 = vpop.f32.mrf.mxu0
        %v889 = vadd.f32 0.0, %v888
        %890 = vmatmul.f32.gmra.mxu0 %v525
        %v891 = vpop.f32.mrf.mxu0
        %v892 = vadd.f32 0.0, %v891
        %893 = vmatmul.f32.gmra.mxu0 %v526
        %v894 = vpop.f32.mrf.mxu0
        %v895 = vadd.f32 0.0, %v894
        %896 = vmatmul.f32.gmra.mxu0 %v527
        %v897 = vpop.f32.mrf.mxu0
        %v898 = vadd.f32 0.0, %v897
        %899 = vmatmul.f32.gmra.mxu0 %v528
        %v900 = vpop.f32.mrf.mxu0
        %v901 = vadd.f32 0.0, %v900
        %902 = vmatmul.f32.gmra.mxu0 %v529
        %v903 = vpop.f32.mrf.mxu0
        %v904 = vadd.f32 0.0, %v903
        %905 = vmatmul.f32.gmra.mxu0 %v530
        %v906 = vpop.f32.mrf.mxu0
        %v907 = vadd.f32 0.0, %v906
        %908 = vmatmul.f32.gmra.mxu0 %v531
        %v909 = vpop.f32.mrf.mxu0
        %v910 = vadd.f32 0.0, %v909
        %911 = vmatmul.f32.gmra.mxu0 %v532
        %v912 = vpop.f32.mrf.mxu0
        %v913 = vadd.f32 0.0, %v912
        %914 = vmatmul.f32.gmra.mxu0 %v533
        %v915 = vpop.f32.mrf.mxu0
        %v916 = vadd.f32 0.0, %v915
        %917 = vmatmul.f32.gmra.mxu0 %v534
        %v918 = vpop.f32.mrf.mxu0
        %v919 = vadd.f32 0.0, %v918
        %920 = vmatmul.f32.gmra.mxu0 %v535
        %v921 = vpop.f32.mrf.mxu0
        %v922 = vadd.f32 0.0, %v921
        %923 = vmatmul.f32.gmra.mxu0 %v536
        %v924 = vpop.f32.mrf.mxu0
        %v925 = vadd.f32 0.0, %v924
        %926 = vmatmul.f32.gmra.mxu0 %v537
        %v927 = vpop.f32.mrf.mxu0
        %v928 = vadd.f32 0.0, %v927
        %929 = vmatmul.f32.gmra.mxu0 %v538
        %v930 = vpop.f32.mrf.mxu0
        %v931 = vadd.f32 0.0, %v930
        %932 = vmatmul.f32.gmra.mxu0 %v539
        %v933 = vpop.f32.mrf.mxu0
        %v934 = vadd.f32 0.0, %v933
        %935 = vmatmul.f32.gmra.mxu0 %v540
        %v936 = vpop.f32.mrf.mxu0
        %v937 = vadd.f32 0.0, %v936
        %938 = vmatmul.f32.gmra.mxu0 %v541
        %v939 = vpop.f32.mrf.mxu0
        %v940 = vadd.f32 0.0, %v939
        %941 = vmatmul.f32.gmra.mxu0 %v542
        %v942 = vpop.f32.mrf.mxu0
        %v943 = vadd.f32 0.0, %v942
        %944 = vmatmul.f32.gmra.mxu0 %v543
        %v945 = vpop.f32.mrf.mxu0
        %v946 = vadd.f32 0.0, %v945
        %947 = vmatmul.f32.gmra.mxu0 %v544
        %v948 = vpop.f32.mrf.mxu0
        %v949 = vadd.f32 0.0, %v948
        %950 = vmatmul.f32.gmra.mxu0 %v545
        %v951 = vpop.f32.mrf.mxu0
        %v952 = vadd.f32 0.0, %v951
        %953 = vmatmul.f32.gmra.mxu0 %v546
        %v954 = vpop.f32.mrf.mxu0
        %v955 = vadd.f32 0.0, %v954
        %956 = vmatmul.f32.gmra.mxu0 %v547
        %v957 = vpop.f32.mrf.mxu0
        %v958 = vadd.f32 0.0, %v957
        %959 = vmatmul.f32.gmra.mxu0 %v548
        %v960 = vpop.f32.mrf.mxu0
        %v961 = vadd.f32 0.0, %v960
        %962 = vmatmul.f32.gmra.mxu0 %v549
        %v963 = vpop.f32.mrf.mxu0
        %v964 = vadd.f32 0.0, %v963
        %965 = vmatmul.f32.gmra.mxu0 %v550
        %v966 = vpop.f32.mrf.mxu0
        %v967 = vadd.f32 0.0, %v966
        %968 = vmatmul.f32.gmra.mxu0 %v551
        %v969 = vpop.f32.mrf.mxu0
        %v970 = vadd.f32 0.0, %v969
        %971 = vmatmul.f32.gmra.mxu0 %v552
        %v972 = vpop.f32.mrf.mxu0
        %v973 = vadd.f32 0.0, %v972
        %974 = vmatmul.f32.gmra.mxu0 %v553
        %v975 = vpop.f32.mrf.mxu0
        %v976 = vadd.f32 0.0, %v975
        %977 = vmatmul.f32.gmra.mxu0 %v554
        %v978 = vpop.f32.mrf.mxu0
        %v979 = vadd.f32 0.0, %v978
        %980 = vmatmul.f32.gmra.mxu0 %v555
        %v981 = vpop.f32.mrf.mxu0
        %v982 = vadd.f32 0.0, %v981
        %983 = vmatmul.f32.gmra.mxu0 %v556
        %v984 = vpop.f32.mrf.mxu0
        %v985 = vadd.f32 0.0, %v984
        %986 = vmatmul.f32.gmra.mxu0 %v557
        %v987 = vpop.f32.mrf.mxu0
        %v988 = vadd.f32 0.0, %v987
        %989 = vmatmul.f32.gmra.mxu0 %v558
        %v990 = vpop.f32.mrf.mxu0
        %v991 = vadd.f32 0.0, %v990
        %992 = vdwg.mxu0
        %v993 = vld [vmem:[#allocation11] sm:$0xff]
        %v994 = vld [vmem:[#allocation11 + $0x8] sm:$0xff]
        %v995 = vld [vmem:[#allocation11 + $0x10] sm:$0xff]
        %v996 = vld [vmem:[#allocation11 + $0x18] sm:$0xff]
        %v997 = vld [vmem:[#allocation11 + $0x20] sm:$0xff]
        %v998 = vld [vmem:[#allocation11 + $0x28] sm:$0xff]
        %v999 = vld [vmem:[#allocation11 + $0x30] sm:$0xff]
        %v1000 = vld [vmem:[#allocation11 + $0x38] sm:$0xff]
        %v1001 = vld [vmem:[#allocation11 + $0x40] sm:$0xff]
        %v1002 = vld [vmem:[#allocation11 + $0x48] sm:$0xff]
        %v1003 = vld [vmem:[#allocation11 + $0x50] sm:$0xff]
        %v1004 = vld [vmem:[#allocation11 + $0x58] sm:$0xff]
        %v1005 = vld [vmem:[#allocation11 + $0x60] sm:$0xff]
        %v1006 = vld [vmem:[#allocation11 + $0x68] sm:$0xff]
        %v1007 = vld [vmem:[#allocation11 + $0x70] sm:$0xff]
        %v1008 = vld [vmem:[#allocation11 + $0x78] sm:$0xff]
        %1009 = vmatpush.msra.mxu0 %v1008
        %1010 = vmatpush.msra.mxu0 %v1007
        %1011 = vmatpush.msra.mxu0 %v1006
        %1012 = vmatpush.msra.mxu0 %v1005
        %1013 = vmatpush.msra.mxu0 %v1004
        %1014 = vmatpush.msra.mxu0 %v1003
        %1015 = vmatpush.msra.mxu0 %v1002
        %1016 = vmatpush.msra.mxu0 %v1001
        %1017 = vmatpush.msra.mxu0 %v1000
        %1018 = vmatpush.msra.mxu0 %v999
        %1019 = vmatpush.msra.mxu0 %v998
        %1020 = vmatpush.msra.mxu0 %v997
        %1021 = vmatpush.msra.mxu0 %v996
        %1022 = vmatpush.msra.mxu0 %v995
        %1023 = vmatpush.msra.mxu0 %v994
        %1024 = vmatpush.msra.mxu0 %v993
        %1025 = vmatmul.f32.gmra.mxu0 %v511
        %v1026 = vpop.f32.mrf.mxu0
        %v1027 = vadd.f32 0.0, %v1026
        %1028 = vmatmul.f32.gmra.mxu0 %v512
        %v1029 = vpop.f32.mrf.mxu0
        %v1030 = vadd.f32 0.0, %v1029
        %1031 = vmatmul.f32.gmra.mxu0 %v513
        %v1032 = vpop.f32.mrf.mxu0
        %v1033 = vadd.f32 0.0, %v1032
        %1034 = vmatmul.f32.gmra.mxu0 %v514
        %v1035 = vpop.f32.mrf.mxu0
        %v1036 = vadd.f32 0.0, %v1035
        %1037 = vmatmul.f32.gmra.mxu0 %v515
        %v1038 = vpop.f32.mrf.mxu0
        %v1039 = vadd.f32 0.0, %v1038
        %1040 = vmatmul.f32.gmra.mxu0 %v516
        %v1041 = vpop.f32.mrf.mxu0
        %v1042 = vadd.f32 0.0, %v1041
        %1043 = vmatmul.f32.gmra.mxu0 %v517
        %v1044 = vpop.f32.mrf.mxu0
        %v1045 = vadd.f32 0.0, %v1044
        %1046 = vmatmul.f32.gmra.mxu0 %v518
        %v1047 = vpop.f32.mrf.mxu0
        %v1048 = vadd.f32 0.0, %v1047
        %1049 = vmatmul.f32.gmra.mxu0 %v519
        %v1050 = vpop.f32.mrf.mxu0
        %v1051 = vadd.f32 0.0, %v1050
        %1052 = vmatmul.f32.gmra.mxu0 %v520
        %v1053 = vpop.f32.mrf.mxu0
        %v1054 = vadd.f32 0.0, %v1053
        %1055 = vmatmul.f32.gmra.mxu0 %v521
        %v1056 = vpop.f32.mrf.mxu0
        %v1057 = vadd.f32 0.0, %v1056
        %1058 = vmatmul.f32.gmra.mxu0 %v522
        %v1059 = vpop.f32.mrf.mxu0
        %v1060 = vadd.f32 0.0, %v1059
        %1061 = vmatmul.f32.gmra.mxu0 %v523
        %v1062 = vpop.f32.mrf.mxu0
        %v1063 = vadd.f32 0.0, %v1062
        %1064 = vmatmul.f32.gmra.mxu0 %v524
        %v1065 = vpop.f32.mrf.mxu0
        %v1066 = vadd.f32 0.0, %v1065
        %1067 = vmatmul.f32.gmra.mxu0 %v525
        %v1068 = vpop.f32.mrf.mxu0
        %v1069 = vadd.f32 0.0, %v1068
        %1070 = vmatmul.f32.gmra.mxu0 %v526
        %v1071 = vpop.f32.mrf.mxu0
        %v1072 = vadd.f32 0.0, %v1071
        %1073 = vmatmul.f32.gmra.mxu0 %v527
        %v1074 = vpop.f32.mrf.mxu0
        %v1075 = vadd.f32 0.0, %v1074
        %1076 = vmatmul.f32.gmra.mxu0 %v528
        %v1077 = vpop.f32.mrf.mxu0
        %v1078 = vadd.f32 0.0, %v1077
        %1079 = vmatmul.f32.gmra.mxu0 %v529
        %v1080 = vpop.f32.mrf.mxu0
        %v1081 = vadd.f32 0.0, %v1080
        %1082 = vmatmul.f32.gmra.mxu0 %v530
        %v1083 = vpop.f32.mrf.mxu0
        %v1084 = vadd.f32 0.0, %v1083
        %1085 = vmatmul.f32.gmra.mxu0 %v531
        %v1086 = vpop.f32.mrf.mxu0
        %v1087 = vadd.f32 0.0, %v1086
        %1088 = vmatmul.f32.gmra.mxu0 %v532
        %v1089 = vpop.f32.mrf.mxu0
        %v1090 = vadd.f32 0.0, %v1089
        %1091 = vmatmul.f32.gmra.mxu0 %v533
        %v1092 = vpop.f32.mrf.mxu0
        %v1093 = vadd.f32 0.0, %v1092
        %1094 = vmatmul.f32.gmra.mxu0 %v534
        %v1095 = vpop.f32.mrf.mxu0
        %v1096 = vadd.f32 0.0, %v1095
        %1097 = vmatmul.f32.gmra.mxu0 %v535
        %v1098 = vpop.f32.mrf.mxu0
        %v1099 = vadd.f32 0.0, %v1098
        %1100 = vmatmul.f32.gmra.mxu0 %v536
        %v1101 = vpop.f32.mrf.mxu0
        %v1102 = vadd.f32 0.0, %v1101
        %1103 = vmatmul.f32.gmra.mxu0 %v537
        %v1104 = vpop.f32.mrf.mxu0
        %v1105 = vadd.f32 0.0, %v1104
        %1106 = vmatmul.f32.gmra.mxu0 %v538
        %v1107 = vpop.f32.mrf.mxu0
        %v1108 = vadd.f32 0.0, %v1107
        %1109 = vmatmul.f32.gmra.mxu0 %v539
        %v1110 = vpop.f32.mrf.mxu0
        %v1111 = vadd.f32 0.0, %v1110
        %1112 = vmatmul.f32.gmra.mxu0 %v540
        %v1113 = vpop.f32.mrf.mxu0
        %v1114 = vadd.f32 0.0, %v1113
        %1115 = vmatmul.f32.gmra.mxu0 %v541
        %v1116 = vpop.f32.mrf.mxu0
        %v1117 = vadd.f32 0.0, %v1116
        %1118 = vmatmul.f32.gmra.mxu0 %v542
        %v1119 = vpop.f32.mrf.mxu0
        %v1120 = vadd.f32 0.0, %v1119
        %1121 = vmatmul.f32.gmra.mxu0 %v543
        %v1122 = vpop.f32.mrf.mxu0
        %v1123 = vadd.f32 0.0, %v1122
        %1124 = vmatmul.f32.gmra.mxu0 %v544
        %v1125 = vpop.f32.mrf.mxu0
        %v1126 = vadd.f32 0.0, %v1125
        %1127 = vmatmul.f32.gmra.mxu0 %v545
        %v1128 = vpop.f32.mrf.mxu0
        %v1129 = vadd.f32 0.0, %v1128
        %1130 = vmatmul.f32.gmra.mxu0 %v546
        %v1131 = vpop.f32.mrf.mxu0
        %v1132 = vadd.f32 0.0, %v1131
        %1133 = vmatmul.f32.gmra.mxu0 %v547
        %v1134 = vpop.f32.mrf.mxu0
        %v1135 = vadd.f32 0.0, %v1134
        %1136 = vmatmul.f32.gmra.mxu0 %v548
        %v1137 = vpop.f32.mrf.mxu0
        %v1138 = vadd.f32 0.0, %v1137
        %1139 = vmatmul.f32.gmra.mxu0 %v549
        %v1140 = vpop.f32.mrf.mxu0
        %v1141 = vadd.f32 0.0, %v1140
        %1142 = vmatmul.f32.gmra.mxu0 %v550
        %v1143 = vpop.f32.mrf.mxu0
        %v1144 = vadd.f32 0.0, %v1143
        %1145 = vmatmul.f32.gmra.mxu0 %v551
        %v1146 = vpop.f32.mrf.mxu0
        %v1147 = vadd.f32 0.0, %v1146
        %1148 = vmatmul.f32.gmra.mxu0 %v552
        %v1149 = vpop.f32.mrf.mxu0
        %v1150 = vadd.f32 0.0, %v1149
        %1151 = vmatmul.f32.gmra.mxu0 %v553
        %v1152 = vpop.f32.mrf.mxu0
        %v1153 = vadd.f32 0.0, %v1152
        %1154 = vmatmul.f32.gmra.mxu0 %v554
        %v1155 = vpop.f32.mrf.mxu0
        %v1156 = vadd.f32 0.0, %v1155
        %1157 = vmatmul.f32.gmra.mxu0 %v555
        %v1158 = vpop.f32.mrf.mxu0
        %v1159 = vadd.f32 0.0, %v1158
        %1160 = vmatmul.f32.gmra.mxu0 %v556
        %v1161 = vpop.f32.mrf.mxu0
        %v1162 = vadd.f32 0.0, %v1161
        %1163 = vmatmul.f32.gmra.mxu0 %v557
        %v1164 = vpop.f32.mrf.mxu0
        %v1165 = vadd.f32 0.0, %v1164
        %1166 = vmatmul.f32.gmra.mxu0 %v558
        %v1167 = vpop.f32.mrf.mxu0
        %v1168 = vadd.f32 0.0, %v1167
        %1169 = vdwg.mxu0
        %vm1170 = vcmp.gt.f32.partialorder %v850, 0.0
        %vm1171 = vcmp.gt.f32.partialorder %v853, 0.0
        %vm1172 = vcmp.gt.f32.partialorder %v856, 0.0
        %vm1173 = vcmp.gt.f32.partialorder %v859, 0.0
        %vm1174 = vcmp.gt.f32.partialorder %v862, 0.0
        %vm1175 = vcmp.gt.f32.partialorder %v865, 0.0
        %vm1176 = vcmp.gt.f32.partialorder %v868, 0.0
        %vm1177 = vcmp.gt.f32.partialorder %v871, 0.0
        %vm1178 = vcmp.gt.f32.partialorder %v874, 0.0
        %vm1179 = vcmp.gt.f32.partialorder %v877, 0.0
        %vm1180 = vcmp.gt.f32.partialorder %v880, 0.0
        %vm1181 = vcmp.gt.f32.partialorder %v883, 0.0
        %vm1182 = vcmp.gt.f32.partialorder %v886, 0.0
        %vm1183 = vcmp.gt.f32.partialorder %v889, 0.0
        %vm1184 = vcmp.gt.f32.partialorder %v892, 0.0
        %vm1185 = vcmp.gt.f32.partialorder %v895, 0.0
        %vm1186 = vcmp.gt.f32.partialorder %v898, 0.0
        %vm1187 = vcmp.gt.f32.partialorder %v901, 0.0
        %vm1188 = vcmp.gt.f32.partialorder %v904, 0.0
        %vm1189 = vcmp.gt.f32.partialorder %v907, 0.0
        %vm1190 = vcmp.gt.f32.partialorder %v910, 0.0
        %vm1191 = vcmp.gt.f32.partialorder %v913, 0.0
        %vm1192 = vcmp.gt.f32.partialorder %v916, 0.0
        %vm1193 = vcmp.gt.f32.partialorder %v919, 0.0
        %vm1194 = vcmp.gt.f32.partialorder %v922, 0.0
        %vm1195 = vcmp.gt.f32.partialorder %v925, 0.0
        %vm1196 = vcmp.gt.f32.partialorder %v928, 0.0
        %vm1197 = vcmp.gt.f32.partialorder %v931, 0.0
        %vm1198 = vcmp.gt.f32.partialorder %v934, 0.0
        %vm1199 = vcmp.gt.f32.partialorder %v937, 0.0
        %vm1200 = vcmp.gt.f32.partialorder %v940, 0.0
        %vm1201 = vcmp.gt.f32.partialorder %v943, 0.0
        %vm1202 = vcmp.gt.f32.partialorder %v946, 0.0
        %vm1203 = vcmp.gt.f32.partialorder %v949, 0.0
        %vm1204 = vcmp.gt.f32.partialorder %v952, 0.0
        %vm1205 = vcmp.gt.f32.partialorder %v955, 0.0
        %vm1206 = vcmp.gt.f32.partialorder %v958, 0.0
        %vm1207 = vcmp.gt.f32.partialorder %v961, 0.0
        %vm1208 = vcmp.gt.f32.partialorder %v964, 0.0
        %vm1209 = vcmp.gt.f32.partialorder %v967, 0.0
        %vm1210 = vcmp.gt.f32.partialorder %v970, 0.0
        %vm1211 = vcmp.gt.f32.partialorder %v973, 0.0
        %vm1212 = vcmp.gt.f32.partialorder %v976, 0.0
        %vm1213 = vcmp.gt.f32.partialorder %v979, 0.0
        %vm1214 = vcmp.gt.f32.partialorder %v982, 0.0
        %vm1215 = vcmp.gt.f32.partialorder %v985, 0.0
        %vm1216 = vcmp.gt.f32.partialorder %v988, 0.0
        %vm1217 = vcmp.gt.f32.partialorder %v991, 0.0
        %v1218 = vadd.f32 %v850, 1.0
        %v1219 = vadd.f32 %v853, 1.0
        %v1220 = vadd.f32 %v856, 1.0
        %v1221 = vadd.f32 %v859, 1.0
        %v1222 = vadd.f32 %v862, 1.0
        %v1223 = vadd.f32 %v865, 1.0
        %v1224 = vadd.f32 %v868, 1.0
        %v1225 = vadd.f32 %v871, 1.0
        %v1226 = vadd.f32 %v874, 1.0
        %v1227 = vadd.f32 %v877, 1.0
        %v1228 = vadd.f32 %v880, 1.0
        %v1229 = vadd.f32 %v883, 1.0
        %v1230 = vadd.f32 %v886, 1.0
        %v1231 = vadd.f32 %v889, 1.0
        %v1232 = vadd.f32 %v892, 1.0
        %v1233 = vadd.f32 %v895, 1.0
        %v1234 = vadd.f32 %v898, 1.0
        %v1235 = vadd.f32 %v901, 1.0
        %v1236 = vadd.f32 %v904, 1.0
        %v1237 = vadd.f32 %v907, 1.0
        %v1238 = vadd.f32 %v910, 1.0
        %v1239 = vadd.f32 %v913, 1.0
        %v1240 = vadd.f32 %v916, 1.0
        %v1241 = vadd.f32 %v919, 1.0
        %v1242 = vadd.f32 %v922, 1.0
        %v1243 = vadd.f32 %v925, 1.0
        %v1244 = vadd.f32 %v928, 1.0
        %v1245 = vadd.f32 %v931, 1.0
        %v1246 = vadd.f32 %v934, 1.0
        %v1247 = vadd.f32 %v937, 1.0
        %v1248 = vadd.f32 %v940, 1.0
        %v1249 = vadd.f32 %v943, 1.0
        %v1250 = vadd.f32 %v946, 1.0
        %v1251 = vadd.f32 %v949, 1.0
        %v1252 = vadd.f32 %v952, 1.0
        %v1253 = vadd.f32 %v955, 1.0
        %v1254 = vadd.f32 %v958, 1.0
        %v1255 = vadd.f32 %v961, 1.0
        %v1256 = vadd.f32 %v964, 1.0
        %v1257 = vadd.f32 %v967, 1.0
        %v1258 = vadd.f32 %v970, 1.0
        %v1259 = vadd.f32 %v973, 1.0
        %v1260 = vadd.f32 %v976, 1.0
        %v1261 = vadd.f32 %v979, 1.0
        %v1262 = vadd.f32 %v982, 1.0
        %v1263 = vadd.f32 %v985, 1.0
        %v1264 = vadd.f32 %v988, 1.0
        %v1265 = vadd.f32 %v991, 1.0
        %v1266 = vmin.f32 %v850, 0.0
        %v1267 = vmin.f32 %v853, 0.0
        %v1268 = vmin.f32 %v856, 0.0
        %v1269 = vmin.f32 %v859, 0.0
        %v1270 = vmin.f32 %v862, 0.0
        %v1271 = vmin.f32 %v865, 0.0
        %v1272 = vmin.f32 %v868, 0.0
        %v1273 = vmin.f32 %v871, 0.0
        %v1274 = vmin.f32 %v874, 0.0
        %v1275 = vmin.f32 %v877, 0.0
        %v1276 = vmin.f32 %v880, 0.0
        %v1277 = vmin.f32 %v883, 0.0
        %v1278 = vmin.f32 %v886, 0.0
        %v1279 = vmin.f32 %v889, 0.0
        %v1280 = vmin.f32 %v892, 0.0
        %v1281 = vmin.f32 %v895, 0.0
        %v1282 = vmin.f32 %v898, 0.0
        %v1283 = vmin.f32 %v901, 0.0
        %v1284 = vmin.f32 %v904, 0.0
        %v1285 = vmin.f32 %v907, 0.0
        %v1286 = vmin.f32 %v910, 0.0
        %v1287 = vmin.f32 %v913, 0.0
        %v1288 = vmin.f32 %v916, 0.0
        %v1289 = vmin.f32 %v919, 0.0
        %v1290 = vmin.f32 %v922, 0.0
        %v1291 = vmin.f32 %v925, 0.0
        %v1292 = vmin.f32 %v928, 0.0
        %v1293 = vmin.f32 %v931, 0.0
        %v1294 = vmin.f32 %v934, 0.0
        %v1295 = vmin.f32 %v937, 0.0
        %v1296 = vmin.f32 %v940, 0.0
        %v1297 = vmin.f32 %v943, 0.0
        %v1298 = vmin.f32 %v946, 0.0
        %v1299 = vmin.f32 %v949, 0.0
        %v1300 = vmin.f32 %v952, 0.0
        %v1301 = vmin.f32 %v955, 0.0
        %v1302 = vmin.f32 %v958, 0.0
        %v1303 = vmin.f32 %v961, 0.0
        %v1304 = vmin.f32 %v964, 0.0
        %v1305 = vmin.f32 %v967, 0.0
        %v1306 = vmin.f32 %v970, 0.0
        %v1307 = vmin.f32 %v973, 0.0
        %v1308 = vmin.f32 %v976, 0.0
        %v1309 = vmin.f32 %v979, 0.0
        %v1310 = vmin.f32 %v982, 0.0
        %v1311 = vmin.f32 %v985, 0.0
        %v1312 = vmin.f32 %v988, 0.0
        %v1313 = vmin.f32 %v991, 0.0
        %v1314 = vmul.f32 %v1266, 1.442695
        %v1315 = vpow.pop %v1314
        %v1316 = vmul.f32 %v1267, 1.442695
        %v1317 = vpow.pop %v1316
        %v1318 = vmul.f32 %v1268, 1.442695
        %v1319 = vpow.pop %v1318
        %v1320 = vmul.f32 %v1269, 1.442695
        %v1321 = vpow.pop %v1320
        %v1322 = vmul.f32 %v1270, 1.442695
        %v1323 = vpow.pop %v1322
        %v1324 = vmul.f32 %v1271, 1.442695
        %v1325 = vpow.pop %v1324
        %v1326 = vmul.f32 %v1272, 1.442695
        %v1327 = vpow.pop %v1326
        %v1328 = vmul.f32 %v1273, 1.442695
        %v1329 = vpow.pop %v1328
        %v1330 = vmul.f32 %v1274, 1.442695
        %v1331 = vpow.pop %v1330
        %v1332 = vmul.f32 %v1275, 1.442695
        %v1333 = vpow.pop %v1332
        %v1334 = vmul.f32 %v1276, 1.442695
        %v1335 = vpow.pop %v1334
        %v1336 = vmul.f32 %v1277, 1.442695
        %v1337 = vpow.pop %v1336
        %v1338 = vmul.f32 %v1278, 1.442695
        %v1339 = vpow.pop %v1338
        %v1340 = vmul.f32 %v1279, 1.442695
        %v1341 = vpow.pop %v1340
        %v1342 = vmul.f32 %v1280, 1.442695
        %v1343 = vpow.pop %v1342
        %v1344 = vmul.f32 %v1281, 1.442695
        %v1345 = vpow.pop %v1344
        %v1346 = vmul.f32 %v1282, 1.442695
        %v1347 = vpow.pop %v1346
        %v1348 = vmul.f32 %v1283, 1.442695
        %v1349 = vpow.pop %v1348
        %v1350 = vmul.f32 %v1284, 1.442695
        %v1351 = vpow.pop %v1350
        %v1352 = vmul.f32 %v1285, 1.442695
        %v1353 = vpow.pop %v1352
        %v1354 = vmul.f32 %v1286, 1.442695
        %v1355 = vpow.pop %v1354
        %v1356 = vmul.f32 %v1287, 1.442695
        %v1357 = vpow.pop %v1356
        %v1358 = vmul.f32 %v1288, 1.442695
        %v1359 = vpow.pop %v1358
        %v1360 = vmul.f32 %v1289, 1.442695
        %v1361 = vpow.pop %v1360
        %v1362 = vmul.f32 %v1290, 1.442695
        %v1363 = vpow.pop %v1362
        %v1364 = vmul.f32 %v1291, 1.442695
        %v1365 = vpow.pop %v1364
        %v1366 = vmul.f32 %v1292, 1.442695
        %v1367 = vpow.pop %v1366
        %v1368 = vmul.f32 %v1293, 1.442695
        %v1369 = vpow.pop %v1368
        %v1370 = vmul.f32 %v1294, 1.442695
        %v1371 = vpow.pop %v1370
        %v1372 = vmul.f32 %v1295, 1.442695
        %v1373 = vpow.pop %v1372
        %v1374 = vmul.f32 %v1296, 1.442695
        %v1375 = vpow.pop %v1374
        %v1376 = vmul.f32 %v1297, 1.442695
        %v1377 = vpow.pop %v1376
        %v1378 = vmul.f32 %v1298, 1.442695
        %v1379 = vpow.pop %v1378
        %v1380 = vmul.f32 %v1299, 1.442695
        %v1381 = vpow.pop %v1380
        %v1382 = vmul.f32 %v1300, 1.442695
        %v1383 = vpow.pop %v1382
        %v1384 = vmul.f32 %v1301, 1.442695
        %v1385 = vpow.pop %v1384
        %v1386 = vmul.f32 %v1302, 1.442695
        %v1387 = vpow.pop %v1386
        %v1388 = vmul.f32 %v1303, 1.442695
        %v1389 = vpow.pop %v1388
        %v1390 = vmul.f32 %v1304, 1.442695
        %v1391 = vpow.pop %v1390
        %v1392 = vmul.f32 %v1305, 1.442695
        %v1393 = vpow.pop %v1392
        %v1394 = vmul.f32 %v1306, 1.442695
        %v1395 = vpow.pop %v1394
        %v1396 = vmul.f32 %v1307, 1.442695
        %v1397 = vpow.pop %v1396
        %v1398 = vmul.f32 %v1308, 1.442695
        %v1399 = vpow.pop %v1398
        %v1400 = vmul.f32 %v1309, 1.442695
        %v1401 = vpow.pop %v1400
        %v1402 = vmul.f32 %v1310, 1.442695
        %v1403 = vpow.pop %v1402
        %v1404 = vmul.f32 %v1311, 1.442695
        %v1405 = vpow.pop %v1404
        %v1406 = vmul.f32 %v1312, 1.442695
        %v1407 = vpow.pop %v1406
        %v1408 = vmul.f32 %v1313, 1.442695
        %v1409 = vpow.pop %v1408
        %v1410 = vsel %vm1170, %v1218, %v1315
        %v1411 = vsel %vm1171, %v1219, %v1317
        %v1412 = vsel %vm1172, %v1220, %v1319
        %v1413 = vsel %vm1173, %v1221, %v1321
        %v1414 = vsel %vm1174, %v1222, %v1323
        %v1415 = vsel %vm1175, %v1223, %v1325
        %v1416 = vsel %vm1176, %v1224, %v1327
        %v1417 = vsel %vm1177, %v1225, %v1329
        %v1418 = vsel %vm1178, %v1226, %v1331
        %v1419 = vsel %vm1179, %v1227, %v1333
        %v1420 = vsel %vm1180, %v1228, %v1335
        %v1421 = vsel %vm1181, %v1229, %v1337
        %v1422 = vsel %vm1182, %v1230, %v1339
        %v1423 = vsel %vm1183, %v1231, %v1341
        %v1424 = vsel %vm1184, %v1232, %v1343
        %v1425 = vsel %vm1185, %v1233, %v1345
        %v1426 = vsel %vm1186, %v1234, %v1347
        %v1427 = vsel %vm1187, %v1235, %v1349
        %v1428 = vsel %vm1188, %v1236, %v1351
        %v1429 = vsel %vm1189, %v1237, %v1353
        %v1430 = vsel %vm1190, %v1238, %v1355
        %v1431 = vsel %vm1191, %v1239, %v1357
        %v1432 = vsel %vm1192, %v1240, %v1359
        %v1433 = vsel %vm1193, %v1241, %v1361
        %v1434 = vsel %vm1194, %v1242, %v1363
        %v1435 = vsel %vm1195, %v1243, %v1365
        %v1436 = vsel %vm1196, %v1244, %v1367
        %v1437 = vsel %vm1197, %v1245, %v1369
        %v1438 = vsel %vm1198, %v1246, %v1371
        %v1439 = vsel %vm1199, %v1247, %v1373
        %v1440 = vsel %vm1200, %v1248, %v1375
        %v1441 = vsel %vm1201, %v1249, %v1377
        %v1442 = vsel %vm1202, %v1250, %v1379
        %v1443 = vsel %vm1203, %v1251, %v1381
        %v1444 = vsel %vm1204, %v1252, %v1383
        %v1445 = vsel %vm1205, %v1253, %v1385
        %v1446 = vsel %vm1206, %v1254, %v1387
        %v1447 = vsel %vm1207, %v1255, %v1389
        %v1448 = vsel %vm1208, %v1256, %v1391
        %v1449 = vsel %vm1209, %v1257, %v1393
        %v1450 = vsel %vm1210, %v1258, %v1395
        %v1451 = vsel %vm1211, %v1259, %v1397
        %v1452 = vsel %vm1212, %v1260, %v1399
        %v1453 = vsel %vm1213, %v1261, %v1401
        %v1454 = vsel %vm1214, %v1262, %v1403
        %v1455 = vsel %vm1215, %v1263, %v1405
        %v1456 = vsel %vm1216, %v1264, %v1407
        %v1457 = vsel %vm1217, %v1265, %v1409
        %1458 = vrot.lane.b32.xlu0 %v850, 127
        %v1459 = vpop.permute.xlu0 %1458
        %1460 = vrot.lane.b32.xlu0 %v853, 127
        %v1461 = vpop.permute.xlu0 %1460
        %1462 = vrot.lane.b32.xlu0 %v856, 127
        %v1463 = vpop.permute.xlu0 %1462
        %1464 = vrot.lane.b32.xlu0 %v859, 127
        %v1465 = vpop.permute.xlu0 %1464
        %1466 = vrot.lane.b32.xlu0 %v862, 127
        %v1467 = vpop.permute.xlu0 %1466
        %1468 = vrot.lane.b32.xlu0 %v865, 127
        %v1469 = vpop.permute.xlu0 %1468
        %1470 = vrot.lane.b32.xlu0 %v868, 127
        %v1471 = vpop.permute.xlu0 %1470
        %1472 = vrot.lane.b32.xlu0 %v871, 127
        %v1473 = vpop.permute.xlu0 %1472
        %1474 = vrot.lane.b32.xlu0 %v874, 127
        %v1475 = vpop.permute.xlu0 %1474
        %1476 = vrot.lane.b32.xlu0 %v877, 127
        %v1477 = vpop.permute.xlu0 %1476
        %1478 = vrot.lane.b32.xlu0 %v880, 127
        %v1479 = vpop.permute.xlu0 %1478
        %1480 = vrot.lane.b32.xlu0 %v883, 127
        %v1481 = vpop.permute.xlu0 %1480
        %1482 = vrot.lane.b32.xlu0 %v886, 127
        %v1483 = vpop.permute.xlu0 %1482
        %1484 = vrot.lane.b32.xlu0 %v889, 127
        %v1485 = vpop.permute.xlu0 %1484
        %1486 = vrot.lane.b32.xlu0 %v892, 127
        %v1487 = vpop.permute.xlu0 %1486
        %1488 = vrot.lane.b32.xlu0 %v895, 127
        %v1489 = vpop.permute.xlu0 %1488
        %1490 = vrot.lane.b32.xlu0 %v898, 127
        %v1491 = vpop.permute.xlu0 %1490
        %1492 = vrot.lane.b32.xlu0 %v901, 127
        %v1493 = vpop.permute.xlu0 %1492
        %1494 = vrot.lane.b32.xlu0 %v904, 127
        %v1495 = vpop.permute.xlu0 %1494
        %1496 = vrot.lane.b32.xlu0 %v907, 127
        %v1497 = vpop.permute.xlu0 %1496
        %1498 = vrot.lane.b32.xlu0 %v910, 127
        %v1499 = vpop.permute.xlu0 %1498
        %1500 = vrot.lane.b32.xlu0 %v913, 127
        %v1501 = vpop.permute.xlu0 %1500
        %1502 = vrot.lane.b32.xlu0 %v916, 127
        %v1503 = vpop.permute.xlu0 %1502
        %1504 = vrot.lane.b32.xlu0 %v919, 127
        %v1505 = vpop.permute.xlu0 %1504
        %1506 = vrot.lane.b32.xlu0 %v922, 127
        %v1507 = vpop.permute.xlu0 %1506
        %1508 = vrot.lane.b32.xlu0 %v925, 127
        %v1509 = vpop.permute.xlu0 %1508
        %1510 = vrot.lane.b32.xlu0 %v928, 127
        %v1511 = vpop.permute.xlu0 %1510
        %1512 = vrot.lane.b32.xlu0 %v931, 127
        %v1513 = vpop.permute.xlu0 %1512
        %1514 = vrot.lane.b32.xlu0 %v934, 127
        %v1515 = vpop.permute.xlu0 %1514
        %1516 = vrot.lane.b32.xlu0 %v937, 127
        %v1517 = vpop.permute.xlu0 %1516
        %1518 = vrot.lane.b32.xlu0 %v940, 127
        %v1519 = vpop.permute.xlu0 %1518
        %1520 = vrot.lane.b32.xlu0 %v943, 127
        %v1521 = vpop.permute.xlu0 %1520
        %1522 = vrot.lane.b32.xlu0 %v946, 127
        %v1523 = vpop.permute.xlu0 %1522
        %1524 = vrot.lane.b32.xlu0 %v949, 127
        %v1525 = vpop.permute.xlu0 %1524
        %1526 = vrot.lane.b32.xlu0 %v952, 127
        %v1527 = vpop.permute.xlu0 %1526
        %1528 = vrot.lane.b32.xlu0 %v955, 127
        %v1529 = vpop.permute.xlu0 %1528
        %1530 = vrot.lane.b32.xlu0 %v958, 127
        %v1531 = vpop.permute.xlu0 %1530
        %1532 = vrot.lane.b32.xlu0 %v961, 127
        %v1533 = vpop.permute.xlu0 %1532
        %1534 = vrot.lane.b32.xlu0 %v964, 127
        %v1535 = vpop.permute.xlu0 %1534
        %1536 = vrot.lane.b32.xlu0 %v967, 127
        %v1537 = vpop.permute.xlu0 %1536
        %1538 = vrot.lane.b32.xlu0 %v970, 127
        %v1539 = vpop.permute.xlu0 %1538
        %1540 = vrot.lane.b32.xlu0 %v973, 127
        %v1541 = vpop.permute.xlu0 %1540
        %1542 = vrot.lane.b32.xlu0 %v976, 127
        %v1543 = vpop.permute.xlu0 %1542
        %1544 = vrot.lane.b32.xlu0 %v979, 127
        %v1545 = vpop.permute.xlu0 %1544
        %1546 = vrot.lane.b32.xlu0 %v982, 127
        %v1547 = vpop.permute.xlu0 %1546
        %1548 = vrot.lane.b32.xlu0 %v985, 127
        %v1549 = vpop.permute.xlu0 %1548
        %1550 = vrot.lane.b32.xlu0 %v988, 127
        %v1551 = vpop.permute.xlu0 %1550
        %1552 = vrot.lane.b32.xlu0 %v991, 127
        %v1553 = vpop.permute.xlu0 %1552
        %1554 = vrot.lane.b32.xlu0 %v850, 1
        %v1555 = vpop.permute.xlu0 %1554
        %1556 = vrot.lane.b32.xlu0 %v853, 1
        %v1557 = vpop.permute.xlu0 %1556
        %1558 = vrot.lane.b32.xlu0 %v856, 1
        %v1559 = vpop.permute.xlu0 %1558
        %1560 = vrot.lane.b32.xlu0 %v859, 1
        %v1561 = vpop.permute.xlu0 %1560
        %1562 = vrot.lane.b32.xlu0 %v862, 1
        %v1563 = vpop.permute.xlu0 %1562
        %1564 = vrot.lane.b32.xlu0 %v865, 1
        %v1565 = vpop.permute.xlu0 %1564
        %1566 = vrot.lane.b32.xlu0 %v868, 1
        %v1567 = vpop.permute.xlu0 %1566
        %1568 = vrot.lane.b32.xlu0 %v871, 1
        %v1569 = vpop.permute.xlu0 %1568
        %1570 = vrot.lane.b32.xlu0 %v874, 1
        %v1571 = vpop.permute.xlu0 %1570
        %1572 = vrot.lane.b32.xlu0 %v877, 1
        %v1573 = vpop.permute.xlu0 %1572
        %1574 = vrot.lane.b32.xlu0 %v880, 1
        %v1575 = vpop.permute.xlu0 %1574
        %1576 = vrot.lane.b32.xlu0 %v883, 1
        %v1577 = vpop.permute.xlu0 %1576
        %1578 = vrot.lane.b32.xlu0 %v886, 1
        %v1579 = vpop.permute.xlu0 %1578
        %1580 = vrot.lane.b32.xlu0 %v889, 1
        %v1581 = vpop.permute.xlu0 %1580
        %1582 = vrot.lane.b32.xlu0 %v892, 1
        %v1583 = vpop.permute.xlu0 %1582
        %1584 = vrot.lane.b32.xlu0 %v895, 1
        %v1585 = vpop.permute.xlu0 %1584
        %1586 = vrot.lane.b32.xlu0 %v898, 1
        %v1587 = vpop.permute.xlu0 %1586
        %1588 = vrot.lane.b32.xlu0 %v901, 1
        %v1589 = vpop.permute.xlu0 %1588
        %1590 = vrot.lane.b32.xlu0 %v904, 1
        %v1591 = vpop.permute.xlu0 %1590
        %1592 = vrot.lane.b32.xlu0 %v907, 1
        %v1593 = vpop.permute.xlu0 %1592
        %1594 = vrot.lane.b32.xlu0 %v910, 1
        %v1595 = vpop.permute.xlu0 %1594
        %1596 = vrot.lane.b32.xlu0 %v913, 1
        %v1597 = vpop.permute.xlu0 %1596
        %1598 = vrot.lane.b32.xlu0 %v916, 1
        %v1599 = vpop.permute.xlu0 %1598
        %1600 = vrot.lane.b32.xlu0 %v919, 1
        %v1601 = vpop.permute.xlu0 %1600
        %1602 = vrot.lane.b32.xlu0 %v922, 1
        %v1603 = vpop.permute.xlu0 %1602
        %1604 = vrot.lane.b32.xlu0 %v925, 1
        %v1605 = vpop.permute.xlu0 %1604
        %1606 = vrot.lane.b32.xlu0 %v928, 1
        %v1607 = vpop.permute.xlu0 %1606
        %1608 = vrot.lane.b32.xlu0 %v931, 1
        %v1609 = vpop.permute.xlu0 %1608
        %1610 = vrot.lane.b32.xlu0 %v934, 1
        %v1611 = vpop.permute.xlu0 %1610
        %1612 = vrot.lane.b32.xlu0 %v937, 1
        %v1613 = vpop.permute.xlu0 %1612
        %1614 = vrot.lane.b32.xlu0 %v940, 1
        %v1615 = vpop.permute.xlu0 %1614
        %1616 = vrot.lane.b32.xlu0 %v943, 1
        %v1617 = vpop.permute.xlu0 %1616
        %1618 = vrot.lane.b32.xlu0 %v946, 1
        %v1619 = vpop.permute.xlu0 %1618
        %1620 = vrot.lane.b32.xlu0 %v949, 1
        %v1621 = vpop.permute.xlu0 %1620
        %1622 = vrot.lane.b32.xlu0 %v952, 1
        %v1623 = vpop.permute.xlu0 %1622
        %1624 = vrot.lane.b32.xlu0 %v955, 1
        %v1625 = vpop.permute.xlu0 %1624
        %1626 = vrot.lane.b32.xlu0 %v958, 1
        %v1627 = vpop.permute.xlu0 %1626
        %1628 = vrot.lane.b32.xlu0 %v961, 1
        %v1629 = vpop.permute.xlu0 %1628
        %1630 = vrot.lane.b32.xlu0 %v964, 1
        %v1631 = vpop.permute.xlu0 %1630
        %1632 = vrot.lane.b32.xlu0 %v967, 1
        %v1633 = vpop.permute.xlu0 %1632
        %1634 = vrot.lane.b32.xlu0 %v970, 1
        %v1635 = vpop.permute.xlu0 %1634
        %1636 = vrot.lane.b32.xlu0 %v973, 1
        %v1637 = vpop.permute.xlu0 %1636
        %1638 = vrot.lane.b32.xlu0 %v976, 1
        %v1639 = vpop.permute.xlu0 %1638
        %1640 = vrot.lane.b32.xlu0 %v979, 1
        %v1641 = vpop.permute.xlu0 %1640
        %1642 = vrot.lane.b32.xlu0 %v982, 1
        %v1643 = vpop.permute.xlu0 %1642
        %1644 = vrot.lane.b32.xlu0 %v985, 1
        %v1645 = vpop.permute.xlu0 %1644
        %1646 = vrot.lane.b32.xlu0 %v988, 1
        %v1647 = vpop.permute.xlu0 %1646
        %1648 = vrot.lane.b32.xlu0 %v991, 1
        %v1649 = vpop.permute.xlu0 %1648
        %v1650 = vmul.f32 %v850, %v559
        %v1651 = vmul.f32 %v853, %v560
        %v1652 = vmul.f32 %v856, %v561
        %v1653 = vmul.f32 %v859, %v562
        %v1654 = vmul.f32 %v862, %v563
        %v1655 = vmul.f32 %v865, %v564
        %v1656 = vmul.f32 %v868, %v565
        %v1657 = vmul.f32 %v871, %v566
        %v1658 = vmul.f32 %v874, %v567
        %v1659 = vmul.f32 %v877, %v568
        %v1660 = vmul.f32 %v880, %v569
        %v1661 = vmul.f32 %v883, %v570
        %v1662 = vmul.f32 %v886, %v571
        %v1663 = vmul.f32 %v889, %v572
        %v1664 = vmul.f32 %v892, %v573
        %v1665 = vmul.f32 %v895, %v574
        %v1666 = vmul.f32 %v898, %v575
        %v1667 = vmul.f32 %v901, %v576
        %v1668 = vmul.f32 %v904, %v577
        %v1669 = vmul.f32 %v907, %v578
        %v1670 = vmul.f32 %v910, %v579
        %v1671 = vmul.f32 %v913, %v580
        %v1672 = vmul.f32 %v916, %v581
        %v1673 = vmul.f32 %v919, %v582
        %v1674 = vmul.f32 %v922, %v583
        %v1675 = vmul.f32 %v925, %v584
        %v1676 = vmul.f32 %v928, %v585
        %v1677 = vmul.f32 %v931, %v586
        %v1678 = vmul.f32 %v934, %v587
        %v1679 = vmul.f32 %v937, %v588
        %v1680 = vmul.f32 %v940, %v589
        %v1681 = vmul.f32 %v943, %v590
        %v1682 = vmul.f32 %v946, %v591
        %v1683 = vmul.f32 %v949, %v592
        %v1684 = vmul.f32 %v952, %v593
        %v1685 = vmul.f32 %v955, %v594
        %v1686 = vmul.f32 %v958, %v595
        %v1687 = vmul.f32 %v961, %v596
        %v1688 = vmul.f32 %v964, %v597
        %v1689 = vmul.f32 %v967, %v598
        %v1690 = vmul.f32 %v970, %v599
        %v1691 = vmul.f32 %v973, %v600
        %v1692 = vmul.f32 %v976, %v601
        %v1693 = vmul.f32 %v979, %v602
        %v1694 = vmul.f32 %v982, %v603
        %v1695 = vmul.f32 %v985, %v604
        %v1696 = vmul.f32 %v988, %v605
        %v1697 = vmul.f32 %v991, %v606
        %v1698 = vmul.f32 %v1459, %v720
        %v1699 = vmul.f32 %v1461, %v721
        %v1700 = vmul.f32 %v1463, %v722
        %v1701 = vmul.f32 %v1465, %v723
        %v1702 = vmul.f32 %v1467, %v724
        %v1703 = vmul.f32 %v1469, %v725
        %v1704 = vmul.f32 %v1471, %v726
        %v1705 = vmul.f32 %v1473, %v727
        %v1706 = vmul.f32 %v1475, %v728
        %v1707 = vmul.f32 %v1477, %v729
        %v1708 = vmul.f32 %v1479, %v730
        %v1709 = vmul.f32 %v1481, %v731
        %v1710 = vmul.f32 %v1483, %v732
        %v1711 = vmul.f32 %v1485, %v733
        %v1712 = vmul.f32 %v1487, %v734
        %v1713 = vmul.f32 %v1489, %v735
        %v1714 = vmul.f32 %v1491, %v736
        %v1715 = vmul.f32 %v1493, %v737
        %v1716 = vmul.f32 %v1495, %v738
        %v1717 = vmul.f32 %v1497, %v739
        %v1718 = vmul.f32 %v1499, %v740
        %v1719 = vmul.f32 %v1501, %v741
        %v1720 = vmul.f32 %v1503, %v742
        %v1721 = vmul.f32 %v1505, %v743
        %v1722 = vmul.f32 %v1507, %v744
        %v1723 = vmul.f32 %v1509, %v745
        %v1724 = vmul.f32 %v1511, %v746
        %v1725 = vmul.f32 %v1513, %v747
        %v1726 = vmul.f32 %v1515, %v748
        %v1727 = vmul.f32 %v1517, %v749
        %v1728 = vmul.f32 %v1519, %v750
        %v1729 = vmul.f32 %v1521, %v751
        %v1730 = vmul.f32 %v1523, %v752
        %v1731 = vmul.f32 %v1525, %v753
        %v1732 = vmul.f32 %v1527, %v754
        %v1733 = vmul.f32 %v1529, %v755
        %v1734 = vmul.f32 %v1531, %v756
        %v1735 = vmul.f32 %v1533, %v757
        %v1736 = vmul.f32 %v1535, %v758
        %v1737 = vmul.f32 %v1537, %v759
        %v1738 = vmul.f32 %v1539, %v760
        %v1739 = vmul.f32 %v1541, %v761
        %v1740 = vmul.f32 %v1543, %v762
        %v1741 = vmul.f32 %v1545, %v763
        %v1742 = vmul.f32 %v1547, %v764
        %v1743 = vmul.f32 %v1549, %v765
        %v1744 = vmul.f32 %v1551, %v766
        %v1745 = vmul.f32 %v1553, %v767
        %v1746 = vadd.f32 %v1650, %v1698
        %v1747 = vadd.f32 %v1651, %v1699
        %v1748 = vadd.f32 %v1652, %v1700
        %v1749 = vadd.f32 %v1653, %v1701
        %v1750 = vadd.f32 %v1654, %v1702
        %v1751 = vadd.f32 %v1655, %v1703
        %v1752 = vadd.f32 %v1656, %v1704
        %v1753 = vadd.f32 %v1657, %v1705
        %v1754 = vadd.f32 %v1658, %v1706
        %v1755 = vadd.f32 %v1659, %v1707
        %v1756 = vadd.f32 %v1660, %v1708
        %v1757 = vadd.f32 %v1661, %v1709
        %v1758 = vadd.f32 %v1662, %v1710
        %v1759 = vadd.f32 %v1663, %v1711
        %v1760 = vadd.f32 %v1664, %v1712
        %v1761 = vadd.f32 %v1665, %v1713
        %v1762 = vadd.f32 %v1666, %v1714
        %v1763 = vadd.f32 %v1667, %v1715
        %v1764 = vadd.f32 %v1668, %v1716
        %v1765 = vadd.f32 %v1669, %v1717
        %v1766 = vadd.f32 %v1670, %v1718
        %v1767 = vadd.f32 %v1671, %v1719
        %v1768 = vadd.f32 %v1672, %v1720
        %v1769 = vadd.f32 %v1673, %v1721
        %v1770 = vadd.f32 %v1674, %v1722
        %v1771 = vadd.f32 %v1675, %v1723
        %v1772 = vadd.f32 %v1676, %v1724
        %v1773 = vadd.f32 %v1677, %v1725
        %v1774 = vadd.f32 %v1678, %v1726
        %v1775 = vadd.f32 %v1679, %v1727
        %v1776 = vadd.f32 %v1680, %v1728
        %v1777 = vadd.f32 %v1681, %v1729
        %v1778 = vadd.f32 %v1682, %v1730
        %v1779 = vadd.f32 %v1683, %v1731
        %v1780 = vadd.f32 %v1684, %v1732
        %v1781 = vadd.f32 %v1685, %v1733
        %v1782 = vadd.f32 %v1686, %v1734
        %v1783 = vadd.f32 %v1687, %v1735
        %v1784 = vadd.f32 %v1688, %v1736
        %v1785 = vadd.f32 %v1689, %v1737
        %v1786 = vadd.f32 %v1690, %v1738
        %v1787 = vadd.f32 %v1691, %v1739
        %v1788 = vadd.f32 %v1692, %v1740
        %v1789 = vadd.f32 %v1693, %v1741
        %v1790 = vadd.f32 %v1694, %v1742
        %v1791 = vadd.f32 %v1695, %v1743
        %v1792 = vadd.f32 %v1696, %v1744
        %v1793 = vadd.f32 %v1697, %v1745
        %v1794 = vmul.f32 %v1555, %v768
        %v1795 = vmul.f32 %v1557, %v769
        %v1796 = vmul.f32 %v1559, %v770
        %v1797 = vmul.f32 %v1561, %v771
        %v1798 = vmul.f32 %v1563, %v772
        %v1799 = vmul.f32 %v1565, %v773
        %v1800 = vmul.f32 %v1567, %v774
        %v1801 = vmul.f32 %v1569, %v775
        %v1802 = vmul.f32 %v1571, %v776
        %v1803 = vmul.f32 %v1573, %v777
        %v1804 = vmul.f32 %v1575, %v778
        %v1805 = vmul.f32 %v1577, %v779
        %v1806 = vmul.f32 %v1579, %v780
        %v1807 = vmul.f32 %v1581, %v781
        %v1808 = vmul.f32 %v1583, %v782
        %v1809 = vmul.f32 %v1585, %v783
        %v1810 = vmul.f32 %v1587, %v784
        %v1811 = vmul.f32 %v1589, %v785
        %v1812 = vmul.f32 %v1591, %v786
        %v1813 = vmul.f32 %v1593, %v787
        %v1814 = vmul.f32 %v1595, %v788
        %v1815 = vmul.f32 %v1597, %v789
        %v1816 = vmul.f32 %v1599, %v790
        %v1817 = vmul.f32 %v1601, %v791
        %v1818 = vmul.f32 %v1603, %v792
        %v1819 = vmul.f32 %v1605, %v793
        %v1820 = vmul.f32 %v1607, %v794
        %v1821 = vmul.f32 %v1609, %v795
        %v1822 = vmul.f32 %v1611, %v796
        %v1823 = vmul.f32 %v1613, %v797
        %v1824 = vmul.f32 %v1615, %v798
        %v1825 = vmul.f32 %v1617, %v799
        %v1826 = vmul.f32 %v1619, %v800
        %v1827 = vmul.f32 %v1621, %v801
        %v1828 = vmul.f32 %v1623, %v802
        %v1829 = vmul.f32 %v1625, %v803
        %v1830 = vmul.f32 %v1627, %v804
        %v1831 = vmul.f32 %v1629, %v805
        %v1832 = vmul.f32 %v1631, %v806
        %v1833 = vmul.f32 %v1633, %v807
        %v1834 = vmul.f32 %v1635, %v808
        %v1835 = vmul.f32 %v1637, %v809
        %v1836 = vmul.f32 %v1639, %v810
        %v1837 = vmul.f32 %v1641, %v811
        %v1838 = vmul.f32 %v1643, %v812
        %v1839 = vmul.f32 %v1645, %v813
        %v1840 = vmul.f32 %v1647, %v814
        %v1841 = vmul.f32 %v1649, %v815
        %v1842 = vadd.f32 %v1746, %v1794
        %v1843 = vadd.f32 %v1747, %v1795
        %v1844 = vadd.f32 %v1748, %v1796
        %v1845 = vadd.f32 %v1749, %v1797
        %v1846 = vadd.f32 %v1750, %v1798
        %v1847 = vadd.f32 %v1751, %v1799
        %v1848 = vadd.f32 %v1752, %v1800
        %v1849 = vadd.f32 %v1753, %v1801
        %v1850 = vadd.f32 %v1754, %v1802
        %v1851 = vadd.f32 %v1755, %v1803
        %v1852 = vadd.f32 %v1756, %v1804
        %v1853 = vadd.f32 %v1757, %v1805
        %v1854 = vadd.f32 %v1758, %v1806
        %v1855 = vadd.f32 %v1759, %v1807
        %v1856 = vadd.f32 %v1760, %v1808
        %v1857 = vadd.f32 %v1761, %v1809
        %v1858 = vadd.f32 %v1762, %v1810
        %v1859 = vadd.f32 %v1763, %v1811
        %v1860 = vadd.f32 %v1764, %v1812
        %v1861 = vadd.f32 %v1765, %v1813
        %v1862 = vadd.f32 %v1766, %v1814
        %v1863 = vadd.f32 %v1767, %v1815
        %v1864 = vadd.f32 %v1768, %v1816
        %v1865 = vadd.f32 %v1769, %v1817
        %v1866 = vadd.f32 %v1770, %v1818
        %v1867 = vadd.f32 %v1771, %v1819
        %v1868 = vadd.f32 %v1772, %v1820
        %v1869 = vadd.f32 %v1773, %v1821
        %v1870 = vadd.f32 %v1774, %v1822
        %v1871 = vadd.f32 %v1775, %v1823
        %v1872 = vadd.f32 %v1776, %v1824
        %v1873 = vadd.f32 %v1777, %v1825
        %v1874 = vadd.f32 %v1778, %v1826
        %v1875 = vadd.f32 %v1779, %v1827
        %v1876 = vadd.f32 %v1780, %v1828
        %v1877 = vadd.f32 %v1781, %v1829
        %v1878 = vadd.f32 %v1782, %v1830
        %v1879 = vadd.f32 %v1783, %v1831
        %v1880 = vadd.f32 %v1784, %v1832
        %v1881 = vadd.f32 %v1785, %v1833
        %v1882 = vadd.f32 %v1786, %v1834
        %v1883 = vadd.f32 %v1787, %v1835
        %v1884 = vadd.f32 %v1788, %v1836
        %v1885 = vadd.f32 %v1789, %v1837
        %v1886 = vadd.f32 %v1790, %v1838
        %v1887 = vadd.f32 %v1791, %v1839
        %v1888 = vadd.f32 %v1792, %v1840
        %v1889 = vadd.f32 %v1793, %v1841
        %1890 = vrot.lane.b32.xlu0 %v1027, 127
        %v1891 = vpop.permute.xlu0 %1890
        %1892 = vrot.lane.b32.xlu0 %v1030, 127
        %v1893 = vpop.permute.xlu0 %1892
        %1894 = vrot.lane.b32.xlu0 %v1033, 127
        %v1895 = vpop.permute.xlu0 %1894
        %1896 = vrot.lane.b32.xlu0 %v1036, 127
        %v1897 = vpop.permute.xlu0 %1896
        %1898 = vrot.lane.b32.xlu0 %v1039, 127
        %v1899 = vpop.permute.xlu0 %1898
        %1900 = vrot.lane.b32.xlu0 %v1042, 127
        %v1901 = vpop.permute.xlu0 %1900
        %1902 = vrot.lane.b32.xlu0 %v1045, 127
        %v1903 = vpop.permute.xlu0 %1902
        %1904 = vrot.lane.b32.xlu0 %v1048, 127
        %v1905 = vpop.permute.xlu0 %1904
        %1906 = vrot.lane.b32.xlu0 %v1051, 127
        %v1907 = vpop.permute.xlu0 %1906
        %1908 = vrot.lane.b32.xlu0 %v1054, 127
        %v1909 = vpop.permute.xlu0 %1908
        %1910 = vrot.lane.b32.xlu0 %v1057, 127
        %v1911 = vpop.permute.xlu0 %1910
        %1912 = vrot.lane.b32.xlu0 %v1060, 127
        %v1913 = vpop.permute.xlu0 %1912
        %1914 = vrot.lane.b32.xlu0 %v1063, 127
        %v1915 = vpop.permute.xlu0 %1914
        %1916 = vrot.lane.b32.xlu0 %v1066, 127
        %v1917 = vpop.permute.xlu0 %1916
        %1918 = vrot.lane.b32.xlu0 %v1069, 127
        %v1919 = vpop.permute.xlu0 %1918
        %1920 = vrot.lane.b32.xlu0 %v1072, 127
        %v1921 = vpop.permute.xlu0 %1920
        %1922 = vrot.lane.b32.xlu0 %v1075, 127
        %v1923 = vpop.permute.xlu0 %1922
        %1924 = vrot.lane.b32.xlu0 %v1078, 127
        %v1925 = vpop.permute.xlu0 %1924
        %1926 = vrot.lane.b32.xlu0 %v1081, 127
        %v1927 = vpop.permute.xlu0 %1926
        %1928 = vrot.lane.b32.xlu0 %v1084, 127
        %v1929 = vpop.permute.xlu0 %1928
        %1930 = vrot.lane.b32.xlu0 %v1087, 127
        %v1931 = vpop.permute.xlu0 %1930
        %1932 = vrot.lane.b32.xlu0 %v1090, 127
        %v1933 = vpop.permute.xlu0 %1932
        %1934 = vrot.lane.b32.xlu0 %v1093, 127
        %v1935 = vpop.permute.xlu0 %1934
        %1936 = vrot.lane.b32.xlu0 %v1096, 127
        %v1937 = vpop.permute.xlu0 %1936
        %1938 = vrot.lane.b32.xlu0 %v1099, 127
        %v1939 = vpop.permute.xlu0 %1938
        %1940 = vrot.lane.b32.xlu0 %v1102, 127
        %v1941 = vpop.permute.xlu0 %1940
        %1942 = vrot.lane.b32.xlu0 %v1105, 127
        %v1943 = vpop.permute.xlu0 %1942
        %1944 = vrot.lane.b32.xlu0 %v1108, 127
        %v1945 = vpop.permute.xlu0 %1944
        %1946 = vrot.lane.b32.xlu0 %v1111, 127
        %v1947 = vpop.permute.xlu0 %1946
        %1948 = vrot.lane.b32.xlu0 %v1114, 127
        %v1949 = vpop.permute.xlu0 %1948
        %1950 = vrot.lane.b32.xlu0 %v1117, 127
        %v1951 = vpop.permute.xlu0 %1950
        %1952 = vrot.lane.b32.xlu0 %v1120, 127
        %v1953 = vpop.permute.xlu0 %1952
        %1954 = vrot.lane.b32.xlu0 %v1123, 127
        %v1955 = vpop.permute.xlu0 %1954
        %1956 = vrot.lane.b32.xlu0 %v1126, 127
        %v1957 = vpop.permute.xlu0 %1956
        %1958 = vrot.lane.b32.xlu0 %v1129, 127
        %v1959 = vpop.permute.xlu0 %1958
        %1960 = vrot.lane.b32.xlu0 %v1132, 127
        %v1961 = vpop.permute.xlu0 %1960
        %1962 = vrot.lane.b32.xlu0 %v1135, 127
        %v1963 = vpop.permute.xlu0 %1962
        %1964 = vrot.lane.b32.xlu0 %v1138, 127
        %v1965 = vpop.permute.xlu0 %1964
        %1966 = vrot.lane.b32.xlu0 %v1141, 127
        %v1967 = vpop.permute.xlu0 %1966
        %1968 = vrot.lane.b32.xlu0 %v1144, 127
        %v1969 = vpop.permute.xlu0 %1968
        %1970 = vrot.lane.b32.xlu0 %v1147, 127
        %v1971 = vpop.permute.xlu0 %1970
        %1972 = vrot.lane.b32.xlu0 %v1150, 127
        %v1973 = vpop.permute.xlu0 %1972
        %1974 = vrot.lane.b32.xlu0 %v1153, 127
        %v1975 = vpop.permute.xlu0 %1974
        %1976 = vrot.lane.b32.xlu0 %v1156, 127
        %v1977 = vpop.permute.xlu0 %1976
        %1978 = vrot.lane.b32.xlu0 %v1159, 127
        %v1979 = vpop.permute.xlu0 %1978
        %1980 = vrot.lane.b32.xlu0 %v1162, 127
        %v1981 = vpop.permute.xlu0 %1980
        %1982 = vrot.lane.b32.xlu0 %v1165, 127
        %v1983 = vpop.permute.xlu0 %1982
        %1984 = vrot.lane.b32.xlu0 %v1168, 127
        %v1985 = vpop.permute.xlu0 %1984
        %1986 = vrot.lane.b32.xlu0 %v1027, 1
        %v1987 = vpop.permute.xlu0 %1986
        %1988 = vrot.lane.b32.xlu0 %v1030, 1
        %v1989 = vpop.permute.xlu0 %1988
        %1990 = vrot.lane.b32.xlu0 %v1033, 1
        %v1991 = vpop.permute.xlu0 %1990
        %1992 = vrot.lane.b32.xlu0 %v1036, 1
        %v1993 = vpop.permute.xlu0 %1992
        %1994 = vrot.lane.b32.xlu0 %v1039, 1
        %v1995 = vpop.permute.xlu0 %1994
        %1996 = vrot.lane.b32.xlu0 %v1042, 1
        %v1997 = vpop.permute.xlu0 %1996
        %1998 = vrot.lane.b32.xlu0 %v1045, 1
        %v1999 = vpop.permute.xlu0 %1998
        %2000 = vrot.lane.b32.xlu0 %v1048, 1
        %v2001 = vpop.permute.xlu0 %2000
        %2002 = vrot.lane.b32.xlu0 %v1051, 1
        %v2003 = vpop.permute.xlu0 %2002
        %2004 = vrot.lane.b32.xlu0 %v1054, 1
        %v2005 = vpop.permute.xlu0 %2004
        %2006 = vrot.lane.b32.xlu0 %v1057, 1
        %v2007 = vpop.permute.xlu0 %2006
        %2008 = vrot.lane.b32.xlu0 %v1060, 1
        %v2009 = vpop.permute.xlu0 %2008
        %2010 = vrot.lane.b32.xlu0 %v1063, 1
        %v2011 = vpop.permute.xlu0 %2010
        %2012 = vrot.lane.b32.xlu0 %v1066, 1
        %v2013 = vpop.permute.xlu0 %2012
        %2014 = vrot.lane.b32.xlu0 %v1069, 1
        %v2015 = vpop.permute.xlu0 %2014
        %2016 = vrot.lane.b32.xlu0 %v1072, 1
        %v2017 = vpop.permute.xlu0 %2016
        %2018 = vrot.lane.b32.xlu0 %v1075, 1
        %v2019 = vpop.permute.xlu0 %2018
        %2020 = vrot.lane.b32.xlu0 %v1078, 1
        %v2021 = vpop.permute.xlu0 %2020
        %2022 = vrot.lane.b32.xlu0 %v1081, 1
        %v2023 = vpop.permute.xlu0 %2022
        %2024 = vrot.lane.b32.xlu0 %v1084, 1
        %v2025 = vpop.permute.xlu0 %2024
        %2026 = vrot.lane.b32.xlu0 %v1087, 1
        %v2027 = vpop.permute.xlu0 %2026
        %2028 = vrot.lane.b32.xlu0 %v1090, 1
        %v2029 = vpop.permute.xlu0 %2028
        %2030 = vrot.lane.b32.xlu0 %v1093, 1
        %v2031 = vpop.permute.xlu0 %2030
        %2032 = vrot.lane.b32.xlu0 %v1096, 1
        %v2033 = vpop.permute.xlu0 %2032
        %2034 = vrot.lane.b32.xlu0 %v1099, 1
        %v2035 = vpop.permute.xlu0 %2034
        %2036 = vrot.lane.b32.xlu0 %v1102, 1
        %v2037 = vpop.permute.xlu0 %2036
        %2038 = vrot.lane.b32.xlu0 %v1105, 1
        %v2039 = vpop.permute.xlu0 %2038
        %2040 = vrot.lane.b32.xlu0 %v1108, 1
        %v2041 = vpop.permute.xlu0 %2040
        %2042 = vrot.lane.b32.xlu0 %v1111, 1
        %v2043 = vpop.permute.xlu0 %2042
        %2044 = vrot.lane.b32.xlu0 %v1114, 1
        %v2045 = vpop.permute.xlu0 %2044
        %2046 = vrot.lane.b32.xlu0 %v1117, 1
        %v2047 = vpop.permute.xlu0 %2046
        %2048 = vrot.lane.b32.xlu0 %v1120, 1
        %v2049 = vpop.permute.xlu0 %2048
        %2050 = vrot.lane.b32.xlu0 %v1123, 1
        %v2051 = vpop.permute.xlu0 %2050
        %2052 = vrot.lane.b32.xlu0 %v1126, 1
        %v2053 = vpop.permute.xlu0 %2052
        %2054 = vrot.lane.b32.xlu0 %v1129, 1
        %v2055 = vpop.permute.xlu0 %2054
        %2056 = vrot.lane.b32.xlu0 %v1132, 1
        %v2057 = vpop.permute.xlu0 %2056
        %2058 = vrot.lane.b32.xlu0 %v1135, 1
        %v2059 = vpop.permute.xlu0 %2058
        %2060 = vrot.lane.b32.xlu0 %v1138, 1
        %v2061 = vpop.permute.xlu0 %2060
        %2062 = vrot.lane.b32.xlu0 %v1141, 1
        %v2063 = vpop.permute.xlu0 %2062
        %2064 = vrot.lane.b32.xlu0 %v1144, 1
        %v2065 = vpop.permute.xlu0 %2064
        %2066 = vrot.lane.b32.xlu0 %v1147, 1
        %v2067 = vpop.permute.xlu0 %2066
        %2068 = vrot.lane.b32.xlu0 %v1150, 1
        %v2069 = vpop.permute.xlu0 %2068
        %2070 = vrot.lane.b32.xlu0 %v1153, 1
        %v2071 = vpop.permute.xlu0 %2070
        %2072 = vrot.lane.b32.xlu0 %v1156, 1
        %v2073 = vpop.permute.xlu0 %2072
        %2074 = vrot.lane.b32.xlu0 %v1159, 1
        %v2075 = vpop.permute.xlu0 %2074
        %2076 = vrot.lane.b32.xlu0 %v1162, 1
        %v2077 = vpop.permute.xlu0 %2076
        %2078 = vrot.lane.b32.xlu0 %v1165, 1
        %v2079 = vpop.permute.xlu0 %2078
        %2080 = vrot.lane.b32.xlu0 %v1168, 1
        %v2081 = vpop.permute.xlu0 %2080
        %v2082 = vmul.f32 %v1027, %v559
        %v2083 = vmul.f32 %v1030, %v560
        %v2084 = vmul.f32 %v1033, %v561
        %v2085 = vmul.f32 %v1036, %v562
        %v2086 = vmul.f32 %v1039, %v563
        %v2087 = vmul.f32 %v1042, %v564
        %v2088 = vmul.f32 %v1045, %v565
        %v2089 = vmul.f32 %v1048, %v566
        %v2090 = vmul.f32 %v1051, %v567
        %v2091 = vmul.f32 %v1054, %v568
        %v2092 = vmul.f32 %v1057, %v569
        %v2093 = vmul.f32 %v1060, %v570
        %v2094 = vmul.f32 %v1063, %v571
        %v2095 = vmul.f32 %v1066, %v572
        %v2096 = vmul.f32 %v1069, %v573
        %v2097 = vmul.f32 %v1072, %v574
        %v2098 = vmul.f32 %v1075, %v575
        %v2099 = vmul.f32 %v1078, %v576
        %v2100 = vmul.f32 %v1081, %v577
        %v2101 = vmul.f32 %v1084, %v578
        %v2102 = vmul.f32 %v1087, %v579
        %v2103 = vmul.f32 %v1090, %v580
        %v2104 = vmul.f32 %v1093, %v581
        %v2105 = vmul.f32 %v1096, %v582
        %v2106 = vmul.f32 %v1099, %v583
        %v2107 = vmul.f32 %v1102, %v584
        %v2108 = vmul.f32 %v1105, %v585
        %v2109 = vmul.f32 %v1108, %v586
        %v2110 = vmul.f32 %v1111, %v587
        %v2111 = vmul.f32 %v1114, %v588
        %v2112 = vmul.f32 %v1117, %v589
        %v2113 = vmul.f32 %v1120, %v590
        %v2114 = vmul.f32 %v1123, %v591
        %v2115 = vmul.f32 %v1126, %v592
        %v2116 = vmul.f32 %v1129, %v593
        %v2117 = vmul.f32 %v1132, %v594
        %v2118 = vmul.f32 %v1135, %v595
        %v2119 = vmul.f32 %v1138, %v596
        %v2120 = vmul.f32 %v1141, %v597
        %v2121 = vmul.f32 %v1144, %v598
        %v2122 = vmul.f32 %v1147, %v599
        %v2123 = vmul.f32 %v1150, %v600
        %v2124 = vmul.f32 %v1153, %v601
        %v2125 = vmul.f32 %v1156, %v602
        %v2126 = vmul.f32 %v1159, %v603
        %v2127 = vmul.f32 %v1162, %v604
        %v2128 = vmul.f32 %v1165, %v605
        %v2129 = vmul.f32 %v1168, %v606
        %v2130 = vmul.f32 %v1891, %v720
        %v2131 = vmul.f32 %v1893, %v721
        %v2132 = vmul.f32 %v1895, %v722
        %v2133 = vmul.f32 %v1897, %v723
        %v2134 = vmul.f32 %v1899, %v724
        %v2135 = vmul.f32 %v1901, %v725
        %v2136 = vmul.f32 %v1903, %v726
        %v2137 = vmul.f32 %v1905, %v727
        %v2138 = vmul.f32 %v1907, %v728
        %v2139 = vmul.f32 %v1909, %v729
        %v2140 = vmul.f32 %v1911, %v730
        %v2141 = vmul.f32 %v1913, %v731
        %v2142 = vmul.f32 %v1915, %v732
        %v2143 = vmul.f32 %v1917, %v733
        %v2144 = vmul.f32 %v1919, %v734
        %v2145 = vmul.f32 %v1921, %v735
        %v2146 = vmul.f32 %v1923, %v736
        %v2147 = vmul.f32 %v1925, %v737
        %v2148 = vmul.f32 %v1927, %v738
        %v2149 = vmul.f32 %v1929, %v739
        %v2150 = vmul.f32 %v1931, %v740
        %v2151 = vmul.f32 %v1933, %v741
        %v2152 = vmul.f32 %v1935, %v742
        %v2153 = vmul.f32 %v1937, %v743
        %v2154 = vmul.f32 %v1939, %v744
        %v2155 = vmul.f32 %v1941, %v745
        %v2156 = vmul.f32 %v1943, %v746
        %v2157 = vmul.f32 %v1945, %v747
        %v2158 = vmul.f32 %v1947, %v748
        %v2159 = vmul.f32 %v1949, %v749
        %v2160 = vmul.f32 %v1951, %v750
        %v2161 = vmul.f32 %v1953, %v751
        %v2162 = vmul.f32 %v1955, %v752
        %v2163 = vmul.f32 %v1957, %v753
        %v2164 = vmul.f32 %v1959, %v754
        %v2165 = vmul.f32 %v1961, %v755
        %v2166 = vmul.f32 %v1963, %v756
        %v2167 = vmul.f32 %v1965, %v757
        %v2168 = vmul.f32 %v1967, %v758
        %v2169 = vmul.f32 %v1969, %v759
        %v2170 = vmul.f32 %v1971, %v760
        %v2171 = vmul.f32 %v1973, %v761
        %v2172 = vmul.f32 %v1975, %v762
        %v2173 = vmul.f32 %v1977, %v763
        %v2174 = vmul.f32 %v1979, %v764
        %v2175 = vmul.f32 %v1981, %v765
        %v2176 = vmul.f32 %v1983, %v766
        %v2177 = vmul.f32 %v1985, %v767
        %v2178 = vadd.f32 %v2082, %v2130
        %v2179 = vadd.f32 %v2083, %v2131
        %v2180 = vadd.f32 %v2084, %v2132
        %v2181 = vadd.f32 %v2085, %v2133
        %v2182 = vadd.f32 %v2086, %v2134
        %v2183 = vadd.f32 %v2087, %v2135
        %v2184 = vadd.f32 %v2088, %v2136
        %v2185 = vadd.f32 %v2089, %v2137
        %v2186 = vadd.f32 %v2090, %v2138
        %v2187 = vadd.f32 %v2091, %v2139
        %v2188 = vadd.f32 %v2092, %v2140
        %v2189 = vadd.f32 %v2093, %v2141
        %v2190 = vadd.f32 %v2094, %v2142
        %v2191 = vadd.f32 %v2095, %v2143
        %v2192 = vadd.f32 %v2096, %v2144
        %v2193 = vadd.f32 %v2097, %v2145
        %v2194 = vadd.f32 %v2098, %v2146
        %v2195 = vadd.f32 %v2099, %v2147
        %v2196 = vadd.f32 %v2100, %v2148
        %v2197 = vadd.f32 %v2101, %v2149
        %v2198 = vadd.f32 %v2102, %v2150
        %v2199 = vadd.f32 %v2103, %v2151
        %v2200 = vadd.f32 %v2104, %v2152
        %v2201 = vadd.f32 %v2105, %v2153
        %v2202 = vadd.f32 %v2106, %v2154
        %v2203 = vadd.f32 %v2107, %v2155
        %v2204 = vadd.f32 %v2108, %v2156
        %v2205 = vadd.f32 %v2109, %v2157
        %v2206 = vadd.f32 %v2110, %v2158
        %v2207 = vadd.f32 %v2111, %v2159
        %v2208 = vadd.f32 %v2112, %v2160
        %v2209 = vadd.f32 %v2113, %v2161
        %v2210 = vadd.f32 %v2114, %v2162
        %v2211 = vadd.f32 %v2115, %v2163
        %v2212 = vadd.f32 %v2116, %v2164
        %v2213 = vadd.f32 %v2117, %v2165
        %v2214 = vadd.f32 %v2118, %v2166
        %v2215 = vadd.f32 %v2119, %v2167
        %v2216 = vadd.f32 %v2120, %v2168
        %v2217 = vadd.f32 %v2121, %v2169
        %v2218 = vadd.f32 %v2122, %v2170
        %v2219 = vadd.f32 %v2123, %v2171
        %v2220 = vadd.f32 %v2124, %v2172
        %v2221 = vadd.f32 %v2125, %v2173
        %v2222 = vadd.f32 %v2126, %v2174
        %v2223 = vadd.f32 %v2127, %v2175
        %v2224 = vadd.f32 %v2128, %v2176
        %v2225 = vadd.f32 %v2129, %v2177
        %v2226 = vmul.f32 %v1987, %v768
        %v2227 = vmul.f32 %v1989, %v769
        %v2228 = vmul.f32 %v1991, %v770
        %v2229 = vmul.f32 %v1993, %v771
        %v2230 = vmul.f32 %v1995, %v772
        %v2231 = vmul.f32 %v1997, %v773
        %v2232 = vmul.f32 %v1999, %v774
        %v2233 = vmul.f32 %v2001, %v775
        %v2234 = vmul.f32 %v2003, %v776
        %v2235 = vmul.f32 %v2005, %v777
        %v2236 = vmul.f32 %v2007, %v778
        %v2237 = vmul.f32 %v2009, %v779
        %v2238 = vmul.f32 %v2011, %v780
        %v2239 = vmul.f32 %v2013, %v781
        %v2240 = vmul.f32 %v2015, %v782
        %v2241 = vmul.f32 %v2017, %v783
        %v2242 = vmul.f32 %v2019, %v784
        %v2243 = vmul.f32 %v2021, %v785
        %v2244 = vmul.f32 %v2023, %v786
        %v2245 = vmul.f32 %v2025, %v787
        %v2246 = vmul.f32 %v2027, %v788
        %v2247 = vmul.f32 %v2029, %v789
        %v2248 = vmul.f32 %v2031, %v790
        %v2249 = vmul.f32 %v2033, %v791
        %v2250 = vmul.f32 %v2035, %v792
        %v2251 = vmul.f32 %v2037, %v793
        %v2252 = vmul.f32 %v2039, %v794
        %v2253 = vmul.f32 %v2041, %v795
        %v2254 = vmul.f32 %v2043, %v796
        %v2255 = vmul.f32 %v2045, %v797
        %v2256 = vmul.f32 %v2047, %v798
        %v2257 = vmul.f32 %v2049, %v799
        %v2258 = vmul.f32 %v2051, %v800
        %v2259 = vmul.f32 %v2053, %v801
        %v2260 = vmul.f32 %v2055, %v802
        %v2261 = vmul.f32 %v2057, %v803
        %v2262 = vmul.f32 %v2059, %v804
        %v2263 = vmul.f32 %v2061, %v805
        %v2264 = vmul.f32 %v2063, %v806
        %v2265 = vmul.f32 %v2065, %v807
        %v2266 = vmul.f32 %v2067, %v808
        %v2267 = vmul.f32 %v2069, %v809
        %v2268 = vmul.f32 %v2071, %v810
        %v2269 = vmul.f32 %v2073, %v811
        %v2270 = vmul.f32 %v2075, %v812
        %v2271 = vmul.f32 %v2077, %v813
        %v2272 = vmul.f32 %v2079, %v814
        %v2273 = vmul.f32 %v2081, %v815
        %v2274 = vadd.f32 %v2178, %v2226
        %v2275 = vadd.f32 %v2179, %v2227
        %v2276 = vadd.f32 %v2180, %v2228
        %v2277 = vadd.f32 %v2181, %v2229
        %v2278 = vadd.f32 %v2182, %v2230
        %v2279 = vadd.f32 %v2183, %v2231
        %v2280 = vadd.f32 %v2184, %v2232
        %v2281 = vadd.f32 %v2185, %v2233
        %v2282 = vadd.f32 %v2186, %v2234
        %v2283 = vadd.f32 %v2187, %v2235
        %v2284 = vadd.f32 %v2188, %v2236
        %v2285 = vadd.f32 %v2189, %v2237
        %v2286 = vadd.f32 %v2190, %v2238
        %v2287 = vadd.f32 %v2191, %v2239
        %v2288 = vadd.f32 %v2192, %v2240
        %v2289 = vadd.f32 %v2193, %v2241
        %v2290 = vadd.f32 %v2194, %v2242
        %v2291 = vadd.f32 %v2195, %v2243
        %v2292 = vadd.f32 %v2196, %v2244
        %v2293 = vadd.f32 %v2197, %v2245
        %v2294 = vadd.f32 %v2198, %v2246
        %v2295 = vadd.f32 %v2199, %v2247
        %v2296 = vadd.f32 %v2200, %v2248
        %v2297 = vadd.f32 %v2201, %v2249
        %v2298 = vadd.f32 %v2202, %v2250
        %v2299 = vadd.f32 %v2203, %v2251
        %v2300 = vadd.f32 %v2204, %v2252
        %v2301 = vadd.f32 %v2205, %v2253
        %v2302 = vadd.f32 %v2206, %v2254
        %v2303 = vadd.f32 %v2207, %v2255
        %v2304 = vadd.f32 %v2208, %v2256
        %v2305 = vadd.f32 %v2209, %v2257
        %v2306 = vadd.f32 %v2210, %v2258
        %v2307 = vadd.f32 %v2211, %v2259
        %v2308 = vadd.f32 %v2212, %v2260
        %v2309 = vadd.f32 %v2213, %v2261
        %v2310 = vadd.f32 %v2214, %v2262
        %v2311 = vadd.f32 %v2215, %v2263
        %v2312 = vadd.f32 %v2216, %v2264
        %v2313 = vadd.f32 %v2217, %v2265
        %v2314 = vadd.f32 %v2218, %v2266
        %v2315 = vadd.f32 %v2219, %v2267
        %v2316 = vadd.f32 %v2220, %v2268
        %v2317 = vadd.f32 %v2221, %v2269
        %v2318 = vadd.f32 %v2222, %v2270
        %v2319 = vadd.f32 %v2223, %v2271
        %v2320 = vadd.f32 %v2224, %v2272
        %v2321 = vadd.f32 %v2225, %v2273
        %v2322 = vld [vmem:[%s477] sm:$0xff]
        %v2323 = vld [vmem:[%s477 + $0x8] sm:$0xff]
        %v2324 = vld [vmem:[%s477 + $0x10] sm:$0xff]
        %v2325 = vld [vmem:[%s477 + $0x18] sm:$0xff]
        %v2326 = vld [vmem:[%s477 + $0x20] sm:$0xff]
        %v2327 = vld [vmem:[%s477 + $0x28] sm:$0xff]
        %v2328 = vld [vmem:[%s477 + $0x30] sm:$0xff]
        %v2329 = vld [vmem:[%s477 + $0x38] sm:$0xff]
        %v2330 = vld [vmem:[%s477 + $0x40] sm:$0xff]
        %v2331 = vld [vmem:[%s477 + $0x48] sm:$0xff]
        %v2332 = vld [vmem:[%s477 + $0x50] sm:$0xff]
        %v2333 = vld [vmem:[%s477 + $0x58] sm:$0xff]
        %v2334 = vld [vmem:[%s477 + $0x60] sm:$0xff]
        %v2335 = vld [vmem:[%s477 + $0x68] sm:$0xff]
        %v2336 = vld [vmem:[%s477 + $0x70] sm:$0xff]
        %v2337 = vld [vmem:[%s477 + $0x78] sm:$0xff]
        %2338 = vxpose.xlu0.b32.start [1/16] %v1842, 128
        %2339 = vxpose.xlu0.b32.cont [2/16] %v1843, 128
        %2340 = vxpose.xlu0.b32.cont [3/16] %v1844, 128
        %2341 = vxpose.xlu0.b32.cont [4/16] %v1845, 128
        %2342 = vxpose.xlu0.b32.cont [5/16] %v1846, 128
        %2343 = vxpose.xlu0.b32.cont [6/16] %v1847, 128
        %2344 = vxpose.xlu0.b32.cont [7/16] %v1848, 128
        %2345 = vxpose.xlu0.b32.cont [8/16] %v1849, 128
        %2346 = vxpose.xlu0.b32.cont [9/16] %v1850, 128
        %2347 = vxpose.xlu0.b32.cont [10/16] %v1851, 128
        %2348 = vxpose.xlu0.b32.cont [11/16] %v1852, 128
        %2349 = vxpose.xlu0.b32.cont [12/16] %v1853, 128
        %2350 = vxpose.xlu0.b32.cont [13/16] %v1854, 128
        %2351 = vxpose.xlu0.b32.cont [14/16] %v1855, 128
        %2352 = vxpose.xlu0.b32.cont [15/16] %v1856, 128
        %2353 = vxpose.xlu0.b32.end [16/16] %v1857, 128
        %v2354 = vpop.trf.xlu0
        %v2355 = vpop.trf.xlu0
        %v2356 = vpop.trf.xlu0
        %v2357 = vpop.trf.xlu0
        %v2358 = vpop.trf.xlu0
        %v2359 = vpop.trf.xlu0
        %v2360 = vpop.trf.xlu0
        %v2361 = vpop.trf.xlu0
        %v2362 = vpop.trf.xlu0
        %v2363 = vpop.trf.xlu0
        %v2364 = vpop.trf.xlu0
        %v2365 = vpop.trf.xlu0
        %v2366 = vpop.trf.xlu0
        %v2367 = vpop.trf.xlu0
        %v2368 = vpop.trf.xlu0
        %v2369 = vpop.trf.xlu0
        %2370 = vxpose.xlu0.b32.start [1/16] %v1858, 128
        %2371 = vxpose.xlu0.b32.cont [2/16] %v1859, 128
        %2372 = vxpose.xlu0.b32.cont [3/16] %v1860, 128
        %2373 = vxpose.xlu0.b32.cont [4/16] %v1861, 128
        %2374 = vxpose.xlu0.b32.cont [5/16] %v1862, 128
        %2375 = vxpose.xlu0.b32.cont [6/16] %v1863, 128
        %2376 = vxpose.xlu0.b32.cont [7/16] %v1864, 128
        %2377 = vxpose.xlu0.b32.cont [8/16] %v1865, 128
        %2378 = vxpose.xlu0.b32.cont [9/16] %v1866, 128
        %2379 = vxpose.xlu0.b32.cont [10/16] %v1867, 128
        %2380 = vxpose.xlu0.b32.cont [11/16] %v1868, 128
        %2381 = vxpose.xlu0.b32.cont [12/16] %v1869, 128
        %2382 = vxpose.xlu0.b32.cont [13/16] %v1870, 128
        %2383 = vxpose.xlu0.b32.cont [14/16] %v1871, 128
        %2384 = vxpose.xlu0.b32.cont [15/16] %v1872, 128
        %2385 = vxpose.xlu0.b32.end [16/16] %v1873, 128
        %v2386 = vpop.trf.xlu0
        %v2387 = vpop.trf.xlu0
        %v2388 = vpop.trf.xlu0
        %v2389 = vpop.trf.xlu0
        %v2390 = vpop.trf.xlu0
        %v2391 = vpop.trf.xlu0
        %v2392 = vpop.trf.xlu0
        %v2393 = vpop.trf.xlu0
        %v2394 = vpop.trf.xlu0
        %v2395 = vpop.trf.xlu0
        %v2396 = vpop.trf.xlu0
        %v2397 = vpop.trf.xlu0
        %v2398 = vpop.trf.xlu0
        %v2399 = vpop.trf.xlu0
        %v2400 = vpop.trf.xlu0
        %v2401 = vpop.trf.xlu0
        %2402 = vxpose.xlu0.b32.start [1/16] %v1874, 128
        %2403 = vxpose.xlu0.b32.cont [2/16] %v1875, 128
        %2404 = vxpose.xlu0.b32.cont [3/16] %v1876, 128
        %2405 = vxpose.xlu0.b32.cont [4/16] %v1877, 128
        %2406 = vxpose.xlu0.b32.cont [5/16] %v1878, 128
        %2407 = vxpose.xlu0.b32.cont [6/16] %v1879, 128
        %2408 = vxpose.xlu0.b32.cont [7/16] %v1880, 128
        %2409 = vxpose.xlu0.b32.cont [8/16] %v1881, 128
        %2410 = vxpose.xlu0.b32.cont [9/16] %v1882, 128
        %2411 = vxpose.xlu0.b32.cont [10/16] %v1883, 128
        %2412 = vxpose.xlu0.b32.cont [11/16] %v1884, 128
        %2413 = vxpose.xlu0.b32.cont [12/16] %v1885, 128
        %2414 = vxpose.xlu0.b32.cont [13/16] %v1886, 128
        %2415 = vxpose.xlu0.b32.cont [14/16] %v1887, 128
        %2416 = vxpose.xlu0.b32.cont [15/16] %v1888, 128
        %2417 = vxpose.xlu0.b32.end [16/16] %v1889, 128
        %v2418 = vpop.trf.xlu0
        %v2419 = vpop.trf.xlu0
        %v2420 = vpop.trf.xlu0
        %v2421 = vpop.trf.xlu0
        %v2422 = vpop.trf.xlu0
        %v2423 = vpop.trf.xlu0
        %v2424 = vpop.trf.xlu0
        %v2425 = vpop.trf.xlu0
        %v2426 = vpop.trf.xlu0
        %v2427 = vpop.trf.xlu0
        %v2428 = vpop.trf.xlu0
        %v2429 = vpop.trf.xlu0
        %v2430 = vpop.trf.xlu0
        %v2431 = vpop.trf.xlu0
        %v2432 = vpop.trf.xlu0
        %v2433 = vpop.trf.xlu0
        %2434 = vmatpush.msra.mxu0 %v2289
        %2435 = vmatpush.msra.mxu0 %v2288
        %2436 = vmatpush.msra.mxu0 %v2287
        %2437 = vmatpush.msra.mxu0 %v2286
        %2438 = vmatpush.msra.mxu0 %v2285
        %2439 = vmatpush.msra.mxu0 %v2284
        %2440 = vmatpush.msra.mxu0 %v2283
        %2441 = vmatpush.msra.mxu0 %v2282
        %2442 = vmatpush.msra.mxu0 %v2281
        %2443 = vmatpush.msra.mxu0 %v2280
        %2444 = vmatpush.msra.mxu0 %v2279
        %2445 = vmatpush.msra.mxu0 %v2278
        %2446 = vmatpush.msra.mxu0 %v2277
        %2447 = vmatpush.msra.mxu0 %v2276
        %2448 = vmatpush.msra.mxu0 %v2275
        %2449 = vmatpush.msra.mxu0 %v2274
        %2450 = vmatmul.f32.gmra.mxu0 %v2354
        %v2451 = vpop.f32.mrf.mxu0
        %v2452 = vadd.f32 0.0, %v2451
        %2453 = vmatmul.f32.gmra.mxu0 %v2355
        %v2454 = vpop.f32.mrf.mxu0
        %v2455 = vadd.f32 0.0, %v2454
        %2456 = vmatmul.f32.gmra.mxu0 %v2356
        %v2457 = vpop.f32.mrf.mxu0
        %v2458 = vadd.f32 0.0, %v2457
        %2459 = vmatmul.f32.gmra.mxu0 %v2357
        %v2460 = vpop.f32.mrf.mxu0
        %v2461 = vadd.f32 0.0, %v2460
        %2462 = vmatmul.f32.gmra.mxu0 %v2358
        %v2463 = vpop.f32.mrf.mxu0
        %v2464 = vadd.f32 0.0, %v2463
        %2465 = vmatmul.f32.gmra.mxu0 %v2359
        %v2466 = vpop.f32.mrf.mxu0
        %v2467 = vadd.f32 0.0, %v2466
        %2468 = vmatmul.f32.gmra.mxu0 %v2360
        %v2469 = vpop.f32.mrf.mxu0
        %v2470 = vadd.f32 0.0, %v2469
        %2471 = vmatmul.f32.gmra.mxu0 %v2361
        %v2472 = vpop.f32.mrf.mxu0
        %v2473 = vadd.f32 0.0, %v2472
        %2474 = vmatmul.f32.gmra.mxu0 %v2362
        %v2475 = vpop.f32.mrf.mxu0
        %v2476 = vadd.f32 0.0, %v2475
        %2477 = vmatmul.f32.gmra.mxu0 %v2363
        %v2478 = vpop.f32.mrf.mxu0
        %v2479 = vadd.f32 0.0, %v2478
        %2480 = vmatmul.f32.gmra.mxu0 %v2364
        %v2481 = vpop.f32.mrf.mxu0
        %v2482 = vadd.f32 0.0, %v2481
        %2483 = vmatmul.f32.gmra.mxu0 %v2365
        %v2484 = vpop.f32.mrf.mxu0
        %v2485 = vadd.f32 0.0, %v2484
        %2486 = vmatmul.f32.gmra.mxu0 %v2366
        %v2487 = vpop.f32.mrf.mxu0
        %v2488 = vadd.f32 0.0, %v2487
        %2489 = vmatmul.f32.gmra.mxu0 %v2367
        %v2490 = vpop.f32.mrf.mxu0
        %v2491 = vadd.f32 0.0, %v2490
        %2492 = vmatmul.f32.gmra.mxu0 %v2368
        %v2493 = vpop.f32.mrf.mxu0
        %v2494 = vadd.f32 0.0, %v2493
        %2495 = vmatmul.f32.gmra.mxu0 %v2369
        %v2496 = vpop.f32.mrf.mxu0
        %v2497 = vadd.f32 0.0, %v2496
        %2498 = vdwg.mxu0
        %2499 = vmatpush.msra.mxu0 %v2305
        %2500 = vmatpush.msra.mxu0 %v2304
        %2501 = vmatpush.msra.mxu0 %v2303
        %2502 = vmatpush.msra.mxu0 %v2302
        %2503 = vmatpush.msra.mxu0 %v2301
        %2504 = vmatpush.msra.mxu0 %v2300
        %2505 = vmatpush.msra.mxu0 %v2299
        %2506 = vmatpush.msra.mxu0 %v2298
        %2507 = vmatpush.msra.mxu0 %v2297
        %2508 = vmatpush.msra.mxu0 %v2296
        %2509 = vmatpush.msra.mxu0 %v2295
        %2510 = vmatpush.msra.mxu0 %v2294
        %2511 = vmatpush.msra.mxu0 %v2293
        %2512 = vmatpush.msra.mxu0 %v2292
        %2513 = vmatpush.msra.mxu0 %v2291
        %2514 = vmatpush.msra.mxu0 %v2290
        %2515 = vmatmul.f32.gmra.mxu0 %v2386
        %v2516 = vpop.f32.mrf.mxu0
        %v2517 = vadd.f32 %v2452, %v2516
        %2518 = vmatmul.f32.gmra.mxu0 %v2387
        %v2519 = vpop.f32.mrf.mxu0
        %v2520 = vadd.f32 %v2455, %v2519
        %2521 = vmatmul.f32.gmra.mxu0 %v2388
        %v2522 = vpop.f32.mrf.mxu0
        %v2523 = vadd.f32 %v2458, %v2522
        %2524 = vmatmul.f32.gmra.mxu0 %v2389
        %v2525 = vpop.f32.mrf.mxu0
        %v2526 = vadd.f32 %v2461, %v2525
        %2527 = vmatmul.f32.gmra.mxu0 %v2390
        %v2528 = vpop.f32.mrf.mxu0
        %v2529 = vadd.f32 %v2464, %v2528
        %2530 = vmatmul.f32.gmra.mxu0 %v2391
        %v2531 = vpop.f32.mrf.mxu0
        %v2532 = vadd.f32 %v2467, %v2531
        %2533 = vmatmul.f32.gmra.mxu0 %v2392
        %v2534 = vpop.f32.mrf.mxu0
        %v2535 = vadd.f32 %v2470, %v2534
        %2536 = vmatmul.f32.gmra.mxu0 %v2393
        %v2537 = vpop.f32.mrf.mxu0
        %v2538 = vadd.f32 %v2473, %v2537
        %2539 = vmatmul.f32.gmra.mxu0 %v2394
        %v2540 = vpop.f32.mrf.mxu0
        %v2541 = vadd.f32 %v2476, %v2540
        %2542 = vmatmul.f32.gmra.mxu0 %v2395
        %v2543 = vpop.f32.mrf.mxu0
        %v2544 = vadd.f32 %v2479, %v2543
        %2545 = vmatmul.f32.gmra.mxu0 %v2396
        %v2546 = vpop.f32.mrf.mxu0
        %v2547 = vadd.f32 %v2482, %v2546
        %2548 = vmatmul.f32.gmra.mxu0 %v2397
        %v2549 = vpop.f32.mrf.mxu0
        %v2550 = vadd.f32 %v2485, %v2549
        %2551 = vmatmul.f32.gmra.mxu0 %v2398
        %v2552 = vpop.f32.mrf.mxu0
        %v2553 = vadd.f32 %v2488, %v2552
        %2554 = vmatmul.f32.gmra.mxu0 %v2399
        %v2555 = vpop.f32.mrf.mxu0
        %v2556 = vadd.f32 %v2491, %v2555
        %2557 = vmatmul.f32.gmra.mxu0 %v2400
        %v2558 = vpop.f32.mrf.mxu0
        %v2559 = vadd.f32 %v2494, %v2558
        %2560 = vmatmul.f32.gmra.mxu0 %v2401
        %v2561 = vpop.f32.mrf.mxu0
        %v2562 = vadd.f32 %v2497, %v2561
        %2563 = vdwg.mxu0
        %2564 = vmatpush.msra.mxu0 %v2321
        %2565 = vmatpush.msra.mxu0 %v2320
        %2566 = vmatpush.msra.mxu0 %v2319
        %2567 = vmatpush.msra.mxu0 %v2318
        %2568 = vmatpush.msra.mxu0 %v2317
        %2569 = vmatpush.msra.mxu0 %v2316
        %2570 = vmatpush.msra.mxu0 %v2315
        %2571 = vmatpush.msra.mxu0 %v2314
        %2572 = vmatpush.msra.mxu0 %v2313
        %2573 = vmatpush.msra.mxu0 %v2312
        %2574 = vmatpush.msra.mxu0 %v2311
        %2575 = vmatpush.msra.mxu0 %v2310
        %2576 = vmatpush.msra.mxu0 %v2309
        %2577 = vmatpush.msra.mxu0 %v2308
        %2578 = vmatpush.msra.mxu0 %v2307
        %2579 = vmatpush.msra.mxu0 %v2306
        %2580 = vmatmul.f32.gmra.mxu0 %v2418
        %v2581 = vpop.f32.mrf.mxu0
        %v2582 = vadd.f32 %v2517, %v2581
        %2583 = vmatmul.f32.gmra.mxu0 %v2419
        %v2584 = vpop.f32.mrf.mxu0
        %v2585 = vadd.f32 %v2520, %v2584
        %2586 = vmatmul.f32.gmra.mxu0 %v2420
        %v2587 = vpop.f32.mrf.mxu0
        %v2588 = vadd.f32 %v2523, %v2587
        %2589 = vmatmul.f32.gmra.mxu0 %v2421
        %v2590 = vpop.f32.mrf.mxu0
        %v2591 = vadd.f32 %v2526, %v2590
        %2592 = vmatmul.f32.gmra.mxu0 %v2422
        %v2593 = vpop.f32.mrf.mxu0
        %v2594 = vadd.f32 %v2529, %v2593
        %2595 = vmatmul.f32.gmra.mxu0 %v2423
        %v2596 = vpop.f32.mrf.mxu0
        %v2597 = vadd.f32 %v2532, %v2596
        %2598 = vmatmul.f32.gmra.mxu0 %v2424
        %v2599 = vpop.f32.mrf.mxu0
        %v2600 = vadd.f32 %v2535, %v2599
        %2601 = vmatmul.f32.gmra.mxu0 %v2425
        %v2602 = vpop.f32.mrf.mxu0
        %v2603 = vadd.f32 %v2538, %v2602
        %2604 = vmatmul.f32.gmra.mxu0 %v2426
        %v2605 = vpop.f32.mrf.mxu0
        %v2606 = vadd.f32 %v2541, %v2605
        %2607 = vmatmul.f32.gmra.mxu0 %v2427
        %v2608 = vpop.f32.mrf.mxu0
        %v2609 = vadd.f32 %v2544, %v2608
        %2610 = vmatmul.f32.gmra.mxu0 %v2428
        %v2611 = vpop.f32.mrf.mxu0
        %v2612 = vadd.f32 %v2547, %v2611
        %2613 = vmatmul.f32.gmra.mxu0 %v2429
        %v2614 = vpop.f32.mrf.mxu0
        %v2615 = vadd.f32 %v2550, %v2614
        %2616 = vmatmul.f32.gmra.mxu0 %v2430
        %v2617 = vpop.f32.mrf.mxu0
        %v2618 = vadd.f32 %v2553, %v2617
        %2619 = vmatmul.f32.gmra.mxu0 %v2431
        %v2620 = vpop.f32.mrf.mxu0
        %v2621 = vadd.f32 %v2556, %v2620
        %2622 = vmatmul.f32.gmra.mxu0 %v2432
        %v2623 = vpop.f32.mrf.mxu0
        %v2624 = vadd.f32 %v2559, %v2623
        %2625 = vmatmul.f32.gmra.mxu0 %v2433
        %v2626 = vpop.f32.mrf.mxu0
        %v2627 = vadd.f32 %v2562, %v2626
        %2628 = vdwg.mxu0
        %v2629 = vadd.f32 %v2322, %v2582
        %v2630 = vadd.f32 %v2323, %v2585
        %v2631 = vadd.f32 %v2324, %v2588
        %v2632 = vadd.f32 %v2325, %v2591
        %v2633 = vadd.f32 %v2326, %v2594
        %v2634 = vadd.f32 %v2327, %v2597
        %v2635 = vadd.f32 %v2328, %v2600
        %v2636 = vadd.f32 %v2329, %v2603
        %v2637 = vadd.f32 %v2330, %v2606
        %v2638 = vadd.f32 %v2331, %v2609
        %v2639 = vadd.f32 %v2332, %v2612
        %v2640 = vadd.f32 %v2333, %v2615
        %v2641 = vadd.f32 %v2334, %v2618
        %v2642 = vadd.f32 %v2335, %v2621
        %v2643 = vadd.f32 %v2336, %v2624
        %v2644 = vadd.f32 %v2337, %v2627
        %2645 = vst [vmem:[%s477] sm:$0xff] %v2629
        %2646 = vst [vmem:[%s477 + $0x8] sm:$0xff] %v2630
        %2647 = vst [vmem:[%s477 + $0x10] sm:$0xff] %v2631
        %2648 = vst [vmem:[%s477 + $0x18] sm:$0xff] %v2632
        %2649 = vst [vmem:[%s477 + $0x20] sm:$0xff] %v2633
        %2650 = vst [vmem:[%s477 + $0x28] sm:$0xff] %v2634
        %2651 = vst [vmem:[%s477 + $0x30] sm:$0xff] %v2635
        %2652 = vst [vmem:[%s477 + $0x38] sm:$0xff] %v2636
        %2653 = vst [vmem:[%s477 + $0x40] sm:$0xff] %v2637
        %2654 = vst [vmem:[%s477 + $0x48] sm:$0xff] %v2638
        %2655 = vst [vmem:[%s477 + $0x50] sm:$0xff] %v2639
        %2656 = vst [vmem:[%s477 + $0x58] sm:$0xff] %v2640
        %2657 = vst [vmem:[%s477 + $0x60] sm:$0xff] %v2641
        %2658 = vst [vmem:[%s477 + $0x68] sm:$0xff] %v2642
        %2659 = vst [vmem:[%s477 + $0x70] sm:$0xff] %v2643
        %2660 = vst [vmem:[%s477 + $0x78] sm:$0xff] %v2644
        %v2661 = vld [vmem:[%s483] sm:$0x1]
        %v2662 = vadd.f32 %v1410, %v1411
        %v2663 = vadd.f32 %v2662, %v1412
        %v2664 = vadd.f32 %v2663, %v1413
        %v2665 = vadd.f32 %v2664, %v1414
        %v2666 = vadd.f32 %v2665, %v1415
        %v2667 = vadd.f32 %v2666, %v1416
        %v2668 = vadd.f32 %v2667, %v1417
        %v2669 = vadd.f32 %v2668, %v1418
        %v2670 = vadd.f32 %v2669, %v1419
        %v2671 = vadd.f32 %v2670, %v1420
        %v2672 = vadd.f32 %v2671, %v1421
        %v2673 = vadd.f32 %v2672, %v1422
        %v2674 = vadd.f32 %v2673, %v1423
        %v2675 = vadd.f32 %v2674, %v1424
        %v2676 = vadd.f32 %v2675, %v1425
        %v2677 = vadd.f32 %v2676, %v1426
        %v2678 = vadd.f32 %v2677, %v1427
        %v2679 = vadd.f32 %v2678, %v1428
        %v2680 = vadd.f32 %v2679, %v1429
        %v2681 = vadd.f32 %v2680, %v1430
        %v2682 = vadd.f32 %v2681, %v1431
        %v2683 = vadd.f32 %v2682, %v1432
        %v2684 = vadd.f32 %v2683, %v1433
        %v2685 = vadd.f32 %v2684, %v1434
        %v2686 = vadd.f32 %v2685, %v1435
        %v2687 = vadd.f32 %v2686, %v1436
        %v2688 = vadd.f32 %v2687, %v1437
        %v2689 = vadd.f32 %v2688, %v1438
        %v2690 = vadd.f32 %v2689, %v1439
        %v2691 = vadd.f32 %v2690, %v1440
        %v2692 = vadd.f32 %v2691, %v1441
        %v2693 = vadd.f32 %v2692, %v1442
        %v2694 = vadd.f32 %v2693, %v1443
        %v2695 = vadd.f32 %v2694, %v1444
        %v2696 = vadd.f32 %v2695, %v1445
        %v2697 = vadd.f32 %v2696, %v1446
        %v2698 = vadd.f32 %v2697, %v1447
        %v2699 = vadd.f32 %v2698, %v1448
        %v2700 = vadd.f32 %v2699, %v1449
        %v2701 = vadd.f32 %v2700, %v1450
        %v2702 = vadd.f32 %v2701, %v1451
        %v2703 = vadd.f32 %v2702, %v1452
        %v2704 = vadd.f32 %v2703, %v1453
        %v2705 = vadd.f32 %v2704, %v1454
        %v2706 = vadd.f32 %v2705, %v1455
        %v2707 = vadd.f32 %v2706, %v1456
        %v2708 = vadd.f32 %v2707, %v1457
        %v2709 = vrot.slane %v2708, 4
        %v2710 = vadd.f32 %v2708, %v2709
        %v2711 = vrot.slane %v2710, 2
        %v2712 = vadd.f32 %v2710, %v2711
        %v2713 = vrot.slane %v2712, 1
        %v2714 = vadd.f32 %v2712, %v2713
        %v2715 = vadd.f32 %v2661, %v2714
        %2716 = vst [vmem:[%s483] sm:$0x1] %v2715
        // Predicated region
        $region73: #{tpu_custom_call.1} parent=43 // pred_check
          %p2717 = pneg %p490
        $region74: #{tpu_custom_call.1} parent=43 // pred_check_branch
          %2719 = sbr.rel (%p2717) target = $region76
        $region75: #{tpu_custom_call.1} parent=43 // pred_region
          %v2720 = vld [vmem:[%s477] sm:$0xff]
          %v2721 = vld [vmem:[%s477 + $0x8] sm:$0xff]
          %v2722 = vld [vmem:[%s477 + $0x10] sm:$0xff]
          %v2723 = vld [vmem:[%s477 + $0x18] sm:$0xff]
          %v2724 = vld [vmem:[%s477 + $0x20] sm:$0xff]
          %v2725 = vld [vmem:[%s477 + $0x28] sm:$0xff]
          %v2726 = vld [vmem:[%s477 + $0x30] sm:$0xff]
          %v2727 = vld [vmem:[%s477 + $0x38] sm:$0xff]
          %v2728 = vld [vmem:[%s477 + $0x40] sm:$0xff]
          %v2729 = vld [vmem:[%s477 + $0x48] sm:$0xff]
          %v2730 = vld [vmem:[%s477 + $0x50] sm:$0xff]
          %v2731 = vld [vmem:[%s477 + $0x58] sm:$0xff]
          %v2732 = vld [vmem:[%s477 + $0x60] sm:$0xff]
          %v2733 = vld [vmem:[%s477 + $0x68] sm:$0xff]
          %v2734 = vld [vmem:[%s477 + $0x70] sm:$0xff]
          %v2735 = vld [vmem:[%s477 + $0x78] sm:$0xff]
          %v2736 = vld [vmem:[#allocation8] sm:$0xff]
          %v2737 = vld [vmem:[#allocation8 + $0x8] sm:$0xff]
          %v2738 = vld [vmem:[#allocation8 + $0x10] sm:$0xff]
          %v2739 = vld [vmem:[#allocation8 + $0x18] sm:$0xff]
          %v2740 = vld [vmem:[#allocation8 + $0x20] sm:$0xff]
          %v2741 = vld [vmem:[#allocation8 + $0x28] sm:$0xff]
          %v2742 = vld [vmem:[#allocation8 + $0x30] sm:$0xff]
          %v2743 = vld [vmem:[#allocation8 + $0x38] sm:$0xff]
          %v2744 = vld [vmem:[#allocation8 + $0x40] sm:$0xff]
          %v2745 = vld [vmem:[#allocation8 + $0x48] sm:$0xff]
          %v2746 = vld [vmem:[#allocation8 + $0x50] sm:$0xff]
          %v2747 = vld [vmem:[#allocation8 + $0x58] sm:$0xff]
          %v2748 = vld [vmem:[#allocation8 + $0x60] sm:$0xff]
          %v2749 = vld [vmem:[#allocation8 + $0x68] sm:$0xff]
          %v2750 = vld [vmem:[#allocation8 + $0x70] sm:$0xff]
          %v2751 = vld [vmem:[#allocation8 + $0x78] sm:$0xff]
          %v2752 = vmul.f32 %v2720, %v2736
          %v2753 = vmul.f32 %v2721, %v2737
          %v2754 = vmul.f32 %v2722, %v2738
          %v2755 = vmul.f32 %v2723, %v2739
          %v2756 = vmul.f32 %v2724, %v2740
          %v2757 = vmul.f32 %v2725, %v2741
          %v2758 = vmul.f32 %v2726, %v2742
          %v2759 = vmul.f32 %v2727, %v2743
          %v2760 = vmul.f32 %v2728, %v2744
          %v2761 = vmul.f32 %v2729, %v2745
          %v2762 = vmul.f32 %v2730, %v2746
          %v2763 = vmul.f32 %v2731, %v2747
          %v2764 = vmul.f32 %v2732, %v2748
          %v2765 = vmul.f32 %v2733, %v2749
          %v2766 = vmul.f32 %v2734, %v2750
          %v2767 = vmul.f32 %v2735, %v2751
          %2768 = vst [vmem:[%s477] sm:$0xff] %v2752
          %2769 = vst [vmem:[%s477 + $0x8] sm:$0xff] %v2753
          %2770 = vst [vmem:[%s477 + $0x10] sm:$0xff] %v2754
          %2771 = vst [vmem:[%s477 + $0x18] sm:$0xff] %v2755
          %2772 = vst [vmem:[%s477 + $0x20] sm:$0xff] %v2756
          %2773 = vst [vmem:[%s477 + $0x28] sm:$0xff] %v2757
          %2774 = vst [vmem:[%s477 + $0x30] sm:$0xff] %v2758
          %2775 = vst [vmem:[%s477 + $0x38] sm:$0xff] %v2759
          %2776 = vst [vmem:[%s477 + $0x40] sm:$0xff] %v2760
          %2777 = vst [vmem:[%s477 + $0x48] sm:$0xff] %v2761
          %2778 = vst [vmem:[%s477 + $0x50] sm:$0xff] %v2762
          %2779 = vst [vmem:[%s477 + $0x58] sm:$0xff] %v2763
          %2780 = vst [vmem:[%s477 + $0x60] sm:$0xff] %v2764
          %2781 = vst [vmem:[%s477 + $0x68] sm:$0xff] %v2765
          %2782 = vst [vmem:[%s477 + $0x70] sm:$0xff] %v2766
          %2783 = vst [vmem:[%s477 + $0x78] sm:$0xff] %v2767
        $region76: #{tpu_custom_call.1} parent=43 // pred_fallthru
          _
        %s2784 = sand.u32 %s215, 1
        %s2785 = scalar_lea.sflag [#allocation4], %s2784
        %s2786 = sand.u32 %s215, 1
        %s2787 = smul.addr %s2786, 128
        %s2788 = scalar_lea.vmem [#allocation13], %s2787
        %s2789 = sand.u32 %s243, 1
        %s2790 = scalar_lea.sflag [#allocation15], %s2789
        %s2791 = sand.u32 %s243, 1
        %s2792 = scalar_lea.vmem [#allocation14], %s2791
        // Predicated region
        $region77: #{tpu_custom_call.1} parent=43 // pred_check
          %p2793 = pneg %p225
        $region78: #{tpu_custom_call.1} parent=43 // pred_check_branch
          %2795 = sbr.rel (%p2793) target = $region80
        $region79: #{tpu_custom_call.1} parent=43 // pred_region
          %2797 = vsyncadd %s2785, 0
          %s2798 = smul.addr %s39, 16
          %s2799 = smul.addr %s38, 32
          %s2800 = sadd.s32 %s2798, %s2799
          %s2801 = smul.addr %s2800, 8
          %s2802 = scalar_lea.hbm %s6, %s2801
          %s2803 = sshll.u32 %s2788, 4
          %s2804 = int_to_ptr.vmem [resolvable:$true] %s2803
          %s2805 = sshll.u32 %s2802, 4
          %s2806 = int_to_ptr.hbm [resolvable:$true] %s2805
          %2811 = dma.vmem_to_hbm [thread:$0]  %s2804, 2048, %s2806, %s2785, 128, 128, 8
        $region80: #{tpu_custom_call.1} parent=43 // pred_fallthru
          _
        // Predicated region
        $region81: #{tpu_custom_call.1} parent=43 // pred_check
          %p2812 = pneg %p253
        $region82: #{tpu_custom_call.1} parent=43 // pred_check_branch
          %2814 = sbr.rel (%p2812) target = $region84
        $region83: #{tpu_custom_call.1} parent=43 // pred_region
          %2816 = vsyncadd %s2790, 0
          %s2817 = smul.addr %s38, 2
          %s2818 = sadd.s32 %s39, %s2817
          %s2819 = scalar_lea.hbm %s7, %s2818
          %s2821 = sshll.u32 %s2792, 4
          %s2822 = int_to_ptr.vmem [resolvable:$true] %s2821
          %s2823 = sshll.u32 %s2819, 4
          %s2824 = int_to_ptr.hbm [resolvable:$true] %s2823
          %2826 = dma.vmem_to_hbm [thread:$0]  %s2822, 16, %s2824, %s2790
        $region84: #{tpu_custom_call.1} parent=43 // pred_fallthru
          _
      $region44: #{tpu_custom_call.1} parent=5 // pred_fallthru
        _
      %p2827 = scmp.le.s32.totalorder 2, %s28
      // Predicated region
      $region85: #{tpu_custom_call.1} parent=5 // pred_check
        %p2828 = pneg %p2827
      $region86: #{tpu_custom_call.1} parent=5 // pred_check_branch
        %2830 = sbr.rel (%p2828) target = $region88
      $region87: #{tpu_custom_call.1} parent=5 // pred_region
        %s2831 = ssub.s32 %s28, 2
        // Predicated region
        $region89: #{tpu_custom_call.1} parent=87 // pred_check
          %p2832 = pneg %p231
        $region90: #{tpu_custom_call.1} parent=87 // pred_check_branch
          %2834 = sbr.rel (%p2832) target = $region92
        $region91: #{tpu_custom_call.1} parent=87 // pred_region
          %s2835 = sand.u32 %s216, 1
          %s2836 = scalar_lea.sflag [#allocation4], %s2835
          %s2837 = sand.u32 %s216, 1
          %s2838 = smul.addr %s2837, 128
          %s2839 = scalar_lea.vmem [#allocation13], %s2838
          %2841 = dma.done %s2836, 2048
        $region92: #{tpu_custom_call.1} parent=87 // pred_fallthru
          _
        // Predicated region
        $region93: #{tpu_custom_call.1} parent=87 // pred_check
          %p2842 = pneg %p259
        $region94: #{tpu_custom_call.1} parent=87 // pred_check_branch
          %2844 = sbr.rel (%p2842) target = $region96
        $region95: #{tpu_custom_call.1} parent=87 // pred_region
          %s2845 = sand.u32 %s244, 1
          %s2846 = scalar_lea.sflag [#allocation15], %s2845
          %s2847 = sand.u32 %s244, 1
          %s2848 = scalar_lea.vmem [#allocation14], %s2847
          %2850 = dma.done %s2846, 16
        $region96: #{tpu_custom_call.1} parent=87 // pred_fallthru
          _
      $region88: #{tpu_custom_call.1} parent=5 // pred_fallthru
        _
    $region6: #{tpu_custom_call.1} parent=1 // loop_footer
      %s32 = sadd.s32 1, %s28
    $region7: #{tpu_custom_call.1} parent=1 // loop_footer_branch
      %27 = sbr.rel target = $region3
    $region8: #{tpu_custom_call.1} parent=1 // loop_exit
      _
    %2851 = vsyncpa [#allocation3], 1
    %s2852 = scalar_lea.sflag [#allocation3], 1
    %2853 = vsyncpa %s2852, 1
    %2854 = vsyncpa [#allocation6], 1
    %s2855 = scalar_lea.sflag [#allocation6], 1
    %2856 = vsyncpa %s2855, 1
    %2857 = vsyncpa [#allocation9], 1
    %2858 = vsyncpa [#allocation12], 1
    %2859 = vsyncpa [#allocation4], 1
    %s2860 = scalar_lea.sflag [#allocation4], 1
    %2861 = vsyncpa %s2860, 1
    %2862 = vsyncpa [#allocation15], 1
    %s2863 = scalar_lea.sflag [#allocation15], 1
    %2864 = vsyncpa %s2863, 1

</llo_original>
